<compile_context>
chip_gen: v5e
topology: v5e:2x2
jax: 0.10.0
libtpu: 0.0.40
codegen_flags: <defaults>
</compile_context>

<pallas_src>
import functools

import jax
import jax.numpy as jnp
from jax.experimental import pallas as pl
from jax.experimental.pallas import tpu as pltpu


def _round_up(n, m):
    return ((n + m - 1) // m) * m


def _tpu_vmem_capacity():
    try:
        return int(pltpu.get_tpu_info().vmem_capacity_bytes)
    except Exception:                      # pragma: no cover - conservative fallback
        return 64 * 1024 * 1024


def _pick_block_rows(n_padded, cap):
    """Largest strip in {128,256,512} (<= cap) dividing n_padded with >=2 strips."""
    best = 128
    for cand in (256, 512):
        if cand <= cap and n_padded % cand == 0 and n_padded // cand >= 2:
            best = cand
    return min(best, n_padded)


# ---------------------------------------------------------------------------
# Pallas kernel: one GATConv's masked edge-softmax + aggregation (+ residual /
# ELU epilogue), per destination-row strip.
# ---------------------------------------------------------------------------
def _gat_attention_kernel(adj_ref, featb_ref, elT_ref, er_ref, *rest,
                          num_heads, out_feats, negative_slope,
                          apply_elu, has_residual):
    # adj_ref  : (TM, Np)   bf16 0/1 mask for this destination-row strip (streamed)
    # featb_ref: (Np, H*F)  bf16 projected source features (resident)
    # elT_ref  : (H, Np)    f32 source attention term, lane-dense (resident)
    # er_ref   : (TM, H)    f32 destination attention term (strip)
    # res_ref  : (TM, H*F)  f32 residual strip (only if has_residual)
    # out_ref  : (TM, H*F)  f32
    if has_residual:
        res_ref, out_ref = rest
    else:
        (out_ref,) = rest

    # Boolean edge mask straight from the bf16 strip -- no f32 adj materialization.
    no_edge = adj_ref[...] == 0

    head_outs = []
    for h in range(num_heads):                      # static unroll over heads
        er_h = er_ref[:, h:h + 1]                   # (TM, 1)
        el_h = elT_ref[h:h + 1, :]                  # (1, Np)
        s = er_h + el_h                             # (TM, Np) f32
        s = jnp.where(s > 0, s, negative_slope * s)          # LeakyReLU
        s = jnp.where(no_edge, -1e30, s)                      # mask before row max

        # numerically-stable masked softmax over the source axis
        m = jnp.max(s, axis=1, keepdims=True)
        p = jnp.where(no_edge, 0.0, jnp.exp(s - m))           # exact zeros off-graph
        denom = jnp.sum(p, axis=1, keepdims=True)
        inv = jnp.where(denom > 0.0, pl.reciprocal(denom, approx=True), 0.0)

        feat_h = featb_ref[:, h * out_feats:(h + 1) * out_feats]   # (Np, F) bf16
        agg = jnp.dot(p.astype(jnp.bfloat16), feat_h,
                      preferred_element_type=jnp.float32)          # bf16-in/f32-acc MXU
        head_outs.append(agg * inv)

    out = head_outs[0] if num_heads == 1 else jnp.concatenate(head_outs, axis=-1)
    if has_residual:
        out = out + res_ref[...]
    if apply_elu:                                   # fused hidden-layer activation
        out = jnp.where(out > 0, out, jnp.exp(jnp.minimum(out, 0.0)) - 1.0)
    out_ref[...] = out                              # single lane-dense (TM, H*F) store


# ---------------------------------------------------------------------------
# One GATConv layer (wrapper): tiny projection hoisted, heavy O(N^2) in Pallas.
# ---------------------------------------------------------------------------
def gat_conv_layer(adj_padded, h, params, *, negative_slope, residual,
                   apply_elu, block_rows=None):
    N = h.shape[0]
    Np = adj_padded.shape[0]
    pad = Np - N
    attn_l, attn_r = params["attn_l"], params["attn_r"]
    num_heads, out_feats = attn_l.shape
    hf = num_heads * out_feats

    # Tiny per-layer projection + attention scalars (hoisted; full f32 precision).
    feat = jnp.dot(h, params["w"], precision=jax.lax.Precision.HIGHEST)   # (N, H*F)
    f3 = feat.reshape(N, num_heads, out_feats)
    el = jnp.sum(f3 * attn_l[None], axis=-1)          # (N, H)
    er = jnp.sum(f3 * attn_r[None], axis=-1)          # (N, H)

    # Residual (tiny matmul or identity) hoisted; added inside the kernel.
    res = None
    if residual:
        res_w = params.get("res_w")
        res = h if res_w is None else jnp.dot(
            h, res_w, precision=jax.lax.Precision.HIGHEST)

    # Pad node axis to the lane-aligned padded graph size.  Padded rows/cols are
    # non-edges -> zero contribution / zero outputs (sliced off below).
    featb = jnp.pad(feat, ((0, pad), (0, 0))).astype(jnp.bfloat16)   # resident, bf16
    elT = jnp.pad(el, ((0, pad), (0, 0))).T                          # (H, Np) lane-dense
    erp = jnp.pad(er, ((0, pad), (0, 0)))                            # (Np, H)
    if res is not None:
        res = jnp.pad(res, ((0, pad), (0, 0)))                       # (Np, H*F)

    vmem_cap = _tpu_vmem_capacity()
    row_cap = 256 if vmem_cap <= 64 * 1024 * 1024 else 512           # v7x: 64 MiB / TC
    tm = _pick_block_rows(Np, row_cap) if block_rows is None else block_rows
    grid = (Np // tm,)

    kernel = functools.partial(
        _gat_attention_kernel,
        num_heads=num_heads, out_feats=out_feats, negative_slope=negative_slope,
        apply_elu=apply_elu, has_residual=res is not None)

    cost = pl.CostEstimate(
        flops=int(num_heads * (2 * Np * Np * out_feats + 10 * Np * Np)),
        transcendentals=int(num_heads * Np * Np),
        bytes_accessed=int(2 * Np * Np                      # adj strip stream (bf16)
                           + 2 * Np * hf                    # resident feat (bf16)
                           + 4 * (Np * hf                   # output
                                  + 2 * Np * num_heads      # el/er
                                  + (Np * hf if res is not None else 0))),
    )

    in_specs = [
        pl.BlockSpec((tm, Np), lambda i: (i, 0)),            # adj strip (streamed)
        pl.BlockSpec((Np, hf), lambda i: (0, 0)),            # feat bf16 (resident)
        pl.BlockSpec((num_heads, Np), lambda i: (0, 0)),     # el^T (resident)
        pl.BlockSpec((tm, num_heads), lambda i: (i, 0)),     # er strip
    ]
    args = [adj_padded, featb, elT, erp]
    if res is not None:
        in_specs.append(pl.BlockSpec((tm, hf), lambda i: (i, 0)))   # residual strip
        args.append(res)

    rst = pl.pallas_call(
        kernel,
        out_shape=jax.ShapeDtypeStruct((Np, hf), jnp.float32),
        grid=grid,
        in_specs=in_specs,
        out_specs=pl.BlockSpec((tm, hf), lambda i: (i, 0)),
        compiler_params=pltpu.CompilerParams(
            dimension_semantics=("parallel",),                # megacore row split
            vmem_limit_bytes=min(int(vmem_cap * 3 // 4), 100 * 1024 * 1024),
        ),
        cost_estimate=cost,
    )(*args)

    return rst[:N]


def gat_forward(inputs, adj, layer_params, *, negative_slope=0.2, residual=True,
                block_rows=None):
    """GAT.forward(inputs) with dense adjacency; returns logits (middle=False)."""
    N = inputs.shape[0]
    Np = _round_up(N, 128)
    pad = Np - N
    adj_p = adj if pad == 0 else jnp.pad(adj, ((0, pad), (0, pad)))
    # Stream the only O(N^2) operand as bf16 (0/1 values are exact in bf16).
    adj_p = adj_p.astype(jnp.bfloat16)

    h = inputs
    num_layers = len(layer_params) - 1
    for l in range(num_layers):
        h = gat_conv_layer(adj_p, h, layer_params[l],
                           negative_slope=negative_slope,
                           residual=(residual and l > 0),   # first layer: no residual
                           apply_elu=True,                  # self.activation fused
                           block_rows=block_rows)
    out = gat_conv_layer(adj_p, h, layer_params[-1],
                         negative_slope=negative_slope,
                         residual=residual,
                         apply_elu=False,
                         block_rows=block_rows)
    h_out, n_cls = layer_params[-1]["attn_l"].shape
    return out.reshape(N, h_out, n_cls).mean(axis=1)                # .mean(1)


# ---------------------------------------------------------------------------
# Parameters + pure-JAX reference (original f32 semantics)
# ---------------------------------------------------------------------------
def init_gat_params(key, in_dim, num_hidden, num_classes, heads, residual):
    num_layers = len(heads) - 1
    ks = iter(jax.random.split(key, 4 * len(heads)))
    layers = []
    d_in = in_dim
    for l in range(num_layers):
        h_, f_ = heads[l], num_hidden
        p = {"w": 0.3 * jax.random.normal(next(ks), (d_in, h_ * f_), jnp.float32),
             "attn_l": 0.3 * jax.random.normal(next(ks), (h_, f_), jnp.float32),
             "attn_r": 0.3 * jax.random.normal(next(ks), (h_, f_), jnp.float32)}
        if residual and l > 0 and d_in != h_ * f_:
            p["res_w"] = 0.3 * jax.random.normal(next(ks), (d_in, h_ * f_), jnp.float32)
        layers.append(p)
        d_in = h_ * f_
    h_, f_ = heads[-1], num_classes
    p = {"w": 0.3 * jax.random.normal(next(ks), (d_in, h_ * f_), jnp.float32),
         "attn_l": 0.3 * jax.random.normal(next(ks), (h_, f_), jnp.float32),
         "attn_r": 0.3 * jax.random.normal(next(ks), (h_, f_), jnp.float32)}
    if residual and d_in != h_ * f_:
        p["res_w"] = 0.3 * jax.random.normal(next(ks), (d_in, h_ * f_), jnp.float32)
    layers.append(p)
    return tuple(layers)


def _reference_gat_conv(adj, h, params, *, negative_slope, residual):
    N = h.shape[0]
    attn_l, attn_r = params["attn_l"], params["attn_r"]
    num_heads, out_feats = attn_l.shape
    feat = jnp.dot(h, params["w"], precision=jax.lax.Precision.HIGHEST)
    f3 = feat.reshape(N, num_heads, out_feats)
    el = jnp.sum(f3 * attn_l[None], axis=-1)          # (N, H)
    er = jnp.sum(f3 * attn_r[None], axis=-1)          # (N, H)
    s = er[:, None, :] + el[None, :, :]               # (dst, src, H)
    s = jnp.where(s > 0, s, negative_slope * s)
    edge = (adj > 0)[:, :, None]
    s = jnp.where(edge, s, -jnp.inf)
    alpha = jax.nn.softmax(s, axis=1)
    alpha = jnp.where(edge, alpha, 0.0)
    rst = jnp.einsum("duh,uhf->dhf", alpha, f3,
                     precision=jax.lax.Precision.HIGHEST)
    if residual:
        res_w = params.get("res_w")
        res = h if res_w is None else jnp.dot(
            h, res_w, precision=jax.lax.Precision.HIGHEST)
        rst = rst + res.reshape(N, num_heads, out_feats)
    return rst.reshape(N, num_heads * out_feats)


def reference_forward(inputs, adj, layer_params, *, negative_slope=0.2, residual=True):
    h = inputs
    num_layers = len(layer_params) - 1
    for l in range(num_layers):
        h = _reference_gat_conv(adj, h, layer_params[l],
                                negative_slope=negative_slope,
                                residual=(residual and l > 0))
        h = jax.nn.elu(h)
    out = _reference_gat_conv(adj, h, layer_params[-1],
                              negative_slope=negative_slope, residual=residual)
    h_out, n_cls = layer_params[-1]["attn_l"].shape
    return out.reshape(inputs.shape[0], h_out, n_cls).mean(axis=1)


# ---------------------------------------------------------------------------
if __name__ == "__main__":
    N, in_dim, num_hidden, num_classes = 256, 16, 8, 2
    heads = (2, 1)                   # 1 hidden GAT layer (2 heads) + output layer
    negative_slope, residual = 0.2, True

    key = jax.random.PRNGKey(0)
    k_x, k_a, k_p = jax.random.split(key, 3)

    inputs = jax.random.normal(k_x, (N, in_dim), jnp.float32)

    # Random symmetric 0/1 adjacency with self-loops (dense form of self.g).
    a = (jax.random.uniform(k_a, (N, N), jnp.float32) > 0.9).astype(jnp.float32)
    a = jnp.maximum(a, a.T)
    a = jnp.maximum(a, jnp.eye(N, dtype=jnp.float32))

    params = init_gat_params(k_p, in_dim, num_hidden, num_classes, heads, residual)

    fwd = jax.jit(functools.partial(gat_forward,
                                    negative_slope=negative_slope,
                                    residual=residual))
    logits = jax.block_until_ready(fwd(inputs, a, params))

    ref = reference_forward(inputs, a, params,
                            negative_slope=negative_slope, residual=residual)

    assert logits.shape == (N, num_classes), logits.shape
    # Tolerance deliberately relaxed vs the f32 reference: the aggregation matmul
    # uses bf16 MXU inputs (f32 accumulate) + approx reciprocal per the perf review.
    assert jnp.allclose(logits, ref, atol=5e-2, rtol=5e-2), \
        float(jnp.max(jnp.abs(logits - ref)))

    print("KERNEL_OK")
</pallas_src>

<mosaic_0001>
module attributes {stable_mosaic.version = 11 : i64} {
  func.func @_gat_attention_kernel(%arg0: i32, %arg1: memref<128x256xbf16, #tpu.memory_space<vmem>>, %arg2: memref<256x16xbf16, #tpu.memory_space<vmem>>, %arg3: memref<2x256xf32, #tpu.memory_space<vmem>>, %arg4: memref<128x2xf32, #tpu.memory_space<vmem>>, %arg5: memref<128x16xf32, #tpu.memory_space<vmem>>) attributes {dimension_semantics = [#tpu.dimension_semantics<parallel>], iteration_bounds = array<i64: 2>, scalar_prefetch = 0 : i64, scratch_operands = 0 : i64, tpu.core_type = #tpu.core_type<tc>, window_params = [{transform_indices = @transform_0, window_bounds = array<i64: 128, 256>}, {pipeline_mode = #tpu.pipeline_mode<synchronous>, transform_indices = @transform_1, window_bounds = array<i64: 256, 16>}, {pipeline_mode = #tpu.pipeline_mode<synchronous>, transform_indices = @transform_2, window_bounds = array<i64: 2, 256>}, {transform_indices = @transform_3, window_bounds = array<i64: 128, 2>}, {transform_indices = @transform_4, window_bounds = array<i64: 128, 16>}]} {
    %c0 = arith.constant 0 : index
    %c0_0 = arith.constant 0 : index
    %0 = vector.load %arg1[%c0, %c0_0] : memref<128x256xbf16, #tpu.memory_space<vmem>>, vector<128x256xbf16>
    %cst = arith.constant 0.000000e+00 : bf16
    %1 = vector.broadcast %cst : bf16 to vector<128x256xbf16>
    %2 = arith.cmpf oeq, %0, %1 : vector<128x256xbf16>
    %c0_1 = arith.constant 0 : index
    %c0_2 = arith.constant 0 : index
    %3 = vector.load %arg4[%c0_1, %c0_2] : memref<128x2xf32, #tpu.memory_space<vmem>>, vector<128x1xf32>
    %c0_3 = arith.constant 0 : index
    %c0_4 = arith.constant 0 : index
    %4 = vector.load %arg3[%c0_3, %c0_4] : memref<2x256xf32, #tpu.memory_space<vmem>>, vector<1x256xf32>
    %5 = vector.broadcast %3 : vector<128x1xf32> to vector<128x256xf32>
    %6 = vector.broadcast %4 : vector<1x256xf32> to vector<128x256xf32>
    %7 = arith.addf %5, %6 : vector<128x256xf32>
    %cst_5 = arith.constant 0.000000e+00 : f32
    %8 = vector.broadcast %cst_5 : f32 to vector<128x256xf32>
    %9 = arith.cmpf ogt, %7, %8 : vector<128x256xf32>
    %cst_6 = arith.constant 2.000000e-01 : f32
    %10 = vector.broadcast %cst_6 : f32 to vector<128x256xf32>
    %11 = arith.mulf %10, %7 : vector<128x256xf32>
    %12 = arith.select %9, %7, %11 : vector<128x256xi1>, vector<128x256xf32>
    %cst_7 = arith.constant -1.000000e+30 : f32
    %13 = vector.broadcast %cst_7 : f32 to vector<128x256xf32>
    %14 = arith.select %2, %13, %12 : vector<128x256xi1>, vector<128x256xf32>
    %cst_8 = arith.constant dense<0xFF800000> : vector<128xf32>
    %15 = vector.multi_reduction <maximumf>, %14, %cst_8 [1] : vector<128x256xf32> to vector<128xf32>
    %16 = vector.shape_cast %15 : vector<128xf32> to vector<128x1xf32>
    %17 = vector.broadcast %16 : vector<128x1xf32> to vector<128x256xf32>
    %18 = arith.subf %14, %17 : vector<128x256xf32>
    %19 = math.exp %18 : vector<128x256xf32>
    %cst_9 = arith.constant 0.000000e+00 : f32
    %20 = vector.broadcast %cst_9 : f32 to vector<128x256xf32>
    %21 = arith.select %2, %20, %19 : vector<128x256xi1>, vector<128x256xf32>
    %cst_10 = arith.constant dense<0.000000e+00> : vector<128xf32>
    %22 = vector.multi_reduction <add>, %21, %cst_10 [1] : vector<128x256xf32> to vector<128xf32>
    %23 = vector.shape_cast %22 : vector<128xf32> to vector<128x1xf32>
    %cst_11 = arith.constant 0.000000e+00 : f32
    %24 = vector.broadcast %cst_11 : f32 to vector<128x1xf32>
    %25 = arith.cmpf ogt, %23, %24 : vector<128x1xf32>
    %26 = tpu.reciprocal %23 {approx = true} : vector<128x1xf32> -> vector<128x1xf32>
    %cst_12 = arith.constant 0.000000e+00 : f32
    %27 = vector.broadcast %cst_12 : f32 to vector<128x1xf32>
    %28 = arith.select %25, %26, %27 : vector<128x1xi1>, vector<128x1xf32>
    %c0_13 = arith.constant 0 : index
    %c0_14 = arith.constant 0 : index
    %29 = vector.load %arg2[%c0_13, %c0_14] : memref<256x16xbf16, #tpu.memory_space<vmem>>, vector<256x8xbf16>
    %30 = arith.truncf %21 : vector<128x256xf32> to vector<128x256xbf16>
    %cst_15 = arith.constant dense<0.000000e+00> : vector<128x8xf32>
    %31 = tpu.matmul %30, %29, %cst_15 {dimension_numbers = #tpu.dot_dimension_numbers<[1], [0], [0], [1], [0, 0, 1, 1], [], []>} : vector<128x256xbf16>, vector<256x8xbf16>, vector<128x8xf32> -> vector<128x8xf32>
    %32 = vector.broadcast %28 : vector<128x1xf32> to vector<128x8xf32>
    %33 = arith.mulf %31, %32 : vector<128x8xf32>
    %c0_16 = arith.constant 0 : index
    %c1 = arith.constant 1 : index
    %34 = vector.load %arg4[%c0_16, %c1] : memref<128x2xf32, #tpu.memory_space<vmem>>, vector<128x1xf32>
    %c1_17 = arith.constant 1 : index
    %c0_18 = arith.constant 0 : index
    %35 = vector.load %arg3[%c1_17, %c0_18] : memref<2x256xf32, #tpu.memory_space<vmem>>, vector<1x256xf32>
    %36 = vector.broadcast %34 : vector<128x1xf32> to vector<128x256xf32>
    %37 = vector.broadcast %35 : vector<1x256xf32> to vector<128x256xf32>
    %38 = arith.addf %36, %37 : vector<128x256xf32>
    %cst_19 = arith.constant 0.000000e+00 : f32
    %39 = vector.broadcast %cst_19 : f32 to vector<128x256xf32>
    %40 = arith.cmpf ogt, %38, %39 : vector<128x256xf32>
    %cst_20 = arith.constant 2.000000e-01 : f32
    %41 = vector.broadcast %cst_20 : f32 to vector<128x256xf32>
    %42 = arith.mulf %41, %38 : vector<128x256xf32>
    %43 = arith.select %40, %38, %42 : vector<128x256xi1>, vector<128x256xf32>
    %cst_21 = arith.constant -1.000000e+30 : f32
    %44 = vector.broadcast %cst_21 : f32 to vector<128x256xf32>
    %45 = arith.select %2, %44, %43 : vector<128x256xi1>, vector<128x256xf32>
    %cst_22 = arith.constant dense<0xFF800000> : vector<128xf32>
    %46 = vector.multi_reduction <maximumf>, %45, %cst_22 [1] : vector<128x256xf32> to vector<128xf32>
    %47 = vector.shape_cast %46 : vector<128xf32> to vector<128x1xf32>
    %48 = vector.broadcast %47 : vector<128x1xf32> to vector<128x256xf32>
    %49 = arith.subf %45, %48 : vector<128x256xf32>
    %50 = math.exp %49 : vector<128x256xf32>
    %cst_23 = arith.constant 0.000000e+00 : f32
    %51 = vector.broadcast %cst_23 : f32 to vector<128x256xf32>
    %52 = arith.select %2, %51, %50 : vector<128x256xi1>, vector<128x256xf32>
    %cst_24 = arith.constant dense<0.000000e+00> : vector<128xf32>
    %53 = vector.multi_reduction <add>, %52, %cst_24 [1] : vector<128x256xf32> to vector<128xf32>
    %54 = vector.shape_cast %53 : vector<128xf32> to vector<128x1xf32>
    %cst_25 = arith.constant 0.000000e+00 : f32
    %55 = vector.broadcast %cst_25 : f32 to vector<128x1xf32>
    %56 = arith.cmpf ogt, %54, %55 : vector<128x1xf32>
    %57 = tpu.reciprocal %54 {approx = true} : vector<128x1xf32> -> vector<128x1xf32>
    %cst_26 = arith.constant 0.000000e+00 : f32
    %58 = vector.broadcast %cst_26 : f32 to vector<128x1xf32>
    %59 = arith.select %56, %57, %58 : vector<128x1xi1>, vector<128x1xf32>
    %c0_27 = arith.constant 0 : index
    %c8 = arith.constant 8 : index
    %60 = vector.load %arg2[%c0_27, %c8] : memref<256x16xbf16, #tpu.memory_space<vmem>>, vector<256x8xbf16>
    %61 = arith.truncf %52 : vector<128x256xf32> to vector<128x256xbf16>
    %cst_28 = arith.constant dense<0.000000e+00> : vector<128x8xf32>
    %62 = tpu.matmul %61, %60, %cst_28 {dimension_numbers = #tpu.dot_dimension_numbers<[1], [0], [0], [1], [0, 0, 1, 1], [], []>} : vector<128x256xbf16>, vector<256x8xbf16>, vector<128x8xf32> -> vector<128x8xf32>
    %63 = vector.broadcast %59 : vector<128x1xf32> to vector<128x8xf32>
    %64 = arith.mulf %62, %63 : vector<128x8xf32>
    %65 = tpu.concatenate %33, %64 in 1 : vector<128x8xf32>, vector<128x8xf32> -> vector<128x16xf32>
    %cst_29 = arith.constant 0.000000e+00 : f32
    %66 = vector.broadcast %cst_29 : f32 to vector<128x16xf32>
    %67 = arith.cmpf ogt, %65, %66 : vector<128x16xf32>
    %cst_30 = arith.constant 0.000000e+00 : f32
    %68 = vector.broadcast %cst_30 : f32 to vector<128x16xf32>
    %69 = arith.minimumf %65, %68 : vector<128x16xf32>
    %70 = math.exp %69 : vector<128x16xf32>
    %cst_31 = arith.constant 1.000000e+00 : f32
    %71 = vector.broadcast %cst_31 : f32 to vector<128x16xf32>
    %72 = arith.subf %70, %71 : vector<128x16xf32>
    %73 = arith.select %67, %65, %72 : vector<128x16xi1>, vector<128x16xf32>
    %c0_32 = arith.constant 0 : index
    %c0_33 = arith.constant 0 : index
    %74 = vector.load %arg5[%c0_32, %c0_33] : memref<128x16xf32, #tpu.memory_space<vmem>>, vector<128x16xf32>
    tpu.vector_store %arg5[%c0_32, %c0_33], %73 {strides = array<i32>} : memref<128x16xf32, #tpu.memory_space<vmem>>, vector<128x16xf32>,
    return
  }
  func.func @transform_0(%arg0: i32) -> (i32, i32) {
    %c0_i32 = arith.constant 0 : i32
    %c0_i32_0 = arith.constant 0 : i32
    return %arg0, %c0_i32 : i32, i32
  }
  func.func @transform_1(%arg0: i32) -> (i32, i32) {
    %c0_i32 = arith.constant 0 : i32
    %c0_i32_0 = arith.constant 0 : i32
    %c0_i32_1 = arith.constant 0 : i32
    return %c0_i32, %c0_i32_0 : i32, i32
  }
  func.func @transform_2(%arg0: i32) -> (i32, i32) {
    %c0_i32 = arith.constant 0 : i32
    %c0_i32_0 = arith.constant 0 : i32
    %c0_i32_1 = arith.constant 0 : i32
    return %c0_i32, %c0_i32_0 : i32, i32
  }
  func.func @transform_3(%arg0: i32) -> (i32, i32) {
    %c0_i32 = arith.constant 0 : i32
    %c0_i32_0 = arith.constant 0 : i32
    return %arg0, %c0_i32 : i32, i32
  }
  func.func @transform_4(%arg0: i32) -> (i32, i32) {
    %c0_i32 = arith.constant 0 : i32
    %c0_i32_0 = arith.constant 0 : i32
    return %arg0, %c0_i32 : i32, i32
  }
}

module attributes {stable_mosaic.version = 11 : i64} {
  func.func @_gat_attention_kernel(%arg0: i32, %arg1: memref<128x256xbf16, #tpu.memory_space<vmem>>, %arg2: memref<256x2xbf16, #tpu.memory_space<vmem>>, %arg3: memref<1x256xf32, #tpu.memory_space<vmem>>, %arg4: memref<128x1xf32, #tpu.memory_space<vmem>>, %arg5: memref<128x2xf32, #tpu.memory_space<vmem>>, %arg6: memref<128x2xf32, #tpu.memory_space<vmem>>) attributes {dimension_semantics = [#tpu.dimension_semantics<parallel>], iteration_bounds = array<i64: 2>, scalar_prefetch = 0 : i64, scratch_operands = 0 : i64, tpu.core_type = #tpu.core_type<tc>, window_params = [{transform_indices = @transform_0, window_bounds = array<i64: 128, 256>}, {pipeline_mode = #tpu.pipeline_mode<synchronous>, transform_indices = @transform_1, window_bounds = array<i64: 256, 2>}, {pipeline_mode = #tpu.pipeline_mode<synchronous>, transform_indices = @transform_2, window_bounds = array<i64: 1, 256>}, {transform_indices = @transform_3, window_bounds = array<i64: 128, 1>}, {transform_indices = @transform_4, window_bounds = array<i64: 128, 2>}, {transform_indices = @transform_5, window_bounds = array<i64: 128, 2>}]} {
    %c0 = arith.constant 0 : index
    %c0_0 = arith.constant 0 : index
    %0 = vector.load %arg1[%c0, %c0_0] : memref<128x256xbf16, #tpu.memory_space<vmem>>, vector<128x256xbf16>
    %cst = arith.constant 0.000000e+00 : bf16
    %1 = vector.broadcast %cst : bf16 to vector<128x256xbf16>
    %2 = arith.cmpf oeq, %0, %1 : vector<128x256xbf16>
    %c0_1 = arith.constant 0 : index
    %c0_2 = arith.constant 0 : index
    %3 = vector.load %arg4[%c0_1, %c0_2] : memref<128x1xf32, #tpu.memory_space<vmem>>, vector<128x1xf32>
    %c0_3 = arith.constant 0 : index
    %c0_4 = arith.constant 0 : index
    %4 = vector.load %arg3[%c0_3, %c0_4] : memref<1x256xf32, #tpu.memory_space<vmem>>, vector<1x256xf32>
    %5 = vector.broadcast %3 : vector<128x1xf32> to vector<128x256xf32>
    %6 = vector.broadcast %4 : vector<1x256xf32> to vector<128x256xf32>
    %7 = arith.addf %5, %6 : vector<128x256xf32>
    %cst_5 = arith.constant 0.000000e+00 : f32
    %8 = vector.broadcast %cst_5 : f32 to vector<128x256xf32>
    %9 = arith.cmpf ogt, %7, %8 : vector<128x256xf32>
    %cst_6 = arith.constant 2.000000e-01 : f32
    %10 = vector.broadcast %cst_6 : f32 to vector<128x256xf32>
    %11 = arith.mulf %10, %7 : vector<128x256xf32>
    %12 = arith.select %9, %7, %11 : vector<128x256xi1>, vector<128x256xf32>
    %cst_7 = arith.constant -1.000000e+30 : f32
    %13 = vector.broadcast %cst_7 : f32 to vector<128x256xf32>
    %14 = arith.select %2, %13, %12 : vector<128x256xi1>, vector<128x256xf32>
    %cst_8 = arith.constant dense<0xFF800000> : vector<128xf32>
    %15 = vector.multi_reduction <maximumf>, %14, %cst_8 [1] : vector<128x256xf32> to vector<128xf32>
    %16 = vector.shape_cast %15 : vector<128xf32> to vector<128x1xf32>
    %17 = vector.broadcast %16 : vector<128x1xf32> to vector<128x256xf32>
    %18 = arith.subf %14, %17 : vector<128x256xf32>
    %19 = math.exp %18 : vector<128x256xf32>
    %cst_9 = arith.constant 0.000000e+00 : f32
    %20 = vector.broadcast %cst_9 : f32 to vector<128x256xf32>
    %21 = arith.select %2, %20, %19 : vector<128x256xi1>, vector<128x256xf32>
    %cst_10 = arith.constant dense<0.000000e+00> : vector<128xf32>
    %22 = vector.multi_reduction <add>, %21, %cst_10 [1] : vector<128x256xf32> to vector<128xf32>
    %23 = vector.shape_cast %22 : vector<128xf32> to vector<128x1xf32>
    %cst_11 = arith.constant 0.000000e+00 : f32
    %24 = vector.broadcast %cst_11 : f32 to vector<128x1xf32>
    %25 = arith.cmpf ogt, %23, %24 : vector<128x1xf32>
    %26 = tpu.reciprocal %23 {approx = true} : vector<128x1xf32> -> vector<128x1xf32>
    %cst_12 = arith.constant 0.000000e+00 : f32
    %27 = vector.broadcast %cst_12 : f32 to vector<128x1xf32>
    %28 = arith.select %25, %26, %27 : vector<128x1xi1>, vector<128x1xf32>
    %c0_13 = arith.constant 0 : index
    %c0_14 = arith.constant 0 : index
    %29 = vector.load %arg2[%c0_13, %c0_14] : memref<256x2xbf16, #tpu.memory_space<vmem>>, vector<256x2xbf16>
    %30 = arith.truncf %21 : vector<128x256xf32> to vector<128x256xbf16>
    %cst_15 = arith.constant dense<0.000000e+00> : vector<128x2xf32>
    %31 = tpu.matmul %30, %29, %cst_15 {dimension_numbers = #tpu.dot_dimension_numbers<[1], [0], [0], [1], [0, 0, 1, 1], [], []>} : vector<128x256xbf16>, vector<256x2xbf16>, vector<128x2xf32> -> vector<128x2xf32>
    %32 = vector.broadcast %28 : vector<128x1xf32> to vector<128x2xf32>
    %33 = arith.mulf %31, %32 : vector<128x2xf32>
    %c0_16 = arith.constant 0 : index
    %c0_17 = arith.constant 0 : index
    %34 = vector.load %arg5[%c0_16, %c0_17] : memref<128x2xf32, #tpu.memory_space<vmem>>, vector<128x2xf32>
    %35 = arith.addf %33, %34 : vector<128x2xf32>
    %c0_18 = arith.constant 0 : index
    %c0_19 = arith.constant 0 : index
    %36 = vector.load %arg6[%c0_18, %c0_19] : memref<128x2xf32, #tpu.memory_space<vmem>>, vector<128x2xf32>
    tpu.vector_store %arg6[%c0_18, %c0_19], %35 {strides = array<i32>} : memref<128x2xf32, #tpu.memory_space<vmem>>, vector<128x2xf32>,
    return
  }
  func.func @transform_0(%arg0: i32) -> (i32, i32) {
    %c0_i32 = arith.constant 0 : i32
    %c0_i32_0 = arith.constant 0 : i32
    return %arg0, %c0_i32 : i32, i32
  }
  func.func @transform_1(%arg0: i32) -> (i32, i32) {
    %c0_i32 = arith.constant 0 : i32
    %c0_i32_0 = arith.constant 0 : i32
    %c0_i32_1 = arith.constant 0 : i32
    return %c0_i32, %c0_i32_0 : i32, i32
  }
  func.func @transform_2(%arg0: i32) -> (i32, i32) {
    %c0_i32 = arith.constant 0 : i32
    %c0_i32_0 = arith.constant 0 : i32
    %c0_i32_1 = arith.constant 0 : i32
    return %c0_i32, %c0_i32_0 : i32, i32
  }
  func.func @transform_3(%arg0: i32) -> (i32, i32) {
    %c0_i32 = arith.constant 0 : i32
    %c0_i32_0 = arith.constant 0 : i32
    return %arg0, %c0_i32 : i32, i32
  }
  func.func @transform_4(%arg0: i32) -> (i32, i32) {
    %c0_i32 = arith.constant 0 : i32
    %c0_i32_0 = arith.constant 0 : i32
    return %arg0, %c0_i32 : i32, i32
  }
  func.func @transform_5(%arg0: i32) -> (i32, i32) {
    %c0_i32 = arith.constant 0 : i32
    %c0_i32_0 = arith.constant 0 : i32
    return %arg0, %c0_i32 : i32, i32
  }
}

</mosaic_0001>

<llo_original>
// kernel: gat_forward.3
$region0: #{gat_forward.3}
  #allocation0 [shape = 'u32[]', space=smem, size = 0x4, offset = 0x4, fixed_abs, tag = 'smem constant byte address 0x4 - core index']
  #allocation1 [shape = 'u32[72,128]{1,0:T(1,128)}', space=vmem, size = 0x9000, scoped, tag = 'internal scratch']
  %s0 = inlined_call_operand.vmem [shape: bf16[256,256], index: 0, kind: input, shape index: {}]
  %s1 = inlined_call_operand.vmem [shape: bf16[256,2], index: 1, kind: input, shape index: {}]
  %s2 = inlined_call_operand.vmem [shape: f32[1,256], index: 2, kind: input, shape index: {}]
  %s3 = inlined_call_operand.vmem [shape: f32[256,1], index: 3, kind: input, shape index: {}]
  %s4 = inlined_call_operand.vmem [shape: f32[256,2], index: 4, kind: input, shape index: {}]
  %s5 = inlined_call_operand.vmem [shape: f32[256,2], index: 5, kind: output, shape index: {}]
  %s6 = sld [smem:[#allocation0]]
  $region53: #{gat_forward.3} parent=0
    _
  %s8 = ssub.s32 1, %s6
  %s9 = scalar_select 0, %s8, %s6
  loop: start=0, step=1, limit=4
  $region2: #{gat_forward.3} parent=0 // loop_pre_header
    _
  $region3: #{gat_forward.3} parent=0 // loop_header
    %s11 = sphi 0, %s15
    %p12 = scmp.ge.s32.totalorder %s11, 4
    %s21 = sphi 0, %s23
    %s24 = sphi 0, %s21
    %s25 = sphi 0, %s24
    %s41 = sphi 0, %s25
    %s45 = sphi 0, %s45
    %s47 = sphi 0, %s45
    %s48 = sphi 0, %s47
    %s62 = sphi 0, %s48
    %s66 = sphi 0, %s66
    %s68 = sphi 0, %s66
    %s69 = sphi 0, %s68
    %s83 = sphi 0, %s69
    %s89 = sphi 0, %s91
    %s92 = sphi 0, %s89
    %s93 = sphi 0, %s92
    %s109 = sphi 0, %s93
    %s115 = sphi 0, %s117
    %s118 = sphi 0, %s115
    %s119 = sphi 0, %s118
    %s135 = sphi 0, %s119
    %s141 = sphi 0, %s143
    %s144 = sphi 0, %s141
    %s145 = sphi 0, %s144
    %s161 = sphi 0, %s145
  $region4: #{gat_forward.3} parent=0 // loop_header_branch
    %14 = sbr.rel (%p12) target = $region8
  $region5: #{gat_forward.3} parent=0 // loop_body
    %s16 = ssub.s32 %s11, 1
    %s17 = ssub.s32 %s11, 2
    %s18 = sadd.s32 %s11, 1
    %s19 = ssub.s32 %s11, %s18
    %p20 = scmp.eq.s32.totalorder %s19, 0
    %s22 = sadd.s32 %s21, 1
    %s23 = scalar_select %p20, %s21, %s22
    %p26 = pneg %p20
    %p27 = scmp.eq.s32.totalorder %s11, 1
    %p28 = por %p26, %p27
    %p29 = scmp.ne.s32.totalorder %s21, %s24
    %p30 = scmp.eq.s32.totalorder %s11, 0
    %p31 = por %p29, %p30
    %p32 = scmp.ne.s32.totalorder %s21, %s24
    %p33 = scmp.eq.s32.totalorder %s16, 1
    %p34 = por %p32, %p33
    %p35 = scmp.ne.s32.totalorder %s24, %s25
    %p36 = scmp.eq.s32.totalorder %s16, 0
    %p37 = por %p35, %p36
    %p38 = scmp.ne.s32.totalorder %s24, %s25
    %p39 = scmp.eq.s32.totalorder %s17, 1
    %p40 = por %p38, %p39
    %p42 = scmp.ne.s32.totalorder %s25, %s41
    %p43 = scmp.eq.s32.totalorder %s17, 0
    %p44 = por %p42, %p43
    %s46 = sadd.s32 %s45, 1
    %p49 = scmp.eq.s32.totalorder %s11, 1
    %p50 = scmp.ne.s32.totalorder %s45, %s47
    %p51 = scmp.eq.s32.totalorder %s11, 0
    %p52 = por %p50, %p51
    %p53 = scmp.ne.s32.totalorder %s45, %s47
    %p54 = scmp.eq.s32.totalorder %s16, 1
    %p55 = por %p53, %p54
    %p56 = scmp.ne.s32.totalorder %s47, %s48
    %p57 = scmp.eq.s32.totalorder %s16, 0
    %p58 = por %p56, %p57
    %p59 = scmp.ne.s32.totalorder %s47, %s48
    %p60 = scmp.eq.s32.totalorder %s17, 1
    %p61 = por %p59, %p60
    %p63 = scmp.ne.s32.totalorder %s48, %s62
    %p64 = scmp.eq.s32.totalorder %s17, 0
    %p65 = por %p63, %p64
    %s67 = sadd.s32 %s66, 1
    %p70 = scmp.eq.s32.totalorder %s11, 1
    %p71 = scmp.ne.s32.totalorder %s66, %s68
    %p72 = scmp.eq.s32.totalorder %s11, 0
    %p73 = por %p71, %p72
    %p74 = scmp.ne.s32.totalorder %s66, %s68
    %p75 = scmp.eq.s32.totalorder %s16, 1
    %p76 = por %p74, %p75
    %p77 = scmp.ne.s32.totalorder %s68, %s69
    %p78 = scmp.eq.s32.totalorder %s16, 0
    %p79 = por %p77, %p78
    %p80 = scmp.ne.s32.totalorder %s68, %s69
    %p81 = scmp.eq.s32.totalorder %s17, 1
    %p82 = por %p80, %p81
    %p84 = scmp.ne.s32.totalorder %s69, %s83
    %p85 = scmp.eq.s32.totalorder %s17, 0
    %p86 = por %p84, %p85
    %s87 = ssub.s32 %s11, %s18
    %p88 = scmp.eq.s32.totalorder %s87, 0
    %s90 = sadd.s32 %s89, 1
    %s91 = scalar_select %p88, %s89, %s90
    %p94 = pneg %p88
    %p95 = scmp.eq.s32.totalorder %s11, 1
    %p96 = por %p94, %p95
    %p97 = scmp.ne.s32.totalorder %s89, %s92
    %p98 = scmp.eq.s32.totalorder %s11, 0
    %p99 = por %p97, %p98
    %p100 = scmp.ne.s32.totalorder %s89, %s92
    %p101 = scmp.eq.s32.totalorder %s16, 1
    %p102 = por %p100, %p101
    %p103 = scmp.ne.s32.totalorder %s92, %s93
    %p104 = scmp.eq.s32.totalorder %s16, 0
    %p105 = por %p103, %p104
    %p106 = scmp.ne.s32.totalorder %s92, %s93
    %p107 = scmp.eq.s32.totalorder %s17, 1
    %p108 = por %p106, %p107
    %p110 = scmp.ne.s32.totalorder %s93, %s109
    %p111 = scmp.eq.s32.totalorder %s17, 0
    %p112 = por %p110, %p111
    %s113 = ssub.s32 %s11, %s18
    %p114 = scmp.eq.s32.totalorder %s113, 0
    %s116 = sadd.s32 %s115, 1
    %s117 = scalar_select %p114, %s115, %s116
    %p120 = pneg %p114
    %p121 = scmp.eq.s32.totalorder %s11, 1
    %p122 = por %p120, %p121
    %p123 = scmp.ne.s32.totalorder %s115, %s118
    %p124 = scmp.eq.s32.totalorder %s11, 0
    %p125 = por %p123, %p124
    %p126 = scmp.ne.s32.totalorder %s115, %s118
    %p127 = scmp.eq.s32.totalorder %s16, 1
    %p128 = por %p126, %p127
    %p129 = scmp.ne.s32.totalorder %s118, %s119
    %p130 = scmp.eq.s32.totalorder %s16, 0
    %p131 = por %p129, %p130
    %p132 = scmp.ne.s32.totalorder %s118, %s119
    %p133 = scmp.eq.s32.totalorder %s17, 1
    %p134 = por %p132, %p133
    %p136 = scmp.ne.s32.totalorder %s119, %s135
    %p137 = scmp.eq.s32.totalorder %s17, 0
    %p138 = por %p136, %p137
    %s139 = ssub.s32 %s11, %s18
    %p140 = scmp.eq.s32.totalorder %s139, 0
    %s142 = sadd.s32 %s141, 1
    %s143 = scalar_select %p140, %s141, %s142
    %p146 = pneg %p140
    %p147 = scmp.eq.s32.totalorder %s11, 1
    %p148 = por %p146, %p147
    %p149 = scmp.ne.s32.totalorder %s141, %s144
    %p150 = scmp.eq.s32.totalorder %s11, 0
    %p151 = por %p149, %p150
    %p152 = scmp.ne.s32.totalorder %s141, %s144
    %p153 = scmp.eq.s32.totalorder %s16, 1
    %p154 = por %p152, %p153
    %p155 = scmp.ne.s32.totalorder %s144, %s145
    %p156 = scmp.eq.s32.totalorder %s16, 0
    %p157 = por %p155, %p156
    %p158 = scmp.ne.s32.totalorder %s144, %s145
    %p159 = scmp.eq.s32.totalorder %s17, 1
    %p160 = por %p158, %p159
    %p162 = scmp.ne.s32.totalorder %s145, %s161
    %p163 = scmp.eq.s32.totalorder %s17, 0
    %p164 = por %p162, %p163
    %p165 = scmp.le.s32.totalorder 1, %s11
    %p166 = scmp.lt.s32.totalorder %s11, 3
    %p167 = pnand %p165, %p166
    %p168 = pneg %p167
    // Predicated region
    $region9: #{gat_forward.3} parent=5 // pred_check
      _
    $region10: #{gat_forward.3} parent=5 // pred_check_branch
      %170 = sbr.rel (%p167) target = $region12
    $region11: #{gat_forward.3} parent=5 // pred_region
      %s171 = ssub.s32 %s11, 1
      // Predicated region
      $region13: #{gat_forward.3} parent=11 // pred_check
        %p172 = pneg %p58
      $region14: #{gat_forward.3} parent=11 // pred_check_branch
        %174 = sbr.rel (%p172) target = $region16
      $region15: #{gat_forward.3} parent=11 // pred_region
        _
      $region16: #{gat_forward.3} parent=11 // pred_fallthru
        _
      // Predicated region
      $region17: #{gat_forward.3} parent=11 // pred_check
        %p175 = pneg %p79
      $region18: #{gat_forward.3} parent=11 // pred_check_branch
        %177 = sbr.rel (%p175) target = $region20
      $region19: #{gat_forward.3} parent=11 // pred_region
        _
      $region20: #{gat_forward.3} parent=11 // pred_fallthru
        _
    $region12: #{gat_forward.3} parent=5 // pred_fallthru
      _
    %p178 = scmp.lt.s32.totalorder %s11, 2
    // Predicated region
    $region21: #{gat_forward.3} parent=5 // pred_check
      %p179 = pneg %p178
    $region22: #{gat_forward.3} parent=5 // pred_check_branch
      %181 = sbr.rel (%p179) target = $region24
    $region23: #{gat_forward.3} parent=5 // pred_region
      // Predicated region
      $region25: #{gat_forward.3} parent=23 // pred_check
        %p182 = pneg %p31
      $region26: #{gat_forward.3} parent=23 // pred_check_branch
        %184 = sbr.rel (%p182) target = $region28
      $region27: #{gat_forward.3} parent=23 // pred_region
        %s185 = smul.u32 16, %s11
        %p186 = scmp.lt.s32.totalorder %s185, 31
        %s187 = scalar_select %p186, %s185, 31
        %s188 = smul.addr %s187, 2
        %s189 = smul.addr %s188, 4
        %s190 = scalar_lea.vmem %s0, %s189
        %s191 = smul.u32 16, %s11
      $region28: #{gat_forward.3} parent=23 // pred_fallthru
        _
      // Predicated region
      $region29: #{gat_forward.3} parent=23 // pred_check
        %p192 = pneg %p99
      $region30: #{gat_forward.3} parent=23 // pred_check_branch
        %194 = sbr.rel (%p192) target = $region32
      $region31: #{gat_forward.3} parent=23 // pred_region
        %s195 = smul.u32 16, %s11
        %p196 = scmp.lt.s32.totalorder %s195, 31
        %s197 = scalar_select %p196, %s195, 31
        %s198 = smul.addr %s197, 8
        %s199 = scalar_lea.vmem %s3, %s198
        %s200 = smul.u32 16, %s11
      $region32: #{gat_forward.3} parent=23 // pred_fallthru
        _
      // Predicated region
      $region33: #{gat_forward.3} parent=23 // pred_check
        %p201 = pneg %p125
      $region34: #{gat_forward.3} parent=23 // pred_check_branch
        %203 = sbr.rel (%p201) target = $region36
      $region35: #{gat_forward.3} parent=23 // pred_region
        %s204 = smul.u32 16, %s11
        %p205 = scmp.lt.s32.totalorder %s204, 31
        %s206 = scalar_select %p205, %s204, 31
        %s207 = smul.addr %s206, 8
        %s208 = scalar_lea.vmem %s4, %s207
        %s209 = smul.u32 16, %s11
      $region36: #{gat_forward.3} parent=23 // pred_fallthru
        _
    $region24: #{gat_forward.3} parent=5 // pred_fallthru
      _
    %p210 = scmp.le.s32.totalorder 1, %s11
    %p211 = scmp.lt.s32.totalorder %s11, 3
    %p212 = pnand %p210, %p211
    %p213 = pneg %p212
    // Predicated region
    $region37: #{gat_forward.3} parent=5 // pred_check
      _
    $region38: #{gat_forward.3} parent=5 // pred_check_branch
      %215 = sbr.rel (%p212) target = $region40
    $region39: #{gat_forward.3} parent=5 // pred_region
      %s216 = ssub.s32 %s11, 1
      %s217 = smul.u32 16, %s16
      %p218 = scmp.lt.s32.totalorder %s217, 31
      %s219 = scalar_select %p218, %s217, 31
      %s220 = smul.addr %s219, 2
      %s221 = smul.addr %s220, 4
      %s222 = scalar_lea.vmem %s0, %s221
      %p223 = pneg %p37
      %p224 = pneg %p34
      %p225 = pneg %p58
      %p226 = pneg %p55
      %p227 = pneg %p79
      %p228 = pneg %p76
      %s229 = smul.u32 16, %s16
      %p230 = scmp.lt.s32.totalorder %s229, 31
      %s231 = scalar_select %p230, %s229, 31
      %s232 = smul.addr %s231, 8
      %s233 = scalar_lea.vmem %s3, %s232
      %p234 = pneg %p105
      %p235 = pneg %p102
      %s236 = smul.u32 16, %s16
      %p237 = scmp.lt.s32.totalorder %s236, 31
      %s238 = scalar_select %p237, %s236, 31
      %s239 = smul.addr %s238, 8
      %s240 = scalar_lea.vmem %s4, %s239
      %p241 = pneg %p131
      %p242 = pneg %p128
      %p243 = pneg %p157
      %p244 = pneg %p154
      %s245 = smul.u32 16, %s16
      %p246 = scmp.lt.s32.totalorder %s245, 31
      %s247 = scalar_select %p246, %s245, 31
      %s248 = smul.addr %s247, 8
      %s249 = scalar_lea.vmem %s5, %s248
      %s250 = smul.u32 16, %s16
      %p251 = scmp.lt.s32.totalorder %s250, 31
      %s252 = scalar_select %p251, %s250, 31
      %s253 = smul.addr %s252, 2
      %s254 = smul.addr %s253, 4
      %s255 = scalar_lea.vmem %s0, %s254
      %s256 = smul.u32 16, %s16
      %s257 = smul.u32 16, %s16
      %p258 = scmp.lt.s32.totalorder %s257, 31
      %s259 = scalar_select %p258, %s257, 31
      %s260 = smul.addr %s259, 8
      %s261 = scalar_lea.vmem %s3, %s260
      %s262 = smul.u32 16, %s16
      %s263 = smul.u32 16, %s16
      %p264 = scmp.lt.s32.totalorder %s263, 31
      %s265 = scalar_select %p264, %s263, 31
      %s266 = smul.addr %s265, 8
      %s267 = scalar_lea.vmem %s4, %s266
      %s268 = smul.u32 16, %s16
      %s269 = smul.u32 16, %s16
      %p270 = scmp.lt.s32.totalorder %s269, 31
      %s271 = scalar_select %p270, %s269, 31
      %s272 = smul.addr %s271, 8
      %s273 = scalar_lea.vmem %s5, %s272
      %s274 = smul.u32 16, %s16
      %v275 = vld [vmem:[%s255] sm:$0xff]
      %v276 = vld [vmem:[%s255 + $0x8] sm:$0xff]
      %v277 = vld [vmem:[%s255 + $0x10] sm:$0xff]
      %v278 = vld [vmem:[%s255 + $0x18] sm:$0xff]
      %v279 = vld [vmem:[%s255 + $0x20] sm:$0xff]
      %v280 = vld [vmem:[%s255 + $0x28] sm:$0xff]
      %v281 = vld [vmem:[%s255 + $0x30] sm:$0xff]
      %v282 = vld [vmem:[%s255 + $0x38] sm:$0xff]
      %v283 = vld [vmem:[%s255 + $0x40] sm:$0xff]
      %v284 = vld [vmem:[%s255 + $0x48] sm:$0xff]
      %v285 = vld [vmem:[%s255 + $0x50] sm:$0xff]
      %v286 = vld [vmem:[%s255 + $0x58] sm:$0xff]
      %v287 = vld [vmem:[%s255 + $0x60] sm:$0xff]
      %v288 = vld [vmem:[%s255 + $0x68] sm:$0xff]
      %v289 = vld [vmem:[%s255 + $0x70] sm:$0xff]
      %v290 = vld [vmem:[%s255 + $0x78] sm:$0xff]
      %v291 = vunpack.c.l.bf16 %v275
      %v292 = vunpack.c.h.bf16 %v275
      %v293 = vunpack.c.l.bf16 %v276
      %v294 = vunpack.c.h.bf16 %v276
      %v295 = vunpack.c.l.bf16 %v277
      %v296 = vunpack.c.h.bf16 %v277
      %v297 = vunpack.c.l.bf16 %v278
      %v298 = vunpack.c.h.bf16 %v278
      %v299 = vunpack.c.l.bf16 %v279
      %v300 = vunpack.c.h.bf16 %v279
      %v301 = vunpack.c.l.bf16 %v280
      %v302 = vunpack.c.h.bf16 %v280
      %v303 = vunpack.c.l.bf16 %v281
      %v304 = vunpack.c.h.bf16 %v281
      %v305 = vunpack.c.l.bf16 %v282
      %v306 = vunpack.c.h.bf16 %v282
      %v307 = vunpack.c.l.bf16 %v283
      %v308 = vunpack.c.h.bf16 %v283
      %v309 = vunpack.c.l.bf16 %v284
      %v310 = vunpack.c.h.bf16 %v284
      %v311 = vunpack.c.l.bf16 %v285
      %v312 = vunpack.c.h.bf16 %v285
      %v313 = vunpack.c.l.bf16 %v286
      %v314 = vunpack.c.h.bf16 %v286
      %v315 = vunpack.c.l.bf16 %v287
      %v316 = vunpack.c.h.bf16 %v287
      %v317 = vunpack.c.l.bf16 %v288
      %v318 = vunpack.c.h.bf16 %v288
      %v319 = vunpack.c.l.bf16 %v289
      %v320 = vunpack.c.h.bf16 %v289
      %v321 = vunpack.c.l.bf16 %v290
      %v322 = vunpack.c.h.bf16 %v290
      %vm323 = vcmp.eq.f32.partialorder %v291, 0.0
      %vm324 = vcmp.eq.f32.partialorder %v292, 0.0
      %vm325 = vcmp.eq.f32.partialorder %v293, 0.0
      %vm326 = vcmp.eq.f32.partialorder %v294, 0.0
      %vm327 = vcmp.eq.f32.partialorder %v295, 0.0
      %vm328 = vcmp.eq.f32.partialorder %v296, 0.0
      %vm329 = vcmp.eq.f32.partialorder %v297, 0.0
      %vm330 = vcmp.eq.f32.partialorder %v298, 0.0
      %vm331 = vcmp.eq.f32.partialorder %v299, 0.0
      %vm332 = vcmp.eq.f32.partialorder %v300, 0.0
      %vm333 = vcmp.eq.f32.partialorder %v301, 0.0
      %vm334 = vcmp.eq.f32.partialorder %v302, 0.0
      %vm335 = vcmp.eq.f32.partialorder %v303, 0.0
      %vm336 = vcmp.eq.f32.partialorder %v304, 0.0
      %vm337 = vcmp.eq.f32.partialorder %v305, 0.0
      %vm338 = vcmp.eq.f32.partialorder %v306, 0.0
      %vm339 = vcmp.eq.f32.partialorder %v307, 0.0
      %vm340 = vcmp.eq.f32.partialorder %v308, 0.0
      %vm341 = vcmp.eq.f32.partialorder %v309, 0.0
      %vm342 = vcmp.eq.f32.partialorder %v310, 0.0
      %vm343 = vcmp.eq.f32.partialorder %v311, 0.0
      %vm344 = vcmp.eq.f32.partialorder %v312, 0.0
      %vm345 = vcmp.eq.f32.partialorder %v313, 0.0
      %vm346 = vcmp.eq.f32.partialorder %v314, 0.0
      %vm347 = vcmp.eq.f32.partialorder %v315, 0.0
      %vm348 = vcmp.eq.f32.partialorder %v316, 0.0
      %vm349 = vcmp.eq.f32.partialorder %v317, 0.0
      %vm350 = vcmp.eq.f32.partialorder %v318, 0.0
      %vm351 = vcmp.eq.f32.partialorder %v319, 0.0
      %vm352 = vcmp.eq.f32.partialorder %v320, 0.0
      %vm353 = vcmp.eq.f32.partialorder %v321, 0.0
      %vm354 = vcmp.eq.f32.partialorder %v322, 0.0
      %v355 = vld [vmem:[%s261] sm:$0xff]
      %v356 = vld [vmem:[%s261 + $0x8] sm:$0xff]
      %v357 = vld [vmem:[%s261 + $0x10] sm:$0xff]
      %v358 = vld [vmem:[%s261 + $0x18] sm:$0xff]
      %v359 = vld [vmem:[%s261 + $0x20] sm:$0xff]
      %v360 = vld [vmem:[%s261 + $0x28] sm:$0xff]
      %v361 = vld [vmem:[%s261 + $0x30] sm:$0xff]
      %v362 = vld [vmem:[%s261 + $0x38] sm:$0xff]
      %v363 = vld [vmem:[%s261 + $0x40] sm:$0xff]
      %v364 = vld [vmem:[%s261 + $0x48] sm:$0xff]
      %v365 = vld [vmem:[%s261 + $0x50] sm:$0xff]
      %v366 = vld [vmem:[%s261 + $0x58] sm:$0xff]
      %v367 = vld [vmem:[%s261 + $0x60] sm:$0xff]
      %v368 = vld [vmem:[%s261 + $0x68] sm:$0xff]
      %v369 = vld [vmem:[%s261 + $0x70] sm:$0xff]
      %v370 = vld [vmem:[%s261 + $0x78] sm:$0xff]
      %v371 = vld [vmem:[%s2] sm:$0x3]
      %373 = vset.pattern.permute.xlu0 0
      %374 = vperm.xlu0 %373, %v355
      %v375 = vpop.permute.xlu0 %374
      %378 = vset.pattern.permute.xlu0 0
      %379 = vperm.xlu0 %378, %v356
      %v380 = vpop.permute.xlu0 %379
      %383 = vset.pattern.permute.xlu0 0
      %384 = vperm.xlu0 %383, %v357
      %v385 = vpop.permute.xlu0 %384
      %388 = vset.pattern.permute.xlu0 0
      %389 = vperm.xlu0 %388, %v358
      %v390 = vpop.permute.xlu0 %389
      %393 = vset.pattern.permute.xlu0 0
      %394 = vperm.xlu0 %393, %v359
      %v395 = vpop.permute.xlu0 %394
      %398 = vset.pattern.permute.xlu0 0
      %399 = vperm.xlu0 %398, %v360
      %v400 = vpop.permute.xlu0 %399
      %403 = vset.pattern.permute.xlu0 0
      %404 = vperm.xlu0 %403, %v361
      %v405 = vpop.permute.xlu0 %404
      %408 = vset.pattern.permute.xlu0 0
      %409 = vperm.xlu0 %408, %v362
      %v410 = vpop.permute.xlu0 %409
      %413 = vset.pattern.permute.xlu0 0
      %414 = vperm.xlu0 %413, %v363
      %v415 = vpop.permute.xlu0 %414
      %418 = vset.pattern.permute.xlu0 0
      %419 = vperm.xlu0 %418, %v364
      %v420 = vpop.permute.xlu0 %419
      %423 = vset.pattern.permute.xlu0 0
      %424 = vperm.xlu0 %423, %v365
      %v425 = vpop.permute.xlu0 %424
      %428 = vset.pattern.permute.xlu0 0
      %429 = vperm.xlu0 %428, %v366
      %v430 = vpop.permute.xlu0 %429
      %433 = vset.pattern.permute.xlu0 0
      %434 = vperm.xlu0 %433, %v367
      %v435 = vpop.permute.xlu0 %434
      %438 = vset.pattern.permute.xlu0 0
      %439 = vperm.xlu0 %438, %v368
      %v440 = vpop.permute.xlu0 %439
      %443 = vset.pattern.permute.xlu0 0
      %444 = vperm.xlu0 %443, %v369
      %v445 = vpop.permute.xlu0 %444
      %448 = vset.pattern.permute.xlu0 0
      %449 = vperm.xlu0 %448, %v370
      %v450 = vpop.permute.xlu0 %449
      %v453 = vperm.slane %v371, 0
      %v454 = vperm.slane %v371, 1
      %v457 = vadd.f32 %v375, %v453
      %v458 = vadd.f32 %v375, %v454
      %v459 = vadd.f32 %v380, %v453
      %v460 = vadd.f32 %v380, %v454
      %v461 = vadd.f32 %v385, %v453
      %v462 = vadd.f32 %v385, %v454
      %v463 = vadd.f32 %v390, %v453
      %v464 = vadd.f32 %v390, %v454
      %v465 = vadd.f32 %v395, %v453
      %v466 = vadd.f32 %v395, %v454
      %v467 = vadd.f32 %v400, %v453
      %v468 = vadd.f32 %v400, %v454
      %v469 = vadd.f32 %v405, %v453
      %v470 = vadd.f32 %v405, %v454
      %v471 = vadd.f32 %v410, %v453
      %v472 = vadd.f32 %v410, %v454
      %v473 = vadd.f32 %v415, %v453
      %v474 = vadd.f32 %v415, %v454
      %v475 = vadd.f32 %v420, %v453
      %v476 = vadd.f32 %v420, %v454
      %v477 = vadd.f32 %v425, %v453
      %v478 = vadd.f32 %v425, %v454
      %v479 = vadd.f32 %v430, %v453
      %v480 = vadd.f32 %v430, %v454
      %v481 = vadd.f32 %v435, %v453
      %v482 = vadd.f32 %v435, %v454
      %v483 = vadd.f32 %v440, %v453
      %v484 = vadd.f32 %v440, %v454
      %v485 = vadd.f32 %v445, %v453
      %v486 = vadd.f32 %v445, %v454
      %v487 = vadd.f32 %v450, %v453
      %v488 = vadd.f32 %v450, %v454
      %vm489 = vcmp.gt.f32.partialorder %v457, 0.0
      %vm490 = vcmp.gt.f32.partialorder %v458, 0.0
      %vm491 = vcmp.gt.f32.partialorder %v459, 0.0
      %vm492 = vcmp.gt.f32.partialorder %v460, 0.0
      %vm493 = vcmp.gt.f32.partialorder %v461, 0.0
      %vm494 = vcmp.gt.f32.partialorder %v462, 0.0
      %vm495 = vcmp.gt.f32.partialorder %v463, 0.0
      %vm496 = vcmp.gt.f32.partialorder %v464, 0.0
      %vm497 = vcmp.gt.f32.partialorder %v465, 0.0
      %vm498 = vcmp.gt.f32.partialorder %v466, 0.0
      %vm499 = vcmp.gt.f32.partialorder %v467, 0.0
      %vm500 = vcmp.gt.f32.partialorder %v468, 0.0
      %vm501 = vcmp.gt.f32.partialorder %v469, 0.0
      %vm502 = vcmp.gt.f32.partialorder %v470, 0.0
      %vm503 = vcmp.gt.f32.partialorder %v471, 0.0
      %vm504 = vcmp.gt.f32.partialorder %v472, 0.0
      %vm505 = vcmp.gt.f32.partialorder %v473, 0.0
      %vm506 = vcmp.gt.f32.partialorder %v474, 0.0
      %vm507 = vcmp.gt.f32.partialorder %v475, 0.0
      %vm508 = vcmp.gt.f32.partialorder %v476, 0.0
      %vm509 = vcmp.gt.f32.partialorder %v477, 0.0
      %vm510 = vcmp.gt.f32.partialorder %v478, 0.0
      %vm511 = vcmp.gt.f32.partialorder %v479, 0.0
      %vm512 = vcmp.gt.f32.partialorder %v480, 0.0
      %vm513 = vcmp.gt.f32.partialorder %v481, 0.0
      %vm514 = vcmp.gt.f32.partialorder %v482, 0.0
      %vm515 = vcmp.gt.f32.partialorder %v483, 0.0
      %vm516 = vcmp.gt.f32.partialorder %v484, 0.0
      %vm517 = vcmp.gt.f32.partialorder %v485, 0.0
      %vm518 = vcmp.gt.f32.partialorder %v486, 0.0
      %vm519 = vcmp.gt.f32.partialorder %v487, 0.0
      %vm520 = vcmp.gt.f32.partialorder %v488, 0.0
      %v521 = vmul.f32 %v457, 0.2
      %v522 = vmul.f32 %v458, 0.2
      %v523 = vmul.f32 %v459, 0.2
      %v524 = vmul.f32 %v460, 0.2
      %v525 = vmul.f32 %v461, 0.2
      %v526 = vmul.f32 %v462, 0.2
      %v527 = vmul.f32 %v463, 0.2
      %v528 = vmul.f32 %v464, 0.2
      %v529 = vmul.f32 %v465, 0.2
      %v530 = vmul.f32 %v466, 0.2
      %v531 = vmul.f32 %v467, 0.2
      %v532 = vmul.f32 %v468, 0.2
      %v533 = vmul.f32 %v469, 0.2
      %v534 = vmul.f32 %v470, 0.2
      %v535 = vmul.f32 %v471, 0.2
      %v536 = vmul.f32 %v472, 0.2
      %v537 = vmul.f32 %v473, 0.2
      %v538 = vmul.f32 %v474, 0.2
      %v539 = vmul.f32 %v475, 0.2
      %v540 = vmul.f32 %v476, 0.2
      %v541 = vmul.f32 %v477, 0.2
      %v542 = vmul.f32 %v478, 0.2
      %v543 = vmul.f32 %v479, 0.2
      %v544 = vmul.f32 %v480, 0.2
      %v545 = vmul.f32 %v481, 0.2
      %v546 = vmul.f32 %v482, 0.2
      %v547 = vmul.f32 %v483, 0.2
      %v548 = vmul.f32 %v484, 0.2
      %v549 = vmul.f32 %v485, 0.2
      %v550 = vmul.f32 %v486, 0.2
      %v551 = vmul.f32 %v487, 0.2
      %v552 = vmul.f32 %v488, 0.2
      %v553 = vsel %vm489, %v457, %v521
      %v554 = vsel %vm490, %v458, %v522
      %v555 = vsel %vm491, %v459, %v523
      %v556 = vsel %vm492, %v460, %v524
      %v557 = vsel %vm493, %v461, %v525
      %v558 = vsel %vm494, %v462, %v526
      %v559 = vsel %vm495, %v463, %v527
      %v560 = vsel %vm496, %v464, %v528
      %v561 = vsel %vm497, %v465, %v529
      %v562 = vsel %vm498, %v466, %v530
      %v563 = vsel %vm499, %v467, %v531
      %v564 = vsel %vm500, %v468, %v532
      %v565 = vsel %vm501, %v469, %v533
      %v566 = vsel %vm502, %v470, %v534
      %v567 = vsel %vm503, %v471, %v535
      %v568 = vsel %vm504, %v472, %v536
      %v569 = vsel %vm505, %v473, %v537
      %v570 = vsel %vm506, %v474, %v538
      %v571 = vsel %vm507, %v475, %v539
      %v572 = vsel %vm508, %v476, %v540
      %v573 = vsel %vm509, %v477, %v541
      %v574 = vsel %vm510, %v478, %v542
      %v575 = vsel %vm511, %v479, %v543
      %v576 = vsel %vm512, %v480, %v544
      %v577 = vsel %vm513, %v481, %v545
      %v578 = vsel %vm514, %v482, %v546
      %v579 = vsel %vm515, %v483, %v547
      %v580 = vsel %vm516, %v484, %v548
      %v581 = vsel %vm517, %v485, %v549
      %v582 = vsel %vm518, %v486, %v550
      %v583 = vsel %vm519, %v487, %v551
      %v584 = vsel %vm520, %v488, %v552
      %v585 = vsel %vm323, -1e+30, %v553
      %v586 = vsel %vm324, -1e+30, %v554
      %v587 = vsel %vm325, -1e+30, %v555
      %v588 = vsel %vm326, -1e+30, %v556
      %v589 = vsel %vm327, -1e+30, %v557
      %v590 = vsel %vm328, -1e+30, %v558
      %v591 = vsel %vm329, -1e+30, %v559
      %v592 = vsel %vm330, -1e+30, %v560
      %v593 = vsel %vm331, -1e+30, %v561
      %v594 = vsel %vm332, -1e+30, %v562
      %v595 = vsel %vm333, -1e+30, %v563
      %v596 = vsel %vm334, -1e+30, %v564
      %v597 = vsel %vm335, -1e+30, %v565
      %v598 = vsel %vm336, -1e+30, %v566
      %v599 = vsel %vm337, -1e+30, %v567
      %v600 = vsel %vm338, -1e+30, %v568
      %v601 = vsel %vm339, -1e+30, %v569
      %v602 = vsel %vm340, -1e+30, %v570
      %v603 = vsel %vm341, -1e+30, %v571
      %v604 = vsel %vm342, -1e+30, %v572
      %v605 = vsel %vm343, -1e+30, %v573
      %v606 = vsel %vm344, -1e+30, %v574
      %v607 = vsel %vm345, -1e+30, %v575
      %v608 = vsel %vm346, -1e+30, %v576
      %v609 = vsel %vm347, -1e+30, %v577
      %v610 = vsel %vm348, -1e+30, %v578
      %v611 = vsel %vm349, -1e+30, %v579
      %v612 = vsel %vm350, -1e+30, %v580
      %v613 = vsel %vm351, -1e+30, %v581
      %v614 = vsel %vm352, -1e+30, %v582
      %v615 = vsel %vm353, -1e+30, %v583
      %v616 = vsel %vm354, -1e+30, %v584
      %v617 = vmax.f32 %v585, %v586
      %618 = vmax.xlane.f32.xlu0 %v617
      %v619 = vpop.xlane.xlu0 %618
      %v620 = vmax.f32 %v587, %v588
      %621 = vmax.xlane.f32.xlu0 %v620
      %v622 = vpop.xlane.xlu0 %621
      %v623 = vmax.f32 %v589, %v590
      %624 = vmax.xlane.f32.xlu0 %v623
      %v625 = vpop.xlane.xlu0 %624
      %v626 = vmax.f32 %v591, %v592
      %627 = vmax.xlane.f32.xlu0 %v626
      %v628 = vpop.xlane.xlu0 %627
      %v629 = vmax.f32 %v593, %v594
      %630 = vmax.xlane.f32.xlu0 %v629
      %v631 = vpop.xlane.xlu0 %630
      %v632 = vmax.f32 %v595, %v596
      %633 = vmax.xlane.f32.xlu0 %v632
      %v634 = vpop.xlane.xlu0 %633
      %v635 = vmax.f32 %v597, %v598
      %636 = vmax.xlane.f32.xlu0 %v635
      %v637 = vpop.xlane.xlu0 %636
      %v638 = vmax.f32 %v599, %v600
      %639 = vmax.xlane.f32.xlu0 %v638
      %v640 = vpop.xlane.xlu0 %639
      %v641 = vmax.f32 %v601, %v602
      %642 = vmax.xlane.f32.xlu0 %v641
      %v643 = vpop.xlane.xlu0 %642
      %v644 = vmax.f32 %v603, %v604
      %645 = vmax.xlane.f32.xlu0 %v644
      %v646 = vpop.xlane.xlu0 %645
      %v647 = vmax.f32 %v605, %v606
      %648 = vmax.xlane.f32.xlu0 %v647
      %v649 = vpop.xlane.xlu0 %648
      %v650 = vmax.f32 %v607, %v608
      %651 = vmax.xlane.f32.xlu0 %v650
      %v652 = vpop.xlane.xlu0 %651
      %v653 = vmax.f32 %v609, %v610
      %654 = vmax.xlane.f32.xlu0 %v653
      %v655 = vpop.xlane.xlu0 %654
      %v656 = vmax.f32 %v611, %v612
      %657 = vmax.xlane.f32.xlu0 %v656
      %v658 = vpop.xlane.xlu0 %657
      %v659 = vmax.f32 %v613, %v614
      %660 = vmax.xlane.f32.xlu0 %v659
      %v661 = vpop.xlane.xlu0 %660
      %v662 = vmax.f32 %v615, %v616
      %663 = vmax.xlane.f32.xlu0 %v662
      %v664 = vpop.xlane.xlu0 %663
      %v665 = vsub.f32 %v585, %v619
      %v666 = vsub.f32 %v586, %v619
      %v667 = vsub.f32 %v587, %v622
      %v668 = vsub.f32 %v588, %v622
      %v669 = vsub.f32 %v589, %v625
      %v670 = vsub.f32 %v590, %v625
      %v671 = vsub.f32 %v591, %v628
      %v672 = vsub.f32 %v592, %v628
      %v673 = vsub.f32 %v593, %v631
      %v674 = vsub.f32 %v594, %v631
      %v675 = vsub.f32 %v595, %v634
      %v676 = vsub.f32 %v596, %v634
      %v677 = vsub.f32 %v597, %v637
      %v678 = vsub.f32 %v598, %v637
      %v679 = vsub.f32 %v599, %v640
      %v680 = vsub.f32 %v600, %v640
      %v681 = vsub.f32 %v601, %v643
      %v682 = vsub.f32 %v602, %v643
      %v683 = vsub.f32 %v603, %v646
      %v684 = vsub.f32 %v604, %v646
      %v685 = vsub.f32 %v605, %v649
      %v686 = vsub.f32 %v606, %v649
      %v687 = vsub.f32 %v607, %v652
      %v688 = vsub.f32 %v608, %v652
      %v689 = vsub.f32 %v609, %v655
      %v690 = vsub.f32 %v610, %v655
      %v691 = vsub.f32 %v611, %v658
      %v692 = vsub.f32 %v612, %v658
      %v693 = vsub.f32 %v613, %v661
      %v694 = vsub.f32 %v614, %v661
      %v695 = vsub.f32 %v615, %v664
      %v696 = vsub.f32 %v616, %v664
      %v697 = vmul.f32 %v665, 1.442695
      %v698 = vpow.pop %v697
      %v699 = vmul.f32 %v666, 1.442695
      %v700 = vpow.pop %v699
      %v701 = vmul.f32 %v667, 1.442695
      %v702 = vpow.pop %v701
      %v703 = vmul.f32 %v668, 1.442695
      %v704 = vpow.pop %v703
      %v705 = vmul.f32 %v669, 1.442695
      %v706 = vpow.pop %v705
      %v707 = vmul.f32 %v670, 1.442695
      %v708 = vpow.pop %v707
      %v709 = vmul.f32 %v671, 1.442695
      %v710 = vpow.pop %v709
      %v711 = vmul.f32 %v672, 1.442695
      %v712 = vpow.pop %v711
      %v713 = vmul.f32 %v673, 1.442695
      %v714 = vpow.pop %v713
      %v715 = vmul.f32 %v674, 1.442695
      %v716 = vpow.pop %v715
      %v717 = vmul.f32 %v675, 1.442695
      %v718 = vpow.pop %v717
      %v719 = vmul.f32 %v676, 1.442695
      %v720 = vpow.pop %v719
      %v721 = vmul.f32 %v677, 1.442695
      %v722 = vpow.pop %v721
      %v723 = vmul.f32 %v678, 1.442695
      %v724 = vpow.pop %v723
      %v725 = vmul.f32 %v679, 1.442695
      %v726 = vpow.pop %v725
      %v727 = vmul.f32 %v680, 1.442695
      %v728 = vpow.pop %v727
      %v729 = vmul.f32 %v681, 1.442695
      %v730 = vpow.pop %v729
      %v731 = vmul.f32 %v682, 1.442695
      %v732 = vpow.pop %v731
      %v733 = vmul.f32 %v683, 1.442695
      %v734 = vpow.pop %v733
      %v735 = vmul.f32 %v684, 1.442695
      %v736 = vpow.pop %v735
      %v737 = vmul.f32 %v685, 1.442695
      %v738 = vpow.pop %v737
      %v739 = vmul.f32 %v686, 1.442695
      %v740 = vpow.pop %v739
      %v741 = vmul.f32 %v687, 1.442695
      %v742 = vpow.pop %v741
      %v743 = vmul.f32 %v688, 1.442695
      %v744 = vpow.pop %v743
      %v745 = vmul.f32 %v689, 1.442695
      %v746 = vpow.pop %v745
      %v747 = vmul.f32 %v690, 1.442695
      %v748 = vpow.pop %v747
      %v749 = vmul.f32 %v691, 1.442695
      %v750 = vpow.pop %v749
      %v751 = vmul.f32 %v692, 1.442695
      %v752 = vpow.pop %v751
      %v753 = vmul.f32 %v693, 1.442695
      %v754 = vpow.pop %v753
      %v755 = vmul.f32 %v694, 1.442695
      %v756 = vpow.pop %v755
      %v757 = vmul.f32 %v695, 1.442695
      %v758 = vpow.pop %v757
      %v759 = vmul.f32 %v696, 1.442695
      %v760 = vpow.pop %v759
      %v761 = vsel %vm323, 0.0, %v698
      %v762 = vsel %vm324, 0.0, %v700
      %v763 = vsel %vm325, 0.0, %v702
      %v764 = vsel %vm326, 0.0, %v704
      %v765 = vsel %vm327, 0.0, %v706
      %v766 = vsel %vm328, 0.0, %v708
      %v767 = vsel %vm329, 0.0, %v710
      %v768 = vsel %vm330, 0.0, %v712
      %v769 = vsel %vm331, 0.0, %v714
      %v770 = vsel %vm332, 0.0, %v716
      %v771 = vsel %vm333, 0.0, %v718
      %v772 = vsel %vm334, 0.0, %v720
      %v773 = vsel %vm335, 0.0, %v722
      %v774 = vsel %vm336, 0.0, %v724
      %v775 = vsel %vm337, 0.0, %v726
      %v776 = vsel %vm338, 0.0, %v728
      %v777 = vsel %vm339, 0.0, %v730
      %v778 = vsel %vm340, 0.0, %v732
      %v779 = vsel %vm341, 0.0, %v734
      %v780 = vsel %vm342, 0.0, %v736
      %v781 = vsel %vm343, 0.0, %v738
      %v782 = vsel %vm344, 0.0, %v740
      %v783 = vsel %vm345, 0.0, %v742
      %v784 = vsel %vm346, 0.0, %v744
      %v785 = vsel %vm347, 0.0, %v746
      %v786 = vsel %vm348, 0.0, %v748
      %v787 = vsel %vm349, 0.0, %v750
      %v788 = vsel %vm350, 0.0, %v752
      %v789 = vsel %vm351, 0.0, %v754
      %v790 = vsel %vm352, 0.0, %v756
      %v791 = vsel %vm353, 0.0, %v758
      %v792 = vsel %vm354, 0.0, %v760
      %v793 = vadd.f32 %v761, %v762
      %794 = vadd.xlane.f32.xlu0 %v793
      %v795 = vpop.xlane.xlu0 %794
      %v796 = vadd.f32 %v763, %v764
      %797 = vadd.xlane.f32.xlu0 %v796
      %v798 = vpop.xlane.xlu0 %797
      %v799 = vadd.f32 %v765, %v766
      %800 = vadd.xlane.f32.xlu0 %v799
      %v801 = vpop.xlane.xlu0 %800
      %v802 = vadd.f32 %v767, %v768
      %803 = vadd.xlane.f32.xlu0 %v802
      %v804 = vpop.xlane.xlu0 %803
      %v805 = vadd.f32 %v769, %v770
      %806 = vadd.xlane.f32.xlu0 %v805
      %v807 = vpop.xlane.xlu0 %806
      %v808 = vadd.f32 %v771, %v772
      %809 = vadd.xlane.f32.xlu0 %v808
      %v810 = vpop.xlane.xlu0 %809
      %v811 = vadd.f32 %v773, %v774
      %812 = vadd.xlane.f32.xlu0 %v811
      %v813 = vpop.xlane.xlu0 %812
      %v814 = vadd.f32 %v775, %v776
      %815 = vadd.xlane.f32.xlu0 %v814
      %v816 = vpop.xlane.xlu0 %815
      %v817 = vadd.f32 %v777, %v778
      %818 = vadd.xlane.f32.xlu0 %v817
      %v819 = vpop.xlane.xlu0 %818
      %v820 = vadd.f32 %v779, %v780
      %821 = vadd.xlane.f32.xlu0 %v820
      %v822 = vpop.xlane.xlu0 %821
      %v823 = vadd.f32 %v781, %v782
      %824 = vadd.xlane.f32.xlu0 %v823
      %v825 = vpop.xlane.xlu0 %824
      %v826 = vadd.f32 %v783, %v784
      %827 = vadd.xlane.f32.xlu0 %v826
      %v828 = vpop.xlane.xlu0 %827
      %v829 = vadd.f32 %v785, %v786
      %830 = vadd.xlane.f32.xlu0 %v829
      %v831 = vpop.xlane.xlu0 %830
      %v832 = vadd.f32 %v787, %v788
      %833 = vadd.xlane.f32.xlu0 %v832
      %v834 = vpop.xlane.xlu0 %833
      %v835 = vadd.f32 %v789, %v790
      %836 = vadd.xlane.f32.xlu0 %v835
      %v837 = vpop.xlane.xlu0 %836
      %v838 = vadd.f32 %v791, %v792
      %839 = vadd.xlane.f32.xlu0 %v838
      %v840 = vpop.xlane.xlu0 %839
      %vm841 = vcmp.gt.f32.partialorder %v795, 0.0
      %vm842 = vcmp.gt.f32.partialorder %v798, 0.0
      %vm843 = vcmp.gt.f32.partialorder %v801, 0.0
      %vm844 = vcmp.gt.f32.partialorder %v804, 0.0
      %vm845 = vcmp.gt.f32.partialorder %v807, 0.0
      %vm846 = vcmp.gt.f32.partialorder %v810, 0.0
      %vm847 = vcmp.gt.f32.partialorder %v813, 0.0
      %vm848 = vcmp.gt.f32.partialorder %v816, 0.0
      %vm849 = vcmp.gt.f32.partialorder %v819, 0.0
      %vm850 = vcmp.gt.f32.partialorder %v822, 0.0
      %vm851 = vcmp.gt.f32.partialorder %v825, 0.0
      %vm852 = vcmp.gt.f32.partialorder %v828, 0.0
      %vm853 = vcmp.gt.f32.partialorder %v831, 0.0
      %vm854 = vcmp.gt.f32.partialorder %v834, 0.0
      %vm855 = vcmp.gt.f32.partialorder %v837, 0.0
      %vm856 = vcmp.gt.f32.partialorder %v840, 0.0
      %v857 = vrcp.pop %v795
      %v858 = vrcp.pop %v798
      %v859 = vrcp.pop %v801
      %v860 = vrcp.pop %v804
      %v861 = vrcp.pop %v807
      %v862 = vrcp.pop %v810
      %v863 = vrcp.pop %v813
      %v864 = vrcp.pop %v816
      %v865 = vrcp.pop %v819
      %v866 = vrcp.pop %v822
      %v867 = vrcp.pop %v825
      %v868 = vrcp.pop %v828
      %v869 = vrcp.pop %v831
      %v870 = vrcp.pop %v834
      %v871 = vrcp.pop %v837
      %v872 = vrcp.pop %v840
      %v873 = vsel %vm841, %v857, 0.0
      %v874 = vsel %vm842, %v858, 0.0
      %v875 = vsel %vm843, %v859, 0.0
      %v876 = vsel %vm844, %v860, 0.0
      %v877 = vsel %vm845, %v861, 0.0
      %v878 = vsel %vm846, %v862, 0.0
      %v879 = vsel %vm847, %v863, 0.0
      %v880 = vsel %vm848, %v864, 0.0
      %v881 = vsel %vm849, %v865, 0.0
      %v882 = vsel %vm850, %v866, 0.0
      %v883 = vsel %vm851, %v867, 0.0
      %v884 = vsel %vm852, %v868, 0.0
      %v885 = vsel %vm853, %v869, 0.0
      %v886 = vsel %vm854, %v870, 0.0
      %v887 = vsel %vm855, %v871, 0.0
      %v888 = vsel %vm856, %v872, 0.0
      %v889 = vld [vmem:[%s1] sm:$0xf]
      %v890 = vld [vmem:[%s1 + $0x4] sm:$0xf]
      %v891 = vld [vmem:[%s1 + $0x8] sm:$0xf]
      %v892 = vld [vmem:[%s1 + $0xc] sm:$0xf]
      %v893 = vld [vmem:[%s1 + $0x10] sm:$0xf]
      %v894 = vld [vmem:[%s1 + $0x14] sm:$0xf]
      %v895 = vld [vmem:[%s1 + $0x18] sm:$0xf]
      %v896 = vld [vmem:[%s1 + $0x1c] sm:$0xf]
      %v897 = vld [vmem:[%s1 + $0x20] sm:$0xf]
      %v898 = vld [vmem:[%s1 + $0x24] sm:$0xf]
      %v899 = vld [vmem:[%s1 + $0x28] sm:$0xf]
      %v900 = vld [vmem:[%s1 + $0x2c] sm:$0xf]
      %v901 = vld [vmem:[%s1 + $0x30] sm:$0xf]
      %v902 = vld [vmem:[%s1 + $0x34] sm:$0xf]
      %v903 = vld [vmem:[%s1 + $0x38] sm:$0xf]
      %v904 = vld [vmem:[%s1 + $0x3c] sm:$0xf]
      %v905 = vld [vmem:[%s1 + $0x40] sm:$0xf]
      %v906 = vld [vmem:[%s1 + $0x44] sm:$0xf]
      %v907 = vld [vmem:[%s1 + $0x48] sm:$0xf]
      %v908 = vld [vmem:[%s1 + $0x4c] sm:$0xf]
      %v909 = vld [vmem:[%s1 + $0x50] sm:$0xf]
      %v910 = vld [vmem:[%s1 + $0x54] sm:$0xf]
      %v911 = vld [vmem:[%s1 + $0x58] sm:$0xf]
      %v912 = vld [vmem:[%s1 + $0x5c] sm:$0xf]
      %v913 = vld [vmem:[%s1 + $0x60] sm:$0xf]
      %v914 = vld [vmem:[%s1 + $0x64] sm:$0xf]
      %v915 = vld [vmem:[%s1 + $0x68] sm:$0xf]
      %v916 = vld [vmem:[%s1 + $0x6c] sm:$0xf]
      %v917 = vld [vmem:[%s1 + $0x70] sm:$0xf]
      %v918 = vld [vmem:[%s1 + $0x74] sm:$0xf]
      %v919 = vld [vmem:[%s1 + $0x78] sm:$0xf]
      %v920 = vld [vmem:[%s1 + $0x7c] sm:$0xf]
      %v921 = vpack.c.bf16 %v763, %v761
      %v922 = vpack.c.bf16 %v764, %v762
      %v923 = vpack.c.bf16 %v767, %v765
      %v924 = vpack.c.bf16 %v768, %v766
      %v925 = vpack.c.bf16 %v771, %v769
      %v926 = vpack.c.bf16 %v772, %v770
      %v927 = vpack.c.bf16 %v775, %v773
      %v928 = vpack.c.bf16 %v776, %v774
      %v929 = vpack.c.bf16 %v779, %v777
      %v930 = vpack.c.bf16 %v780, %v778
      %v931 = vpack.c.bf16 %v783, %v781
      %v932 = vpack.c.bf16 %v784, %v782
      %v933 = vpack.c.bf16 %v787, %v785
      %v934 = vpack.c.bf16 %v788, %v786
      %v935 = vpack.c.bf16 %v791, %v789
      %v936 = vpack.c.bf16 %v792, %v790
      %v969 = vunpack.c.l.b16 %v889
      %v970 = vunpack.c.l.b16 %v890
      %v971 = vunpack.c.l.b16 %v891
      %v972 = vunpack.c.l.b16 %v892
      %v973 = vunpack.c.l.b16 %v893
      %v974 = vunpack.c.l.b16 %v894
      %v975 = vunpack.c.l.b16 %v895
      %v976 = vunpack.c.l.b16 %v896
      %v977 = vunpack.c.l.b16 %v897
      %v978 = vunpack.c.l.b16 %v898
      %v979 = vunpack.c.l.b16 %v899
      %v980 = vunpack.c.l.b16 %v900
      %v981 = vunpack.c.l.b16 %v901
      %v982 = vunpack.c.l.b16 %v902
      %v983 = vunpack.c.l.b16 %v903
      %v984 = vunpack.c.l.b16 %v904
      %v985 = vunpack.c.l.b16 %v905
      %v986 = vunpack.c.l.b16 %v906
      %v987 = vunpack.c.l.b16 %v907
      %v988 = vunpack.c.l.b16 %v908
      %v989 = vunpack.c.l.b16 %v909
      %v990 = vunpack.c.l.b16 %v910
      %v991 = vunpack.c.l.b16 %v911
      %v992 = vunpack.c.l.b16 %v912
      %v993 = vunpack.c.l.b16 %v913
      %v994 = vunpack.c.l.b16 %v914
      %v995 = vunpack.c.l.b16 %v915
      %v996 = vunpack.c.l.b16 %v916
      %v997 = vunpack.c.l.b16 %v917
      %v998 = vunpack.c.l.b16 %v918
      %v999 = vunpack.c.l.b16 %v919
      %v1000 = vunpack.c.l.b16 %v920
      %v1001 = vpack.c.b16 %v970, %v969
      %v1002 = vpack.c.b16 %v972, %v971
      %v1003 = vpack.c.b16 %v974, %v973
      %v1004 = vpack.c.b16 %v976, %v975
      %v1005 = vpack.c.b16 %v978, %v977
      %v1006 = vpack.c.b16 %v980, %v979
      %v1007 = vpack.c.b16 %v982, %v981
      %v1008 = vpack.c.b16 %v984, %v983
      %v1009 = vpack.c.b16 %v986, %v985
      %v1010 = vpack.c.b16 %v988, %v987
      %v1011 = vpack.c.b16 %v990, %v989
      %v1012 = vpack.c.b16 %v992, %v991
      %v1013 = vpack.c.b16 %v994, %v993
      %v1014 = vpack.c.b16 %v996, %v995
      %v1015 = vpack.c.b16 %v998, %v997
      %v1016 = vpack.c.b16 %v1000, %v999
      %1033 = vmatpush.bf16.msra.mxu0 %v1008
      %1034 = vmatpush.bf16.msra.mxu0 %v1007
      %1035 = vmatpush.bf16.msra.mxu0 %v1006
      %1036 = vmatpush.bf16.msra.mxu0 %v1005
      %1037 = vmatpush.bf16.msra.mxu0 %v1004
      %1038 = vmatpush.bf16.msra.mxu0 %v1003
      %1039 = vmatpush.bf16.msra.mxu0 %v1002
      %1040 = vmatpush.bf16.msra.mxu0 %v1001
      %1041 = vmatmul.bf16.gmra.mxu0 %v921
      %v1042 = vpop.f32.mrf.mxu0
      %v1043 = vadd.f32 0.0, %v1042
      %v1044 = vpop.f32.mrf.mxu0
      %v1045 = vadd.f32 0.0, %v1044
      %1046 = vmatmul.bf16.gmra.mxu0 %v923
      %v1047 = vpop.f32.mrf.mxu0
      %v1048 = vadd.f32 0.0, %v1047
      %v1049 = vpop.f32.mrf.mxu0
      %v1050 = vadd.f32 0.0, %v1049
      %1051 = vmatmul.bf16.gmra.mxu0 %v925
      %v1052 = vpop.f32.mrf.mxu0
      %v1053 = vadd.f32 0.0, %v1052
      %v1054 = vpop.f32.mrf.mxu0
      %v1055 = vadd.f32 0.0, %v1054
      %1056 = vmatmul.bf16.gmra.mxu0 %v927
      %v1057 = vpop.f32.mrf.mxu0
      %v1058 = vadd.f32 0.0, %v1057
      %v1059 = vpop.f32.mrf.mxu0
      %v1060 = vadd.f32 0.0, %v1059
      %1061 = vmatmul.bf16.gmra.mxu0 %v929
      %v1062 = vpop.f32.mrf.mxu0
      %v1063 = vadd.f32 0.0, %v1062
      %v1064 = vpop.f32.mrf.mxu0
      %v1065 = vadd.f32 0.0, %v1064
      %1066 = vmatmul.bf16.gmra.mxu0 %v931
      %v1067 = vpop.f32.mrf.mxu0
      %v1068 = vadd.f32 0.0, %v1067
      %v1069 = vpop.f32.mrf.mxu0
      %v1070 = vadd.f32 0.0, %v1069
      %1071 = vmatmul.bf16.gmra.mxu0 %v933
      %v1072 = vpop.f32.mrf.mxu0
      %v1073 = vadd.f32 0.0, %v1072
      %v1074 = vpop.f32.mrf.mxu0
      %v1075 = vadd.f32 0.0, %v1074
      %1076 = vmatmul.bf16.gmra.mxu0 %v935
      %v1077 = vpop.f32.mrf.mxu0
      %v1078 = vadd.f32 0.0, %v1077
      %v1079 = vpop.f32.mrf.mxu0
      %v1080 = vadd.f32 0.0, %v1079
      %1081 = vdwg.mxu0
      %1082 = vmatpush.bf16.msra.mxu0 %v1016
      %1083 = vmatpush.bf16.msra.mxu0 %v1015
      %1084 = vmatpush.bf16.msra.mxu0 %v1014
      %1085 = vmatpush.bf16.msra.mxu0 %v1013
      %1086 = vmatpush.bf16.msra.mxu0 %v1012
      %1087 = vmatpush.bf16.msra.mxu0 %v1011
      %1088 = vmatpush.bf16.msra.mxu0 %v1010
      %1089 = vmatpush.bf16.msra.mxu0 %v1009
      %1090 = vmatmul.bf16.gmra.mxu0 %v922
      %v1091 = vpop.f32.mrf.mxu0
      %v1092 = vadd.f32 %v1043, %v1091
      %v1093 = vpop.f32.mrf.mxu0
      %v1094 = vadd.f32 %v1045, %v1093
      %1095 = vmatmul.bf16.gmra.mxu0 %v924
      %v1096 = vpop.f32.mrf.mxu0
      %v1097 = vadd.f32 %v1048, %v1096
      %v1098 = vpop.f32.mrf.mxu0
      %v1099 = vadd.f32 %v1050, %v1098
      %1100 = vmatmul.bf16.gmra.mxu0 %v926
      %v1101 = vpop.f32.mrf.mxu0
      %v1102 = vadd.f32 %v1053, %v1101
      %v1103 = vpop.f32.mrf.mxu0
      %v1104 = vadd.f32 %v1055, %v1103
      %1105 = vmatmul.bf16.gmra.mxu0 %v928
      %v1106 = vpop.f32.mrf.mxu0
      %v1107 = vadd.f32 %v1058, %v1106
      %v1108 = vpop.f32.mrf.mxu0
      %v1109 = vadd.f32 %v1060, %v1108
      %1110 = vmatmul.bf16.gmra.mxu0 %v930
      %v1111 = vpop.f32.mrf.mxu0
      %v1112 = vadd.f32 %v1063, %v1111
      %v1113 = vpop.f32.mrf.mxu0
      %v1114 = vadd.f32 %v1065, %v1113
      %1115 = vmatmul.bf16.gmra.mxu0 %v932
      %v1116 = vpop.f32.mrf.mxu0
      %v1117 = vadd.f32 %v1068, %v1116
      %v1118 = vpop.f32.mrf.mxu0
      %v1119 = vadd.f32 %v1070, %v1118
      %1120 = vmatmul.bf16.gmra.mxu0 %v934
      %v1121 = vpop.f32.mrf.mxu0
      %v1122 = vadd.f32 %v1073, %v1121
      %v1123 = vpop.f32.mrf.mxu0
      %v1124 = vadd.f32 %v1075, %v1123
      %1125 = vmatmul.bf16.gmra.mxu0 %v936
      %v1126 = vpop.f32.mrf.mxu0
      %v1127 = vadd.f32 %v1078, %v1126
      %v1128 = vpop.f32.mrf.mxu0
      %v1129 = vadd.f32 %v1080, %v1128
      %1130 = vdwg.mxu0
      %v1131 = vmul.f32 %v1092, %v873
      %v1132 = vmul.f32 %v1094, %v874
      %v1133 = vmul.f32 %v1097, %v875
      %v1134 = vmul.f32 %v1099, %v876
      %v1135 = vmul.f32 %v1102, %v877
      %v1136 = vmul.f32 %v1104, %v878
      %v1137 = vmul.f32 %v1107, %v879
      %v1138 = vmul.f32 %v1109, %v880
      %v1139 = vmul.f32 %v1112, %v881
      %v1140 = vmul.f32 %v1114, %v882
      %v1141 = vmul.f32 %v1117, %v883
      %v1142 = vmul.f32 %v1119, %v884
      %v1143 = vmul.f32 %v1122, %v885
      %v1144 = vmul.f32 %v1124, %v886
      %v1145 = vmul.f32 %v1127, %v887
      %v1146 = vmul.f32 %v1129, %v888
      %v1147 = vld [vmem:[%s267] sm:$0xff]
      %v1148 = vld [vmem:[%s267 + $0x8] sm:$0xff]
      %v1149 = vld [vmem:[%s267 + $0x10] sm:$0xff]
      %v1150 = vld [vmem:[%s267 + $0x18] sm:$0xff]
      %v1151 = vld [vmem:[%s267 + $0x20] sm:$0xff]
      %v1152 = vld [vmem:[%s267 + $0x28] sm:$0xff]
      %v1153 = vld [vmem:[%s267 + $0x30] sm:$0xff]
      %v1154 = vld [vmem:[%s267 + $0x38] sm:$0xff]
      %v1155 = vld [vmem:[%s267 + $0x40] sm:$0xff]
      %v1156 = vld [vmem:[%s267 + $0x48] sm:$0xff]
      %v1157 = vld [vmem:[%s267 + $0x50] sm:$0xff]
      %v1158 = vld [vmem:[%s267 + $0x58] sm:$0xff]
      %v1159 = vld [vmem:[%s267 + $0x60] sm:$0xff]
      %v1160 = vld [vmem:[%s267 + $0x68] sm:$0xff]
      %v1161 = vld [vmem:[%s267 + $0x70] sm:$0xff]
      %v1162 = vld [vmem:[%s267 + $0x78] sm:$0xff]
      %v1163 = vadd.f32 %v1131, %v1147
      %v1164 = vadd.f32 %v1132, %v1148
      %v1165 = vadd.f32 %v1133, %v1149
      %v1166 = vadd.f32 %v1134, %v1150
      %v1167 = vadd.f32 %v1135, %v1151
      %v1168 = vadd.f32 %v1136, %v1152
      %v1169 = vadd.f32 %v1137, %v1153
      %v1170 = vadd.f32 %v1138, %v1154
      %v1171 = vadd.f32 %v1139, %v1155
      %v1172 = vadd.f32 %v1140, %v1156
      %v1173 = vadd.f32 %v1141, %v1157
      %v1174 = vadd.f32 %v1142, %v1158
      %v1175 = vadd.f32 %v1143, %v1159
      %v1176 = vadd.f32 %v1144, %v1160
      %v1177 = vadd.f32 %v1145, %v1161
      %v1178 = vadd.f32 %v1146, %v1162
      %vm1179 = vcmask 15360
      %1180 = vst.msk [vmem:[%s273] sm:$0xff] %vm1179, %v1163
      %1181 = vst.msk [vmem:[%s273 + $0x8] sm:$0xff] %vm1179, %v1164
      %1182 = vst.msk [vmem:[%s273 + $0x10] sm:$0xff] %vm1179, %v1165
      %1183 = vst.msk [vmem:[%s273 + $0x18] sm:$0xff] %vm1179, %v1166
      %1184 = vst.msk [vmem:[%s273 + $0x20] sm:$0xff] %vm1179, %v1167
      %1185 = vst.msk [vmem:[%s273 + $0x28] sm:$0xff] %vm1179, %v1168
      %1186 = vst.msk [vmem:[%s273 + $0x30] sm:$0xff] %vm1179, %v1169
      %1187 = vst.msk [vmem:[%s273 + $0x38] sm:$0xff] %vm1179, %v1170
      %1188 = vst.msk [vmem:[%s273 + $0x40] sm:$0xff] %vm1179, %v1171
      %1189 = vst.msk [vmem:[%s273 + $0x48] sm:$0xff] %vm1179, %v1172
      %1190 = vst.msk [vmem:[%s273 + $0x50] sm:$0xff] %vm1179, %v1173
      %1191 = vst.msk [vmem:[%s273 + $0x58] sm:$0xff] %vm1179, %v1174
      %1192 = vst.msk [vmem:[%s273 + $0x60] sm:$0xff] %vm1179, %v1175
      %1193 = vst.msk [vmem:[%s273 + $0x68] sm:$0xff] %vm1179, %v1176
      %1194 = vst.msk [vmem:[%s273 + $0x70] sm:$0xff] %vm1179, %v1177
      %1195 = vst.msk [vmem:[%s273 + $0x78] sm:$0xff] %vm1179, %v1178
      %s1196 = smul.u32 16, %s16
      %p1197 = scmp.lt.s32.totalorder %s1196, 31
      %s1198 = scalar_select %p1197, %s1196, 31
      %s1199 = smul.addr %s1198, 8
      %s1200 = scalar_lea.vmem %s5, %s1199
      // Predicated region
      $region41: #{gat_forward.3} parent=39 // pred_check
        %p1201 = pneg %p154
      $region42: #{gat_forward.3} parent=39 // pred_check_branch
        %1203 = sbr.rel (%p1201) target = $region44
      $region43: #{gat_forward.3} parent=39 // pred_region
        %s1204 = smul.u32 16, %s16
      $region44: #{gat_forward.3} parent=39 // pred_fallthru
        _
    $region40: #{gat_forward.3} parent=5 // pred_fallthru
      _
    %p1205 = scmp.le.s32.totalorder 2, %s11
    // Predicated region
    $region45: #{gat_forward.3} parent=5 // pred_check
      %p1206 = pneg %p1205
    $region46: #{gat_forward.3} parent=5 // pred_check_branch
      %1208 = sbr.rel (%p1206) target = $region48
    $region47: #{gat_forward.3} parent=5 // pred_region
      %s1209 = ssub.s32 %s11, 2
      // Predicated region
      $region49: #{gat_forward.3} parent=47 // pred_check
        %p1210 = pneg %p160
      $region50: #{gat_forward.3} parent=47 // pred_check_branch
        %1212 = sbr.rel (%p1210) target = $region52
      $region51: #{gat_forward.3} parent=47 // pred_region
        %s1213 = smul.u32 16, %s17
        %p1214 = scmp.lt.s32.totalorder %s1213, 31
        %s1215 = scalar_select %p1214, %s1213, 31
        %s1216 = smul.addr %s1215, 8
        %s1217 = scalar_lea.vmem %s5, %s1216
      $region52: #{gat_forward.3} parent=47 // pred_fallthru
        _
    $region48: #{gat_forward.3} parent=5 // pred_fallthru
      _
  $region6: #{gat_forward.3} parent=0 // loop_footer
    %s15 = sadd.s32 1, %s11
  $region7: #{gat_forward.3} parent=0 // loop_footer_branch
    %10 = sbr.rel target = $region3
  $region8: #{gat_forward.3} parent=0 // loop_exit
    _

// kernel: gat_forward.2
$region0: #{gat_forward.2}
  #allocation0 [shape = 'u32[]', space=smem, size = 0x4, offset = 0x4, fixed_abs, tag = 'smem constant byte address 0x4 - core index']
  #allocation1 [shape = 'u32[72,128]{1,0:T(1,128)}', space=vmem, size = 0x9000, scoped, tag = 'internal scratch']
  %s0 = inlined_call_operand.vmem [shape: bf16[256,256], index: 0, kind: input, shape index: {}]
  %s1 = inlined_call_operand.vmem [shape: bf16[256,16], index: 1, kind: input, shape index: {}]
  %s2 = inlined_call_operand.vmem [shape: f32[2,256], index: 2, kind: input, shape index: {}]
  %s3 = inlined_call_operand.vmem [shape: f32[256,2], index: 3, kind: input, shape index: {}]
  %s4 = inlined_call_operand.vmem [shape: f32[256,16], index: 4, kind: output, shape index: {}]
  %s5 = sld [smem:[#allocation0]]
  $region49: #{gat_forward.2} parent=0
    _
  %s7 = ssub.s32 1, %s5
  %s8 = scalar_select 0, %s7, %s5
  loop: start=0, step=1, limit=4
  $region2: #{gat_forward.2} parent=0 // loop_pre_header
    _
  $region3: #{gat_forward.2} parent=0 // loop_header
    %s10 = sphi 0, %s14
    %p11 = scmp.ge.s32.totalorder %s10, 4
    %s20 = sphi 0, %s22
    %s23 = sphi 0, %s20
    %s24 = sphi 0, %s23
    %s40 = sphi 0, %s24
    %s44 = sphi 0, %s44
    %s46 = sphi 0, %s44
    %s47 = sphi 0, %s46
    %s61 = sphi 0, %s47
    %s65 = sphi 0, %s65
    %s67 = sphi 0, %s65
    %s68 = sphi 0, %s67
    %s82 = sphi 0, %s68
    %s88 = sphi 0, %s90
    %s91 = sphi 0, %s88
    %s92 = sphi 0, %s91
    %s108 = sphi 0, %s92
    %s114 = sphi 0, %s116
    %s117 = sphi 0, %s114
    %s118 = sphi 0, %s117
    %s134 = sphi 0, %s118
  $region4: #{gat_forward.2} parent=0 // loop_header_branch
    %13 = sbr.rel (%p11) target = $region8
  $region5: #{gat_forward.2} parent=0 // loop_body
    %s15 = ssub.s32 %s10, 1
    %s16 = ssub.s32 %s10, 2
    %s17 = sadd.s32 %s10, 1
    %s18 = ssub.s32 %s10, %s17
    %p19 = scmp.eq.s32.totalorder %s18, 0
    %s21 = sadd.s32 %s20, 1
    %s22 = scalar_select %p19, %s20, %s21
    %p25 = pneg %p19
    %p26 = scmp.eq.s32.totalorder %s10, 1
    %p27 = por %p25, %p26
    %p28 = scmp.ne.s32.totalorder %s20, %s23
    %p29 = scmp.eq.s32.totalorder %s10, 0
    %p30 = por %p28, %p29
    %p31 = scmp.ne.s32.totalorder %s20, %s23
    %p32 = scmp.eq.s32.totalorder %s15, 1
    %p33 = por %p31, %p32
    %p34 = scmp.ne.s32.totalorder %s23, %s24
    %p35 = scmp.eq.s32.totalorder %s15, 0
    %p36 = por %p34, %p35
    %p37 = scmp.ne.s32.totalorder %s23, %s24
    %p38 = scmp.eq.s32.totalorder %s16, 1
    %p39 = por %p37, %p38
    %p41 = scmp.ne.s32.totalorder %s24, %s40
    %p42 = scmp.eq.s32.totalorder %s16, 0
    %p43 = por %p41, %p42
    %s45 = sadd.s32 %s44, 1
    %p48 = scmp.eq.s32.totalorder %s10, 1
    %p49 = scmp.ne.s32.totalorder %s44, %s46
    %p50 = scmp.eq.s32.totalorder %s10, 0
    %p51 = por %p49, %p50
    %p52 = scmp.ne.s32.totalorder %s44, %s46
    %p53 = scmp.eq.s32.totalorder %s15, 1
    %p54 = por %p52, %p53
    %p55 = scmp.ne.s32.totalorder %s46, %s47
    %p56 = scmp.eq.s32.totalorder %s15, 0
    %p57 = por %p55, %p56
    %p58 = scmp.ne.s32.totalorder %s46, %s47
    %p59 = scmp.eq.s32.totalorder %s16, 1
    %p60 = por %p58, %p59
    %p62 = scmp.ne.s32.totalorder %s47, %s61
    %p63 = scmp.eq.s32.totalorder %s16, 0
    %p64 = por %p62, %p63
    %s66 = sadd.s32 %s65, 1
    %p69 = scmp.eq.s32.totalorder %s10, 1
    %p70 = scmp.ne.s32.totalorder %s65, %s67
    %p71 = scmp.eq.s32.totalorder %s10, 0
    %p72 = por %p70, %p71
    %p73 = scmp.ne.s32.totalorder %s65, %s67
    %p74 = scmp.eq.s32.totalorder %s15, 1
    %p75 = por %p73, %p74
    %p76 = scmp.ne.s32.totalorder %s67, %s68
    %p77 = scmp.eq.s32.totalorder %s15, 0
    %p78 = por %p76, %p77
    %p79 = scmp.ne.s32.totalorder %s67, %s68
    %p80 = scmp.eq.s32.totalorder %s16, 1
    %p81 = por %p79, %p80
    %p83 = scmp.ne.s32.totalorder %s68, %s82
    %p84 = scmp.eq.s32.totalorder %s16, 0
    %p85 = por %p83, %p84
    %s86 = ssub.s32 %s10, %s17
    %p87 = scmp.eq.s32.totalorder %s86, 0
    %s89 = sadd.s32 %s88, 1
    %s90 = scalar_select %p87, %s88, %s89
    %p93 = pneg %p87
    %p94 = scmp.eq.s32.totalorder %s10, 1
    %p95 = por %p93, %p94
    %p96 = scmp.ne.s32.totalorder %s88, %s91
    %p97 = scmp.eq.s32.totalorder %s10, 0
    %p98 = por %p96, %p97
    %p99 = scmp.ne.s32.totalorder %s88, %s91
    %p100 = scmp.eq.s32.totalorder %s15, 1
    %p101 = por %p99, %p100
    %p102 = scmp.ne.s32.totalorder %s91, %s92
    %p103 = scmp.eq.s32.totalorder %s15, 0
    %p104 = por %p102, %p103
    %p105 = scmp.ne.s32.totalorder %s91, %s92
    %p106 = scmp.eq.s32.totalorder %s16, 1
    %p107 = por %p105, %p106
    %p109 = scmp.ne.s32.totalorder %s92, %s108
    %p110 = scmp.eq.s32.totalorder %s16, 0
    %p111 = por %p109, %p110
    %s112 = ssub.s32 %s10, %s17
    %p113 = scmp.eq.s32.totalorder %s112, 0
    %s115 = sadd.s32 %s114, 1
    %s116 = scalar_select %p113, %s114, %s115
    %p119 = pneg %p113
    %p120 = scmp.eq.s32.totalorder %s10, 1
    %p121 = por %p119, %p120
    %p122 = scmp.ne.s32.totalorder %s114, %s117
    %p123 = scmp.eq.s32.totalorder %s10, 0
    %p124 = por %p122, %p123
    %p125 = scmp.ne.s32.totalorder %s114, %s117
    %p126 = scmp.eq.s32.totalorder %s15, 1
    %p127 = por %p125, %p126
    %p128 = scmp.ne.s32.totalorder %s117, %s118
    %p129 = scmp.eq.s32.totalorder %s15, 0
    %p130 = por %p128, %p129
    %p131 = scmp.ne.s32.totalorder %s117, %s118
    %p132 = scmp.eq.s32.totalorder %s16, 1
    %p133 = por %p131, %p132
    %p135 = scmp.ne.s32.totalorder %s118, %s134
    %p136 = scmp.eq.s32.totalorder %s16, 0
    %p137 = por %p135, %p136
    %p138 = scmp.le.s32.totalorder 1, %s10
    %p139 = scmp.lt.s32.totalorder %s10, 3
    %p140 = pnand %p138, %p139
    %p141 = pneg %p140
    // Predicated region
    $region9: #{gat_forward.2} parent=5 // pred_check
      _
    $region10: #{gat_forward.2} parent=5 // pred_check_branch
      %143 = sbr.rel (%p140) target = $region12
    $region11: #{gat_forward.2} parent=5 // pred_region
      %s144 = ssub.s32 %s10, 1
      // Predicated region
      $region13: #{gat_forward.2} parent=11 // pred_check
        %p145 = pneg %p57
      $region14: #{gat_forward.2} parent=11 // pred_check_branch
        %147 = sbr.rel (%p145) target = $region16
      $region15: #{gat_forward.2} parent=11 // pred_region
        _
      $region16: #{gat_forward.2} parent=11 // pred_fallthru
        _
      // Predicated region
      $region17: #{gat_forward.2} parent=11 // pred_check
        %p148 = pneg %p78
      $region18: #{gat_forward.2} parent=11 // pred_check_branch
        %150 = sbr.rel (%p148) target = $region20
      $region19: #{gat_forward.2} parent=11 // pred_region
        _
      $region20: #{gat_forward.2} parent=11 // pred_fallthru
        _
    $region12: #{gat_forward.2} parent=5 // pred_fallthru
      _
    %p151 = scmp.lt.s32.totalorder %s10, 2
    // Predicated region
    $region21: #{gat_forward.2} parent=5 // pred_check
      %p152 = pneg %p151
    $region22: #{gat_forward.2} parent=5 // pred_check_branch
      %154 = sbr.rel (%p152) target = $region24
    $region23: #{gat_forward.2} parent=5 // pred_region
      // Predicated region
      $region25: #{gat_forward.2} parent=23 // pred_check
        %p155 = pneg %p30
      $region26: #{gat_forward.2} parent=23 // pred_check_branch
        %157 = sbr.rel (%p155) target = $region28
      $region27: #{gat_forward.2} parent=23 // pred_region
        %s158 = smul.u32 16, %s10
        %p159 = scmp.lt.s32.totalorder %s158, 31
        %s160 = scalar_select %p159, %s158, 31
        %s161 = smul.addr %s160, 2
        %s162 = smul.addr %s161, 4
        %s163 = scalar_lea.vmem %s0, %s162
        %s164 = smul.u32 16, %s10
      $region28: #{gat_forward.2} parent=23 // pred_fallthru
        _
      // Predicated region
      $region29: #{gat_forward.2} parent=23 // pred_check
        %p165 = pneg %p98
      $region30: #{gat_forward.2} parent=23 // pred_check_branch
        %167 = sbr.rel (%p165) target = $region32
      $region31: #{gat_forward.2} parent=23 // pred_region
        %s168 = smul.u32 16, %s10
        %p169 = scmp.lt.s32.totalorder %s168, 31
        %s170 = scalar_select %p169, %s168, 31
        %s171 = smul.addr %s170, 8
        %s172 = scalar_lea.vmem %s3, %s171
        %s173 = smul.u32 16, %s10
      $region32: #{gat_forward.2} parent=23 // pred_fallthru
        _
    $region24: #{gat_forward.2} parent=5 // pred_fallthru
      _
    %p174 = scmp.le.s32.totalorder 1, %s10
    %p175 = scmp.lt.s32.totalorder %s10, 3
    %p176 = pnand %p174, %p175
    %p177 = pneg %p176
    // Predicated region
    $region33: #{gat_forward.2} parent=5 // pred_check
      _
    $region34: #{gat_forward.2} parent=5 // pred_check_branch
      %179 = sbr.rel (%p176) target = $region36
    $region35: #{gat_forward.2} parent=5 // pred_region
      %s180 = ssub.s32 %s10, 1
      %s181 = smul.u32 16, %s15
      %p182 = scmp.lt.s32.totalorder %s181, 31
      %s183 = scalar_select %p182, %s181, 31
      %s184 = smul.addr %s183, 2
      %s185 = smul.addr %s184, 4
      %s186 = scalar_lea.vmem %s0, %s185
      %p187 = pneg %p36
      %p188 = pneg %p33
      %p189 = pneg %p57
      %p190 = pneg %p54
      %p191 = pneg %p78
      %p192 = pneg %p75
      %s193 = smul.u32 16, %s15
      %p194 = scmp.lt.s32.totalorder %s193, 31
      %s195 = scalar_select %p194, %s193, 31
      %s196 = smul.addr %s195, 8
      %s197 = scalar_lea.vmem %s3, %s196
      %p198 = pneg %p104
      %p199 = pneg %p101
      %p200 = pneg %p130
      %p201 = pneg %p127
      %s202 = smul.u32 16, %s15
      %p203 = scmp.lt.s32.totalorder %s202, 31
      %s204 = scalar_select %p203, %s202, 31
      %s205 = smul.addr %s204, 8
      %s206 = scalar_lea.vmem %s4, %s205
      %s207 = smul.u32 16, %s15
      %p208 = scmp.lt.s32.totalorder %s207, 31
      %s209 = scalar_select %p208, %s207, 31
      %s210 = smul.addr %s209, 2
      %s211 = smul.addr %s210, 4
      %s212 = scalar_lea.vmem %s0, %s211
      %s213 = smul.u32 16, %s15
      %s214 = smul.u32 16, %s15
      %p215 = scmp.lt.s32.totalorder %s214, 31
      %s216 = scalar_select %p215, %s214, 31
      %s217 = smul.addr %s216, 8
      %s218 = scalar_lea.vmem %s3, %s217
      %s219 = smul.u32 16, %s15
      %s220 = smul.u32 16, %s15
      %p221 = scmp.lt.s32.totalorder %s220, 31
      %s222 = scalar_select %p221, %s220, 31
      %s223 = smul.addr %s222, 8
      %s224 = scalar_lea.vmem %s4, %s223
      %s225 = smul.u32 16, %s15
      %v226 = vld [vmem:[%s212] sm:$0xff]
      %v227 = vld [vmem:[%s212 + $0x8] sm:$0xff]
      %v228 = vld [vmem:[%s212 + $0x10] sm:$0xff]
      %v229 = vld [vmem:[%s212 + $0x18] sm:$0xff]
      %v230 = vld [vmem:[%s212 + $0x20] sm:$0xff]
      %v231 = vld [vmem:[%s212 + $0x28] sm:$0xff]
      %v232 = vld [vmem:[%s212 + $0x30] sm:$0xff]
      %v233 = vld [vmem:[%s212 + $0x38] sm:$0xff]
      %v234 = vld [vmem:[%s212 + $0x40] sm:$0xff]
      %v235 = vld [vmem:[%s212 + $0x48] sm:$0xff]
      %v236 = vld [vmem:[%s212 + $0x50] sm:$0xff]
      %v237 = vld [vmem:[%s212 + $0x58] sm:$0xff]
      %v238 = vld [vmem:[%s212 + $0x60] sm:$0xff]
      %v239 = vld [vmem:[%s212 + $0x68] sm:$0xff]
      %v240 = vld [vmem:[%s212 + $0x70] sm:$0xff]
      %v241 = vld [vmem:[%s212 + $0x78] sm:$0xff]
      %v242 = vunpack.c.l.bf16 %v226
      %v243 = vunpack.c.h.bf16 %v226
      %v244 = vunpack.c.l.bf16 %v227
      %v245 = vunpack.c.h.bf16 %v227
      %v246 = vunpack.c.l.bf16 %v228
      %v247 = vunpack.c.h.bf16 %v228
      %v248 = vunpack.c.l.bf16 %v229
      %v249 = vunpack.c.h.bf16 %v229
      %v250 = vunpack.c.l.bf16 %v230
      %v251 = vunpack.c.h.bf16 %v230
      %v252 = vunpack.c.l.bf16 %v231
      %v253 = vunpack.c.h.bf16 %v231
      %v254 = vunpack.c.l.bf16 %v232
      %v255 = vunpack.c.h.bf16 %v232
      %v256 = vunpack.c.l.bf16 %v233
      %v257 = vunpack.c.h.bf16 %v233
      %v258 = vunpack.c.l.bf16 %v234
      %v259 = vunpack.c.h.bf16 %v234
      %v260 = vunpack.c.l.bf16 %v235
      %v261 = vunpack.c.h.bf16 %v235
      %v262 = vunpack.c.l.bf16 %v236
      %v263 = vunpack.c.h.bf16 %v236
      %v264 = vunpack.c.l.bf16 %v237
      %v265 = vunpack.c.h.bf16 %v237
      %v266 = vunpack.c.l.bf16 %v238
      %v267 = vunpack.c.h.bf16 %v238
      %v268 = vunpack.c.l.bf16 %v239
      %v269 = vunpack.c.h.bf16 %v239
      %v270 = vunpack.c.l.bf16 %v240
      %v271 = vunpack.c.h.bf16 %v240
      %v272 = vunpack.c.l.bf16 %v241
      %v273 = vunpack.c.h.bf16 %v241
      %vm274 = vcmp.eq.f32.partialorder %v242, 0.0
      %vm275 = vcmp.eq.f32.partialorder %v243, 0.0
      %vm276 = vcmp.eq.f32.partialorder %v244, 0.0
      %vm277 = vcmp.eq.f32.partialorder %v245, 0.0
      %vm278 = vcmp.eq.f32.partialorder %v246, 0.0
      %vm279 = vcmp.eq.f32.partialorder %v247, 0.0
      %vm280 = vcmp.eq.f32.partialorder %v248, 0.0
      %vm281 = vcmp.eq.f32.partialorder %v249, 0.0
      %vm282 = vcmp.eq.f32.partialorder %v250, 0.0
      %vm283 = vcmp.eq.f32.partialorder %v251, 0.0
      %vm284 = vcmp.eq.f32.partialorder %v252, 0.0
      %vm285 = vcmp.eq.f32.partialorder %v253, 0.0
      %vm286 = vcmp.eq.f32.partialorder %v254, 0.0
      %vm287 = vcmp.eq.f32.partialorder %v255, 0.0
      %vm288 = vcmp.eq.f32.partialorder %v256, 0.0
      %vm289 = vcmp.eq.f32.partialorder %v257, 0.0
      %vm290 = vcmp.eq.f32.partialorder %v258, 0.0
      %vm291 = vcmp.eq.f32.partialorder %v259, 0.0
      %vm292 = vcmp.eq.f32.partialorder %v260, 0.0
      %vm293 = vcmp.eq.f32.partialorder %v261, 0.0
      %vm294 = vcmp.eq.f32.partialorder %v262, 0.0
      %vm295 = vcmp.eq.f32.partialorder %v263, 0.0
      %vm296 = vcmp.eq.f32.partialorder %v264, 0.0
      %vm297 = vcmp.eq.f32.partialorder %v265, 0.0
      %vm298 = vcmp.eq.f32.partialorder %v266, 0.0
      %vm299 = vcmp.eq.f32.partialorder %v267, 0.0
      %vm300 = vcmp.eq.f32.partialorder %v268, 0.0
      %vm301 = vcmp.eq.f32.partialorder %v269, 0.0
      %vm302 = vcmp.eq.f32.partialorder %v270, 0.0
      %vm303 = vcmp.eq.f32.partialorder %v271, 0.0
      %vm304 = vcmp.eq.f32.partialorder %v272, 0.0
      %vm305 = vcmp.eq.f32.partialorder %v273, 0.0
      %v306 = vld [vmem:[%s218] sm:$0xff]
      %v307 = vld [vmem:[%s218 + $0x8] sm:$0xff]
      %v308 = vld [vmem:[%s218 + $0x10] sm:$0xff]
      %v309 = vld [vmem:[%s218 + $0x18] sm:$0xff]
      %v310 = vld [vmem:[%s218 + $0x20] sm:$0xff]
      %v311 = vld [vmem:[%s218 + $0x28] sm:$0xff]
      %v312 = vld [vmem:[%s218 + $0x30] sm:$0xff]
      %v313 = vld [vmem:[%s218 + $0x38] sm:$0xff]
      %v314 = vld [vmem:[%s218 + $0x40] sm:$0xff]
      %v315 = vld [vmem:[%s218 + $0x48] sm:$0xff]
      %v316 = vld [vmem:[%s218 + $0x50] sm:$0xff]
      %v317 = vld [vmem:[%s218 + $0x58] sm:$0xff]
      %v318 = vld [vmem:[%s218 + $0x60] sm:$0xff]
      %v319 = vld [vmem:[%s218 + $0x68] sm:$0xff]
      %v320 = vld [vmem:[%s218 + $0x70] sm:$0xff]
      %v321 = vld [vmem:[%s218 + $0x78] sm:$0xff]
      %v322 = vld [vmem:[%s2] ss:$2 sm:$0x3]
      %324 = vset.pattern.permute.xlu0 0
      %325 = vperm.xlu0 %324, %v306
      %v326 = vpop.permute.xlu0 %325
      %329 = vset.pattern.permute.xlu0 0
      %330 = vperm.xlu0 %329, %v307
      %v331 = vpop.permute.xlu0 %330
      %334 = vset.pattern.permute.xlu0 0
      %335 = vperm.xlu0 %334, %v308
      %v336 = vpop.permute.xlu0 %335
      %339 = vset.pattern.permute.xlu0 0
      %340 = vperm.xlu0 %339, %v309
      %v341 = vpop.permute.xlu0 %340
      %344 = vset.pattern.permute.xlu0 0
      %345 = vperm.xlu0 %344, %v310
      %v346 = vpop.permute.xlu0 %345
      %349 = vset.pattern.permute.xlu0 0
      %350 = vperm.xlu0 %349, %v311
      %v351 = vpop.permute.xlu0 %350
      %354 = vset.pattern.permute.xlu0 0
      %355 = vperm.xlu0 %354, %v312
      %v356 = vpop.permute.xlu0 %355
      %359 = vset.pattern.permute.xlu0 0
      %360 = vperm.xlu0 %359, %v313
      %v361 = vpop.permute.xlu0 %360
      %364 = vset.pattern.permute.xlu0 0
      %365 = vperm.xlu0 %364, %v314
      %v366 = vpop.permute.xlu0 %365
      %369 = vset.pattern.permute.xlu0 0
      %370 = vperm.xlu0 %369, %v315
      %v371 = vpop.permute.xlu0 %370
      %374 = vset.pattern.permute.xlu0 0
      %375 = vperm.xlu0 %374, %v316
      %v376 = vpop.permute.xlu0 %375
      %379 = vset.pattern.permute.xlu0 0
      %380 = vperm.xlu0 %379, %v317
      %v381 = vpop.permute.xlu0 %380
      %384 = vset.pattern.permute.xlu0 0
      %385 = vperm.xlu0 %384, %v318
      %v386 = vpop.permute.xlu0 %385
      %389 = vset.pattern.permute.xlu0 0
      %390 = vperm.xlu0 %389, %v319
      %v391 = vpop.permute.xlu0 %390
      %394 = vset.pattern.permute.xlu0 0
      %395 = vperm.xlu0 %394, %v320
      %v396 = vpop.permute.xlu0 %395
      %399 = vset.pattern.permute.xlu0 0
      %400 = vperm.xlu0 %399, %v321
      %v401 = vpop.permute.xlu0 %400
      %v404 = vperm.slane %v322, 0
      %v405 = vperm.slane %v322, 1
      %v408 = vadd.f32 %v326, %v404
      %v409 = vadd.f32 %v326, %v405
      %v410 = vadd.f32 %v331, %v404
      %v411 = vadd.f32 %v331, %v405
      %v412 = vadd.f32 %v336, %v404
      %v413 = vadd.f32 %v336, %v405
      %v414 = vadd.f32 %v341, %v404
      %v415 = vadd.f32 %v341, %v405
      %v416 = vadd.f32 %v346, %v404
      %v417 = vadd.f32 %v346, %v405
      %v418 = vadd.f32 %v351, %v404
      %v419 = vadd.f32 %v351, %v405
      %v420 = vadd.f32 %v356, %v404
      %v421 = vadd.f32 %v356, %v405
      %v422 = vadd.f32 %v361, %v404
      %v423 = vadd.f32 %v361, %v405
      %v424 = vadd.f32 %v366, %v404
      %v425 = vadd.f32 %v366, %v405
      %v426 = vadd.f32 %v371, %v404
      %v427 = vadd.f32 %v371, %v405
      %v428 = vadd.f32 %v376, %v404
      %v429 = vadd.f32 %v376, %v405
      %v430 = vadd.f32 %v381, %v404
      %v431 = vadd.f32 %v381, %v405
      %v432 = vadd.f32 %v386, %v404
      %v433 = vadd.f32 %v386, %v405
      %v434 = vadd.f32 %v391, %v404
      %v435 = vadd.f32 %v391, %v405
      %v436 = vadd.f32 %v396, %v404
      %v437 = vadd.f32 %v396, %v405
      %v438 = vadd.f32 %v401, %v404
      %v439 = vadd.f32 %v401, %v405
      %vm440 = vcmp.gt.f32.partialorder %v408, 0.0
      %vm441 = vcmp.gt.f32.partialorder %v409, 0.0
      %vm442 = vcmp.gt.f32.partialorder %v410, 0.0
      %vm443 = vcmp.gt.f32.partialorder %v411, 0.0
      %vm444 = vcmp.gt.f32.partialorder %v412, 0.0
      %vm445 = vcmp.gt.f32.partialorder %v413, 0.0
      %vm446 = vcmp.gt.f32.partialorder %v414, 0.0
      %vm447 = vcmp.gt.f32.partialorder %v415, 0.0
      %vm448 = vcmp.gt.f32.partialorder %v416, 0.0
      %vm449 = vcmp.gt.f32.partialorder %v417, 0.0
      %vm450 = vcmp.gt.f32.partialorder %v418, 0.0
      %vm451 = vcmp.gt.f32.partialorder %v419, 0.0
      %vm452 = vcmp.gt.f32.partialorder %v420, 0.0
      %vm453 = vcmp.gt.f32.partialorder %v421, 0.0
      %vm454 = vcmp.gt.f32.partialorder %v422, 0.0
      %vm455 = vcmp.gt.f32.partialorder %v423, 0.0
      %vm456 = vcmp.gt.f32.partialorder %v424, 0.0
      %vm457 = vcmp.gt.f32.partialorder %v425, 0.0
      %vm458 = vcmp.gt.f32.partialorder %v426, 0.0
      %vm459 = vcmp.gt.f32.partialorder %v427, 0.0
      %vm460 = vcmp.gt.f32.partialorder %v428, 0.0
      %vm461 = vcmp.gt.f32.partialorder %v429, 0.0
      %vm462 = vcmp.gt.f32.partialorder %v430, 0.0
      %vm463 = vcmp.gt.f32.partialorder %v431, 0.0
      %vm464 = vcmp.gt.f32.partialorder %v432, 0.0
      %vm465 = vcmp.gt.f32.partialorder %v433, 0.0
      %vm466 = vcmp.gt.f32.partialorder %v434, 0.0
      %vm467 = vcmp.gt.f32.partialorder %v435, 0.0
      %vm468 = vcmp.gt.f32.partialorder %v436, 0.0
      %vm469 = vcmp.gt.f32.partialorder %v437, 0.0
      %vm470 = vcmp.gt.f32.partialorder %v438, 0.0
      %vm471 = vcmp.gt.f32.partialorder %v439, 0.0
      %v472 = vmul.f32 %v408, 0.2
      %v473 = vmul.f32 %v409, 0.2
      %v474 = vmul.f32 %v410, 0.2
      %v475 = vmul.f32 %v411, 0.2
      %v476 = vmul.f32 %v412, 0.2
      %v477 = vmul.f32 %v413, 0.2
      %v478 = vmul.f32 %v414, 0.2
      %v479 = vmul.f32 %v415, 0.2
      %v480 = vmul.f32 %v416, 0.2
      %v481 = vmul.f32 %v417, 0.2
      %v482 = vmul.f32 %v418, 0.2
      %v483 = vmul.f32 %v419, 0.2
      %v484 = vmul.f32 %v420, 0.2
      %v485 = vmul.f32 %v421, 0.2
      %v486 = vmul.f32 %v422, 0.2
      %v487 = vmul.f32 %v423, 0.2
      %v488 = vmul.f32 %v424, 0.2
      %v489 = vmul.f32 %v425, 0.2
      %v490 = vmul.f32 %v426, 0.2
      %v491 = vmul.f32 %v427, 0.2
      %v492 = vmul.f32 %v428, 0.2
      %v493 = vmul.f32 %v429, 0.2
      %v494 = vmul.f32 %v430, 0.2
      %v495 = vmul.f32 %v431, 0.2
      %v496 = vmul.f32 %v432, 0.2
      %v497 = vmul.f32 %v433, 0.2
      %v498 = vmul.f32 %v434, 0.2
      %v499 = vmul.f32 %v435, 0.2
      %v500 = vmul.f32 %v436, 0.2
      %v501 = vmul.f32 %v437, 0.2
      %v502 = vmul.f32 %v438, 0.2
      %v503 = vmul.f32 %v439, 0.2
      %v504 = vsel %vm440, %v408, %v472
      %v505 = vsel %vm441, %v409, %v473
      %v506 = vsel %vm442, %v410, %v474
      %v507 = vsel %vm443, %v411, %v475
      %v508 = vsel %vm444, %v412, %v476
      %v509 = vsel %vm445, %v413, %v477
      %v510 = vsel %vm446, %v414, %v478
      %v511 = vsel %vm447, %v415, %v479
      %v512 = vsel %vm448, %v416, %v480
      %v513 = vsel %vm449, %v417, %v481
      %v514 = vsel %vm450, %v418, %v482
      %v515 = vsel %vm451, %v419, %v483
      %v516 = vsel %vm452, %v420, %v484
      %v517 = vsel %vm453, %v421, %v485
      %v518 = vsel %vm454, %v422, %v486
      %v519 = vsel %vm455, %v423, %v487
      %v520 = vsel %vm456, %v424, %v488
      %v521 = vsel %vm457, %v425, %v489
      %v522 = vsel %vm458, %v426, %v490
      %v523 = vsel %vm459, %v427, %v491
      %v524 = vsel %vm460, %v428, %v492
      %v525 = vsel %vm461, %v429, %v493
      %v526 = vsel %vm462, %v430, %v494
      %v527 = vsel %vm463, %v431, %v495
      %v528 = vsel %vm464, %v432, %v496
      %v529 = vsel %vm465, %v433, %v497
      %v530 = vsel %vm466, %v434, %v498
      %v531 = vsel %vm467, %v435, %v499
      %v532 = vsel %vm468, %v436, %v500
      %v533 = vsel %vm469, %v437, %v501
      %v534 = vsel %vm470, %v438, %v502
      %v535 = vsel %vm471, %v439, %v503
      %v536 = vsel %vm274, -1e+30, %v504
      %v537 = vsel %vm275, -1e+30, %v505
      %v538 = vsel %vm276, -1e+30, %v506
      %v539 = vsel %vm277, -1e+30, %v507
      %v540 = vsel %vm278, -1e+30, %v508
      %v541 = vsel %vm279, -1e+30, %v509
      %v542 = vsel %vm280, -1e+30, %v510
      %v543 = vsel %vm281, -1e+30, %v511
      %v544 = vsel %vm282, -1e+30, %v512
      %v545 = vsel %vm283, -1e+30, %v513
      %v546 = vsel %vm284, -1e+30, %v514
      %v547 = vsel %vm285, -1e+30, %v515
      %v548 = vsel %vm286, -1e+30, %v516
      %v549 = vsel %vm287, -1e+30, %v517
      %v550 = vsel %vm288, -1e+30, %v518
      %v551 = vsel %vm289, -1e+30, %v519
      %v552 = vsel %vm290, -1e+30, %v520
      %v553 = vsel %vm291, -1e+30, %v521
      %v554 = vsel %vm292, -1e+30, %v522
      %v555 = vsel %vm293, -1e+30, %v523
      %v556 = vsel %vm294, -1e+30, %v524
      %v557 = vsel %vm295, -1e+30, %v525
      %v558 = vsel %vm296, -1e+30, %v526
      %v559 = vsel %vm297, -1e+30, %v527
      %v560 = vsel %vm298, -1e+30, %v528
      %v561 = vsel %vm299, -1e+30, %v529
      %v562 = vsel %vm300, -1e+30, %v530
      %v563 = vsel %vm301, -1e+30, %v531
      %v564 = vsel %vm302, -1e+30, %v532
      %v565 = vsel %vm303, -1e+30, %v533
      %v566 = vsel %vm304, -1e+30, %v534
      %v567 = vsel %vm305, -1e+30, %v535
      %v568 = vmax.f32 %v536, %v537
      %569 = vmax.xlane.f32.xlu0 %v568
      %v570 = vpop.xlane.xlu0 %569
      %v571 = vmax.f32 %v538, %v539
      %572 = vmax.xlane.f32.xlu0 %v571
      %v573 = vpop.xlane.xlu0 %572
      %v574 = vmax.f32 %v540, %v541
      %575 = vmax.xlane.f32.xlu0 %v574
      %v576 = vpop.xlane.xlu0 %575
      %v577 = vmax.f32 %v542, %v543
      %578 = vmax.xlane.f32.xlu0 %v577
      %v579 = vpop.xlane.xlu0 %578
      %v580 = vmax.f32 %v544, %v545
      %581 = vmax.xlane.f32.xlu0 %v580
      %v582 = vpop.xlane.xlu0 %581
      %v583 = vmax.f32 %v546, %v547
      %584 = vmax.xlane.f32.xlu0 %v583
      %v585 = vpop.xlane.xlu0 %584
      %v586 = vmax.f32 %v548, %v549
      %587 = vmax.xlane.f32.xlu0 %v586
      %v588 = vpop.xlane.xlu0 %587
      %v589 = vmax.f32 %v550, %v551
      %590 = vmax.xlane.f32.xlu0 %v589
      %v591 = vpop.xlane.xlu0 %590
      %v592 = vmax.f32 %v552, %v553
      %593 = vmax.xlane.f32.xlu0 %v592
      %v594 = vpop.xlane.xlu0 %593
      %v595 = vmax.f32 %v554, %v555
      %596 = vmax.xlane.f32.xlu0 %v595
      %v597 = vpop.xlane.xlu0 %596
      %v598 = vmax.f32 %v556, %v557
      %599 = vmax.xlane.f32.xlu0 %v598
      %v600 = vpop.xlane.xlu0 %599
      %v601 = vmax.f32 %v558, %v559
      %602 = vmax.xlane.f32.xlu0 %v601
      %v603 = vpop.xlane.xlu0 %602
      %v604 = vmax.f32 %v560, %v561
      %605 = vmax.xlane.f32.xlu0 %v604
      %v606 = vpop.xlane.xlu0 %605
      %v607 = vmax.f32 %v562, %v563
      %608 = vmax.xlane.f32.xlu0 %v607
      %v609 = vpop.xlane.xlu0 %608
      %v610 = vmax.f32 %v564, %v565
      %611 = vmax.xlane.f32.xlu0 %v610
      %v612 = vpop.xlane.xlu0 %611
      %v613 = vmax.f32 %v566, %v567
      %614 = vmax.xlane.f32.xlu0 %v613
      %v615 = vpop.xlane.xlu0 %614
      %v616 = vsub.f32 %v536, %v570
      %v617 = vsub.f32 %v537, %v570
      %v618 = vsub.f32 %v538, %v573
      %v619 = vsub.f32 %v539, %v573
      %v620 = vsub.f32 %v540, %v576
      %v621 = vsub.f32 %v541, %v576
      %v622 = vsub.f32 %v542, %v579
      %v623 = vsub.f32 %v543, %v579
      %v624 = vsub.f32 %v544, %v582
      %v625 = vsub.f32 %v545, %v582
      %v626 = vsub.f32 %v546, %v585
      %v627 = vsub.f32 %v547, %v585
      %v628 = vsub.f32 %v548, %v588
      %v629 = vsub.f32 %v549, %v588
      %v630 = vsub.f32 %v550, %v591
      %v631 = vsub.f32 %v551, %v591
      %v632 = vsub.f32 %v552, %v594
      %v633 = vsub.f32 %v553, %v594
      %v634 = vsub.f32 %v554, %v597
      %v635 = vsub.f32 %v555, %v597
      %v636 = vsub.f32 %v556, %v600
      %v637 = vsub.f32 %v557, %v600
      %v638 = vsub.f32 %v558, %v603
      %v639 = vsub.f32 %v559, %v603
      %v640 = vsub.f32 %v560, %v606
      %v641 = vsub.f32 %v561, %v606
      %v642 = vsub.f32 %v562, %v609
      %v643 = vsub.f32 %v563, %v609
      %v644 = vsub.f32 %v564, %v612
      %v645 = vsub.f32 %v565, %v612
      %v646 = vsub.f32 %v566, %v615
      %v647 = vsub.f32 %v567, %v615
      %v648 = vmul.f32 %v616, 1.442695
      %v649 = vpow.pop %v648
      %v650 = vmul.f32 %v617, 1.442695
      %v651 = vpow.pop %v650
      %v652 = vmul.f32 %v618, 1.442695
      %v653 = vpow.pop %v652
      %v654 = vmul.f32 %v619, 1.442695
      %v655 = vpow.pop %v654
      %v656 = vmul.f32 %v620, 1.442695
      %v657 = vpow.pop %v656
      %v658 = vmul.f32 %v621, 1.442695
      %v659 = vpow.pop %v658
      %v660 = vmul.f32 %v622, 1.442695
      %v661 = vpow.pop %v660
      %v662 = vmul.f32 %v623, 1.442695
      %v663 = vpow.pop %v662
      %v664 = vmul.f32 %v624, 1.442695
      %v665 = vpow.pop %v664
      %v666 = vmul.f32 %v625, 1.442695
      %v667 = vpow.pop %v666
      %v668 = vmul.f32 %v626, 1.442695
      %v669 = vpow.pop %v668
      %v670 = vmul.f32 %v627, 1.442695
      %v671 = vpow.pop %v670
      %v672 = vmul.f32 %v628, 1.442695
      %v673 = vpow.pop %v672
      %v674 = vmul.f32 %v629, 1.442695
      %v675 = vpow.pop %v674
      %v676 = vmul.f32 %v630, 1.442695
      %v677 = vpow.pop %v676
      %v678 = vmul.f32 %v631, 1.442695
      %v679 = vpow.pop %v678
      %v680 = vmul.f32 %v632, 1.442695
      %v681 = vpow.pop %v680
      %v682 = vmul.f32 %v633, 1.442695
      %v683 = vpow.pop %v682
      %v684 = vmul.f32 %v634, 1.442695
      %v685 = vpow.pop %v684
      %v686 = vmul.f32 %v635, 1.442695
      %v687 = vpow.pop %v686
      %v688 = vmul.f32 %v636, 1.442695
      %v689 = vpow.pop %v688
      %v690 = vmul.f32 %v637, 1.442695
      %v691 = vpow.pop %v690
      %v692 = vmul.f32 %v638, 1.442695
      %v693 = vpow.pop %v692
      %v694 = vmul.f32 %v639, 1.442695
      %v695 = vpow.pop %v694
      %v696 = vmul.f32 %v640, 1.442695
      %v697 = vpow.pop %v696
      %v698 = vmul.f32 %v641, 1.442695
      %v699 = vpow.pop %v698
      %v700 = vmul.f32 %v642, 1.442695
      %v701 = vpow.pop %v700
      %v702 = vmul.f32 %v643, 1.442695
      %v703 = vpow.pop %v702
      %v704 = vmul.f32 %v644, 1.442695
      %v705 = vpow.pop %v704
      %v706 = vmul.f32 %v645, 1.442695
      %v707 = vpow.pop %v706
      %v708 = vmul.f32 %v646, 1.442695
      %v709 = vpow.pop %v708
      %v710 = vmul.f32 %v647, 1.442695
      %v711 = vpow.pop %v710
      %v712 = vsel %vm274, 0.0, %v649
      %v713 = vsel %vm275, 0.0, %v651
      %v714 = vsel %vm276, 0.0, %v653
      %v715 = vsel %vm277, 0.0, %v655
      %v716 = vsel %vm278, 0.0, %v657
      %v717 = vsel %vm279, 0.0, %v659
      %v718 = vsel %vm280, 0.0, %v661
      %v719 = vsel %vm281, 0.0, %v663
      %v720 = vsel %vm282, 0.0, %v665
      %v721 = vsel %vm283, 0.0, %v667
      %v722 = vsel %vm284, 0.0, %v669
      %v723 = vsel %vm285, 0.0, %v671
      %v724 = vsel %vm286, 0.0, %v673
      %v725 = vsel %vm287, 0.0, %v675
      %v726 = vsel %vm288, 0.0, %v677
      %v727 = vsel %vm289, 0.0, %v679
      %v728 = vsel %vm290, 0.0, %v681
      %v729 = vsel %vm291, 0.0, %v683
      %v730 = vsel %vm292, 0.0, %v685
      %v731 = vsel %vm293, 0.0, %v687
      %v732 = vsel %vm294, 0.0, %v689
      %v733 = vsel %vm295, 0.0, %v691
      %v734 = vsel %vm296, 0.0, %v693
      %v735 = vsel %vm297, 0.0, %v695
      %v736 = vsel %vm298, 0.0, %v697
      %v737 = vsel %vm299, 0.0, %v699
      %v738 = vsel %vm300, 0.0, %v701
      %v739 = vsel %vm301, 0.0, %v703
      %v740 = vsel %vm302, 0.0, %v705
      %v741 = vsel %vm303, 0.0, %v707
      %v742 = vsel %vm304, 0.0, %v709
      %v743 = vsel %vm305, 0.0, %v711
      %v744 = vadd.f32 %v712, %v713
      %745 = vadd.xlane.f32.xlu0 %v744
      %v746 = vpop.xlane.xlu0 %745
      %v747 = vadd.f32 %v714, %v715
      %748 = vadd.xlane.f32.xlu0 %v747
      %v749 = vpop.xlane.xlu0 %748
      %v750 = vadd.f32 %v716, %v717
      %751 = vadd.xlane.f32.xlu0 %v750
      %v752 = vpop.xlane.xlu0 %751
      %v753 = vadd.f32 %v718, %v719
      %754 = vadd.xlane.f32.xlu0 %v753
      %v755 = vpop.xlane.xlu0 %754
      %v756 = vadd.f32 %v720, %v721
      %757 = vadd.xlane.f32.xlu0 %v756
      %v758 = vpop.xlane.xlu0 %757
      %v759 = vadd.f32 %v722, %v723
      %760 = vadd.xlane.f32.xlu0 %v759
      %v761 = vpop.xlane.xlu0 %760
      %v762 = vadd.f32 %v724, %v725
      %763 = vadd.xlane.f32.xlu0 %v762
      %v764 = vpop.xlane.xlu0 %763
      %v765 = vadd.f32 %v726, %v727
      %766 = vadd.xlane.f32.xlu0 %v765
      %v767 = vpop.xlane.xlu0 %766
      %v768 = vadd.f32 %v728, %v729
      %769 = vadd.xlane.f32.xlu0 %v768
      %v770 = vpop.xlane.xlu0 %769
      %v771 = vadd.f32 %v730, %v731
      %772 = vadd.xlane.f32.xlu0 %v771
      %v773 = vpop.xlane.xlu0 %772
      %v774 = vadd.f32 %v732, %v733
      %775 = vadd.xlane.f32.xlu0 %v774
      %v776 = vpop.xlane.xlu0 %775
      %v777 = vadd.f32 %v734, %v735
      %778 = vadd.xlane.f32.xlu0 %v777
      %v779 = vpop.xlane.xlu0 %778
      %v780 = vadd.f32 %v736, %v737
      %781 = vadd.xlane.f32.xlu0 %v780
      %v782 = vpop.xlane.xlu0 %781
      %v783 = vadd.f32 %v738, %v739
      %784 = vadd.xlane.f32.xlu0 %v783
      %v785 = vpop.xlane.xlu0 %784
      %v786 = vadd.f32 %v740, %v741
      %787 = vadd.xlane.f32.xlu0 %v786
      %v788 = vpop.xlane.xlu0 %787
      %v789 = vadd.f32 %v742, %v743
      %790 = vadd.xlane.f32.xlu0 %v789
      %v791 = vpop.xlane.xlu0 %790
      %vm792 = vcmp.gt.f32.partialorder %v746, 0.0
      %vm793 = vcmp.gt.f32.partialorder %v749, 0.0
      %vm794 = vcmp.gt.f32.partialorder %v752, 0.0
      %vm795 = vcmp.gt.f32.partialorder %v755, 0.0
      %vm796 = vcmp.gt.f32.partialorder %v758, 0.0
      %vm797 = vcmp.gt.f32.partialorder %v761, 0.0
      %vm798 = vcmp.gt.f32.partialorder %v764, 0.0
      %vm799 = vcmp.gt.f32.partialorder %v767, 0.0
      %vm800 = vcmp.gt.f32.partialorder %v770, 0.0
      %vm801 = vcmp.gt.f32.partialorder %v773, 0.0
      %vm802 = vcmp.gt.f32.partialorder %v776, 0.0
      %vm803 = vcmp.gt.f32.partialorder %v779, 0.0
      %vm804 = vcmp.gt.f32.partialorder %v782, 0.0
      %vm805 = vcmp.gt.f32.partialorder %v785, 0.0
      %vm806 = vcmp.gt.f32.partialorder %v788, 0.0
      %vm807 = vcmp.gt.f32.partialorder %v791, 0.0
      %v808 = vrcp.pop %v746
      %v809 = vrcp.pop %v749
      %v810 = vrcp.pop %v752
      %v811 = vrcp.pop %v755
      %v812 = vrcp.pop %v758
      %v813 = vrcp.pop %v761
      %v814 = vrcp.pop %v764
      %v815 = vrcp.pop %v767
      %v816 = vrcp.pop %v770
      %v817 = vrcp.pop %v773
      %v818 = vrcp.pop %v776
      %v819 = vrcp.pop %v779
      %v820 = vrcp.pop %v782
      %v821 = vrcp.pop %v785
      %v822 = vrcp.pop %v788
      %v823 = vrcp.pop %v791
      %v824 = vsel %vm792, %v808, 0.0
      %v825 = vsel %vm793, %v809, 0.0
      %v826 = vsel %vm794, %v810, 0.0
      %v827 = vsel %vm795, %v811, 0.0
      %v828 = vsel %vm796, %v812, 0.0
      %v829 = vsel %vm797, %v813, 0.0
      %v830 = vsel %vm798, %v814, 0.0
      %v831 = vsel %vm799, %v815, 0.0
      %v832 = vsel %vm800, %v816, 0.0
      %v833 = vsel %vm801, %v817, 0.0
      %v834 = vsel %vm802, %v818, 0.0
      %v835 = vsel %vm803, %v819, 0.0
      %v836 = vsel %vm804, %v820, 0.0
      %v837 = vsel %vm805, %v821, 0.0
      %v838 = vsel %vm806, %v822, 0.0
      %v839 = vsel %vm807, %v823, 0.0
      %v840 = vld [vmem:[%s1] sm:$0xf]
      %v841 = vld [vmem:[%s1 + $0x4] sm:$0xf]
      %v842 = vld [vmem:[%s1 + $0x8] sm:$0xf]
      %v843 = vld [vmem:[%s1 + $0xc] sm:$0xf]
      %v844 = vld [vmem:[%s1 + $0x10] sm:$0xf]
      %v845 = vld [vmem:[%s1 + $0x14] sm:$0xf]
      %v846 = vld [vmem:[%s1 + $0x18] sm:$0xf]
      %v847 = vld [vmem:[%s1 + $0x1c] sm:$0xf]
      %v848 = vld [vmem:[%s1 + $0x20] sm:$0xf]
      %v849 = vld [vmem:[%s1 + $0x24] sm:$0xf]
      %v850 = vld [vmem:[%s1 + $0x28] sm:$0xf]
      %v851 = vld [vmem:[%s1 + $0x2c] sm:$0xf]
      %v852 = vld [vmem:[%s1 + $0x30] sm:$0xf]
      %v853 = vld [vmem:[%s1 + $0x34] sm:$0xf]
      %v854 = vld [vmem:[%s1 + $0x38] sm:$0xf]
      %v855 = vld [vmem:[%s1 + $0x3c] sm:$0xf]
      %v856 = vld [vmem:[%s1 + $0x40] sm:$0xf]
      %v857 = vld [vmem:[%s1 + $0x44] sm:$0xf]
      %v858 = vld [vmem:[%s1 + $0x48] sm:$0xf]
      %v859 = vld [vmem:[%s1 + $0x4c] sm:$0xf]
      %v860 = vld [vmem:[%s1 + $0x50] sm:$0xf]
      %v861 = vld [vmem:[%s1 + $0x54] sm:$0xf]
      %v862 = vld [vmem:[%s1 + $0x58] sm:$0xf]
      %v863 = vld [vmem:[%s1 + $0x5c] sm:$0xf]
      %v864 = vld [vmem:[%s1 + $0x60] sm:$0xf]
      %v865 = vld [vmem:[%s1 + $0x64] sm:$0xf]
      %v866 = vld [vmem:[%s1 + $0x68] sm:$0xf]
      %v867 = vld [vmem:[%s1 + $0x6c] sm:$0xf]
      %v868 = vld [vmem:[%s1 + $0x70] sm:$0xf]
      %v869 = vld [vmem:[%s1 + $0x74] sm:$0xf]
      %v870 = vld [vmem:[%s1 + $0x78] sm:$0xf]
      %v871 = vld [vmem:[%s1 + $0x7c] sm:$0xf]
      %v872 = vpack.c.bf16 %v714, %v712
      %v873 = vpack.c.bf16 %v715, %v713
      %v874 = vpack.c.bf16 %v718, %v716
      %v875 = vpack.c.bf16 %v719, %v717
      %v876 = vpack.c.bf16 %v722, %v720
      %v877 = vpack.c.bf16 %v723, %v721
      %v878 = vpack.c.bf16 %v726, %v724
      %v879 = vpack.c.bf16 %v727, %v725
      %v880 = vpack.c.bf16 %v730, %v728
      %v881 = vpack.c.bf16 %v731, %v729
      %v882 = vpack.c.bf16 %v734, %v732
      %v883 = vpack.c.bf16 %v735, %v733
      %v884 = vpack.c.bf16 %v738, %v736
      %v885 = vpack.c.bf16 %v739, %v737
      %v886 = vpack.c.bf16 %v742, %v740
      %v887 = vpack.c.bf16 %v743, %v741
      %v920 = vunpack.c.l.b16 %v840
      %v921 = vunpack.c.l.b16 %v841
      %v922 = vunpack.c.l.b16 %v842
      %v923 = vunpack.c.l.b16 %v843
      %v924 = vunpack.c.l.b16 %v844
      %v925 = vunpack.c.l.b16 %v845
      %v926 = vunpack.c.l.b16 %v846
      %v927 = vunpack.c.l.b16 %v847
      %v928 = vunpack.c.l.b16 %v848
      %v929 = vunpack.c.l.b16 %v849
      %v930 = vunpack.c.l.b16 %v850
      %v931 = vunpack.c.l.b16 %v851
      %v932 = vunpack.c.l.b16 %v852
      %v933 = vunpack.c.l.b16 %v853
      %v934 = vunpack.c.l.b16 %v854
      %v935 = vunpack.c.l.b16 %v855
      %v936 = vunpack.c.l.b16 %v856
      %v937 = vunpack.c.l.b16 %v857
      %v938 = vunpack.c.l.b16 %v858
      %v939 = vunpack.c.l.b16 %v859
      %v940 = vunpack.c.l.b16 %v860
      %v941 = vunpack.c.l.b16 %v861
      %v942 = vunpack.c.l.b16 %v862
      %v943 = vunpack.c.l.b16 %v863
      %v944 = vunpack.c.l.b16 %v864
      %v945 = vunpack.c.l.b16 %v865
      %v946 = vunpack.c.l.b16 %v866
      %v947 = vunpack.c.l.b16 %v867
      %v948 = vunpack.c.l.b16 %v868
      %v949 = vunpack.c.l.b16 %v869
      %v950 = vunpack.c.l.b16 %v870
      %v951 = vunpack.c.l.b16 %v871
      %v952 = vpack.c.b16 %v921, %v920
      %v953 = vpack.c.b16 %v923, %v922
      %v954 = vpack.c.b16 %v925, %v924
      %v955 = vpack.c.b16 %v927, %v926
      %v956 = vpack.c.b16 %v929, %v928
      %v957 = vpack.c.b16 %v931, %v930
      %v958 = vpack.c.b16 %v933, %v932
      %v959 = vpack.c.b16 %v935, %v934
      %v960 = vpack.c.b16 %v937, %v936
      %v961 = vpack.c.b16 %v939, %v938
      %v962 = vpack.c.b16 %v941, %v940
      %v963 = vpack.c.b16 %v943, %v942
      %v964 = vpack.c.b16 %v945, %v944
      %v965 = vpack.c.b16 %v947, %v946
      %v966 = vpack.c.b16 %v949, %v948
      %v967 = vpack.c.b16 %v951, %v950
      %984 = vmatpush.bf16.msra.mxu0 %v959
      %985 = vmatpush.bf16.msra.mxu0 %v958
      %986 = vmatpush.bf16.msra.mxu0 %v957
      %987 = vmatpush.bf16.msra.mxu0 %v956
      %988 = vmatpush.bf16.msra.mxu0 %v955
      %989 = vmatpush.bf16.msra.mxu0 %v954
      %990 = vmatpush.bf16.msra.mxu0 %v953
      %991 = vmatpush.bf16.msra.mxu0 %v952
      %992 = vmatmul.bf16.gmra.mxu0 %v872
      %v993 = vpop.f32.mrf.mxu0
      %v994 = vadd.f32 0.0, %v993
      %v995 = vpop.f32.mrf.mxu0
      %v996 = vadd.f32 0.0, %v995
      %997 = vmatmul.bf16.gmra.mxu0 %v874
      %v998 = vpop.f32.mrf.mxu0
      %v999 = vadd.f32 0.0, %v998
      %v1000 = vpop.f32.mrf.mxu0
      %v1001 = vadd.f32 0.0, %v1000
      %1002 = vmatmul.bf16.gmra.mxu0 %v876
      %v1003 = vpop.f32.mrf.mxu0
      %v1004 = vadd.f32 0.0, %v1003
      %v1005 = vpop.f32.mrf.mxu0
      %v1006 = vadd.f32 0.0, %v1005
      %1007 = vmatmul.bf16.gmra.mxu0 %v878
      %v1008 = vpop.f32.mrf.mxu0
      %v1009 = vadd.f32 0.0, %v1008
      %v1010 = vpop.f32.mrf.mxu0
      %v1011 = vadd.f32 0.0, %v1010
      %1012 = vmatmul.bf16.gmra.mxu0 %v880
      %v1013 = vpop.f32.mrf.mxu0
      %v1014 = vadd.f32 0.0, %v1013
      %v1015 = vpop.f32.mrf.mxu0
      %v1016 = vadd.f32 0.0, %v1015
      %1017 = vmatmul.bf16.gmra.mxu0 %v882
      %v1018 = vpop.f32.mrf.mxu0
      %v1019 = vadd.f32 0.0, %v1018
      %v1020 = vpop.f32.mrf.mxu0
      %v1021 = vadd.f32 0.0, %v1020
      %1022 = vmatmul.bf16.gmra.mxu0 %v884
      %v1023 = vpop.f32.mrf.mxu0
      %v1024 = vadd.f32 0.0, %v1023
      %v1025 = vpop.f32.mrf.mxu0
      %v1026 = vadd.f32 0.0, %v1025
      %1027 = vmatmul.bf16.gmra.mxu0 %v886
      %v1028 = vpop.f32.mrf.mxu0
      %v1029 = vadd.f32 0.0, %v1028
      %v1030 = vpop.f32.mrf.mxu0
      %v1031 = vadd.f32 0.0, %v1030
      %1032 = vdwg.mxu0
      %1033 = vmatpush.bf16.msra.mxu0 %v967
      %1034 = vmatpush.bf16.msra.mxu0 %v966
      %1035 = vmatpush.bf16.msra.mxu0 %v965
      %1036 = vmatpush.bf16.msra.mxu0 %v964
      %1037 = vmatpush.bf16.msra.mxu0 %v963
      %1038 = vmatpush.bf16.msra.mxu0 %v962
      %1039 = vmatpush.bf16.msra.mxu0 %v961
      %1040 = vmatpush.bf16.msra.mxu0 %v960
      %1041 = vmatmul.bf16.gmra.mxu0 %v873
      %v1042 = vpop.f32.mrf.mxu0
      %v1043 = vadd.f32 %v994, %v1042
      %v1044 = vpop.f32.mrf.mxu0
      %v1045 = vadd.f32 %v996, %v1044
      %1046 = vmatmul.bf16.gmra.mxu0 %v875
      %v1047 = vpop.f32.mrf.mxu0
      %v1048 = vadd.f32 %v999, %v1047
      %v1049 = vpop.f32.mrf.mxu0
      %v1050 = vadd.f32 %v1001, %v1049
      %1051 = vmatmul.bf16.gmra.mxu0 %v877
      %v1052 = vpop.f32.mrf.mxu0
      %v1053 = vadd.f32 %v1004, %v1052
      %v1054 = vpop.f32.mrf.mxu0
      %v1055 = vadd.f32 %v1006, %v1054
      %1056 = vmatmul.bf16.gmra.mxu0 %v879
      %v1057 = vpop.f32.mrf.mxu0
      %v1058 = vadd.f32 %v1009, %v1057
      %v1059 = vpop.f32.mrf.mxu0
      %v1060 = vadd.f32 %v1011, %v1059
      %1061 = vmatmul.bf16.gmra.mxu0 %v881
      %v1062 = vpop.f32.mrf.mxu0
      %v1063 = vadd.f32 %v1014, %v1062
      %v1064 = vpop.f32.mrf.mxu0
      %v1065 = vadd.f32 %v1016, %v1064
      %1066 = vmatmul.bf16.gmra.mxu0 %v883
      %v1067 = vpop.f32.mrf.mxu0
      %v1068 = vadd.f32 %v1019, %v1067
      %v1069 = vpop.f32.mrf.mxu0
      %v1070 = vadd.f32 %v1021, %v1069
      %1071 = vmatmul.bf16.gmra.mxu0 %v885
      %v1072 = vpop.f32.mrf.mxu0
      %v1073 = vadd.f32 %v1024, %v1072
      %v1074 = vpop.f32.mrf.mxu0
      %v1075 = vadd.f32 %v1026, %v1074
      %1076 = vmatmul.bf16.gmra.mxu0 %v887
      %v1077 = vpop.f32.mrf.mxu0
      %v1078 = vadd.f32 %v1029, %v1077
      %v1079 = vpop.f32.mrf.mxu0
      %v1080 = vadd.f32 %v1031, %v1079
      %1081 = vdwg.mxu0
      %v1082 = vmul.f32 %v1043, %v824
      %v1083 = vmul.f32 %v1045, %v825
      %v1084 = vmul.f32 %v1048, %v826
      %v1085 = vmul.f32 %v1050, %v827
      %v1086 = vmul.f32 %v1053, %v828
      %v1087 = vmul.f32 %v1055, %v829
      %v1088 = vmul.f32 %v1058, %v830
      %v1089 = vmul.f32 %v1060, %v831
      %v1090 = vmul.f32 %v1063, %v832
      %v1091 = vmul.f32 %v1065, %v833
      %v1092 = vmul.f32 %v1068, %v834
      %v1093 = vmul.f32 %v1070, %v835
      %v1094 = vmul.f32 %v1073, %v836
      %v1095 = vmul.f32 %v1075, %v837
      %v1096 = vmul.f32 %v1078, %v838
      %v1097 = vmul.f32 %v1080, %v839
      %s1098 = scalar_lea.vmem %s2, 1
      %v1099 = vld [vmem:[%s1098] ss:$2 sm:$0x3]
      %1100 = vset.pattern.permute.xlu0 1
      %1101 = vperm.xlu0 %1100, %v306
      %v1102 = vpop.permute.xlu0 %1101
      %1104 = vset.pattern.permute.xlu0 1
      %1105 = vperm.xlu0 %1104, %v307
      %v1106 = vpop.permute.xlu0 %1105
      %1108 = vset.pattern.permute.xlu0 1
      %1109 = vperm.xlu0 %1108, %v308
      %v1110 = vpop.permute.xlu0 %1109
      %1112 = vset.pattern.permute.xlu0 1
      %1113 = vperm.xlu0 %1112, %v309
      %v1114 = vpop.permute.xlu0 %1113
      %1116 = vset.pattern.permute.xlu0 1
      %1117 = vperm.xlu0 %1116, %v310
      %v1118 = vpop.permute.xlu0 %1117
      %1120 = vset.pattern.permute.xlu0 1
      %1121 = vperm.xlu0 %1120, %v311
      %v1122 = vpop.permute.xlu0 %1121
      %1124 = vset.pattern.permute.xlu0 1
      %1125 = vperm.xlu0 %1124, %v312
      %v1126 = vpop.permute.xlu0 %1125
      %1128 = vset.pattern.permute.xlu0 1
      %1129 = vperm.xlu0 %1128, %v313
      %v1130 = vpop.permute.xlu0 %1129
      %1132 = vset.pattern.permute.xlu0 1
      %1133 = vperm.xlu0 %1132, %v314
      %v1134 = vpop.permute.xlu0 %1133
      %1136 = vset.pattern.permute.xlu0 1
      %1137 = vperm.xlu0 %1136, %v315
      %v1138 = vpop.permute.xlu0 %1137
      %1140 = vset.pattern.permute.xlu0 1
      %1141 = vperm.xlu0 %1140, %v316
      %v1142 = vpop.permute.xlu0 %1141
      %1144 = vset.pattern.permute.xlu0 1
      %1145 = vperm.xlu0 %1144, %v317
      %v1146 = vpop.permute.xlu0 %1145
      %1148 = vset.pattern.permute.xlu0 1
      %1149 = vperm.xlu0 %1148, %v318
      %v1150 = vpop.permute.xlu0 %1149
      %1152 = vset.pattern.permute.xlu0 1
      %1153 = vperm.xlu0 %1152, %v319
      %v1154 = vpop.permute.xlu0 %1153
      %1156 = vset.pattern.permute.xlu0 1
      %1157 = vperm.xlu0 %1156, %v320
      %v1158 = vpop.permute.xlu0 %1157
      %1160 = vset.pattern.permute.xlu0 1
      %1161 = vperm.xlu0 %1160, %v321
      %v1162 = vpop.permute.xlu0 %1161
      %v1165 = vperm.slane %v1099, 0
      %v1166 = vperm.slane %v1099, 1
      %v1169 = vadd.f32 %v1102, %v1165
      %v1170 = vadd.f32 %v1102, %v1166
      %v1171 = vadd.f32 %v1106, %v1165
      %v1172 = vadd.f32 %v1106, %v1166
      %v1173 = vadd.f32 %v1110, %v1165
      %v1174 = vadd.f32 %v1110, %v1166
      %v1175 = vadd.f32 %v1114, %v1165
      %v1176 = vadd.f32 %v1114, %v1166
      %v1177 = vadd.f32 %v1118, %v1165
      %v1178 = vadd.f32 %v1118, %v1166
      %v1179 = vadd.f32 %v1122, %v1165
      %v1180 = vadd.f32 %v1122, %v1166
      %v1181 = vadd.f32 %v1126, %v1165
      %v1182 = vadd.f32 %v1126, %v1166
      %v1183 = vadd.f32 %v1130, %v1165
      %v1184 = vadd.f32 %v1130, %v1166
      %v1185 = vadd.f32 %v1134, %v1165
      %v1186 = vadd.f32 %v1134, %v1166
      %v1187 = vadd.f32 %v1138, %v1165
      %v1188 = vadd.f32 %v1138, %v1166
      %v1189 = vadd.f32 %v1142, %v1165
      %v1190 = vadd.f32 %v1142, %v1166
      %v1191 = vadd.f32 %v1146, %v1165
      %v1192 = vadd.f32 %v1146, %v1166
      %v1193 = vadd.f32 %v1150, %v1165
      %v1194 = vadd.f32 %v1150, %v1166
      %v1195 = vadd.f32 %v1154, %v1165
      %v1196 = vadd.f32 %v1154, %v1166
      %v1197 = vadd.f32 %v1158, %v1165
      %v1198 = vadd.f32 %v1158, %v1166
      %v1199 = vadd.f32 %v1162, %v1165
      %v1200 = vadd.f32 %v1162, %v1166
      %vm1201 = vcmp.gt.f32.partialorder %v1169, 0.0
      %vm1202 = vcmp.gt.f32.partialorder %v1170, 0.0
      %vm1203 = vcmp.gt.f32.partialorder %v1171, 0.0
      %vm1204 = vcmp.gt.f32.partialorder %v1172, 0.0
      %vm1205 = vcmp.gt.f32.partialorder %v1173, 0.0
      %vm1206 = vcmp.gt.f32.partialorder %v1174, 0.0
      %vm1207 = vcmp.gt.f32.partialorder %v1175, 0.0
      %vm1208 = vcmp.gt.f32.partialorder %v1176, 0.0
      %vm1209 = vcmp.gt.f32.partialorder %v1177, 0.0
      %vm1210 = vcmp.gt.f32.partialorder %v1178, 0.0
      %vm1211 = vcmp.gt.f32.partialorder %v1179, 0.0
      %vm1212 = vcmp.gt.f32.partialorder %v1180, 0.0
      %vm1213 = vcmp.gt.f32.partialorder %v1181, 0.0
      %vm1214 = vcmp.gt.f32.partialorder %v1182, 0.0
      %vm1215 = vcmp.gt.f32.partialorder %v1183, 0.0
      %vm1216 = vcmp.gt.f32.partialorder %v1184, 0.0
      %vm1217 = vcmp.gt.f32.partialorder %v1185, 0.0
      %vm1218 = vcmp.gt.f32.partialorder %v1186, 0.0
      %vm1219 = vcmp.gt.f32.partialorder %v1187, 0.0
      %vm1220 = vcmp.gt.f32.partialorder %v1188, 0.0
      %vm1221 = vcmp.gt.f32.partialorder %v1189, 0.0
      %vm1222 = vcmp.gt.f32.partialorder %v1190, 0.0
      %vm1223 = vcmp.gt.f32.partialorder %v1191, 0.0
      %vm1224 = vcmp.gt.f32.partialorder %v1192, 0.0
      %vm1225 = vcmp.gt.f32.partialorder %v1193, 0.0
      %vm1226 = vcmp.gt.f32.partialorder %v1194, 0.0
      %vm1227 = vcmp.gt.f32.partialorder %v1195, 0.0
      %vm1228 = vcmp.gt.f32.partialorder %v1196, 0.0
      %vm1229 = vcmp.gt.f32.partialorder %v1197, 0.0
      %vm1230 = vcmp.gt.f32.partialorder %v1198, 0.0
      %vm1231 = vcmp.gt.f32.partialorder %v1199, 0.0
      %vm1232 = vcmp.gt.f32.partialorder %v1200, 0.0
      %v1233 = vmul.f32 %v1169, 0.2
      %v1234 = vmul.f32 %v1170, 0.2
      %v1235 = vmul.f32 %v1171, 0.2
      %v1236 = vmul.f32 %v1172, 0.2
      %v1237 = vmul.f32 %v1173, 0.2
      %v1238 = vmul.f32 %v1174, 0.2
      %v1239 = vmul.f32 %v1175, 0.2
      %v1240 = vmul.f32 %v1176, 0.2
      %v1241 = vmul.f32 %v1177, 0.2
      %v1242 = vmul.f32 %v1178, 0.2
      %v1243 = vmul.f32 %v1179, 0.2
      %v1244 = vmul.f32 %v1180, 0.2
      %v1245 = vmul.f32 %v1181, 0.2
      %v1246 = vmul.f32 %v1182, 0.2
      %v1247 = vmul.f32 %v1183, 0.2
      %v1248 = vmul.f32 %v1184, 0.2
      %v1249 = vmul.f32 %v1185, 0.2
      %v1250 = vmul.f32 %v1186, 0.2
      %v1251 = vmul.f32 %v1187, 0.2
      %v1252 = vmul.f32 %v1188, 0.2
      %v1253 = vmul.f32 %v1189, 0.2
      %v1254 = vmul.f32 %v1190, 0.2
      %v1255 = vmul.f32 %v1191, 0.2
      %v1256 = vmul.f32 %v1192, 0.2
      %v1257 = vmul.f32 %v1193, 0.2
      %v1258 = vmul.f32 %v1194, 0.2
      %v1259 = vmul.f32 %v1195, 0.2
      %v1260 = vmul.f32 %v1196, 0.2
      %v1261 = vmul.f32 %v1197, 0.2
      %v1262 = vmul.f32 %v1198, 0.2
      %v1263 = vmul.f32 %v1199, 0.2
      %v1264 = vmul.f32 %v1200, 0.2
      %v1265 = vsel %vm1201, %v1169, %v1233
      %v1266 = vsel %vm1202, %v1170, %v1234
      %v1267 = vsel %vm1203, %v1171, %v1235
      %v1268 = vsel %vm1204, %v1172, %v1236
      %v1269 = vsel %vm1205, %v1173, %v1237
      %v1270 = vsel %vm1206, %v1174, %v1238
      %v1271 = vsel %vm1207, %v1175, %v1239
      %v1272 = vsel %vm1208, %v1176, %v1240
      %v1273 = vsel %vm1209, %v1177, %v1241
      %v1274 = vsel %vm1210, %v1178, %v1242
      %v1275 = vsel %vm1211, %v1179, %v1243
      %v1276 = vsel %vm1212, %v1180, %v1244
      %v1277 = vsel %vm1213, %v1181, %v1245
      %v1278 = vsel %vm1214, %v1182, %v1246
      %v1279 = vsel %vm1215, %v1183, %v1247
      %v1280 = vsel %vm1216, %v1184, %v1248
      %v1281 = vsel %vm1217, %v1185, %v1249
      %v1282 = vsel %vm1218, %v1186, %v1250
      %v1283 = vsel %vm1219, %v1187, %v1251
      %v1284 = vsel %vm1220, %v1188, %v1252
      %v1285 = vsel %vm1221, %v1189, %v1253
      %v1286 = vsel %vm1222, %v1190, %v1254
      %v1287 = vsel %vm1223, %v1191, %v1255
      %v1288 = vsel %vm1224, %v1192, %v1256
      %v1289 = vsel %vm1225, %v1193, %v1257
      %v1290 = vsel %vm1226, %v1194, %v1258
      %v1291 = vsel %vm1227, %v1195, %v1259
      %v1292 = vsel %vm1228, %v1196, %v1260
      %v1293 = vsel %vm1229, %v1197, %v1261
      %v1294 = vsel %vm1230, %v1198, %v1262
      %v1295 = vsel %vm1231, %v1199, %v1263
      %v1296 = vsel %vm1232, %v1200, %v1264
      %v1297 = vsel %vm274, -1e+30, %v1265
      %v1298 = vsel %vm275, -1e+30, %v1266
      %v1299 = vsel %vm276, -1e+30, %v1267
      %v1300 = vsel %vm277, -1e+30, %v1268
      %v1301 = vsel %vm278, -1e+30, %v1269
      %v1302 = vsel %vm279, -1e+30, %v1270
      %v1303 = vsel %vm280, -1e+30, %v1271
      %v1304 = vsel %vm281, -1e+30, %v1272
      %v1305 = vsel %vm282, -1e+30, %v1273
      %v1306 = vsel %vm283, -1e+30, %v1274
      %v1307 = vsel %vm284, -1e+30, %v1275
      %v1308 = vsel %vm285, -1e+30, %v1276
      %v1309 = vsel %vm286, -1e+30, %v1277
      %v1310 = vsel %vm287, -1e+30, %v1278
      %v1311 = vsel %vm288, -1e+30, %v1279
      %v1312 = vsel %vm289, -1e+30, %v1280
      %v1313 = vsel %vm290, -1e+30, %v1281
      %v1314 = vsel %vm291, -1e+30, %v1282
      %v1315 = vsel %vm292, -1e+30, %v1283
      %v1316 = vsel %vm293, -1e+30, %v1284
      %v1317 = vsel %vm294, -1e+30, %v1285
      %v1318 = vsel %vm295, -1e+30, %v1286
      %v1319 = vsel %vm296, -1e+30, %v1287
      %v1320 = vsel %vm297, -1e+30, %v1288
      %v1321 = vsel %vm298, -1e+30, %v1289
      %v1322 = vsel %vm299, -1e+30, %v1290
      %v1323 = vsel %vm300, -1e+30, %v1291
      %v1324 = vsel %vm301, -1e+30, %v1292
      %v1325 = vsel %vm302, -1e+30, %v1293
      %v1326 = vsel %vm303, -1e+30, %v1294
      %v1327 = vsel %vm304, -1e+30, %v1295
      %v1328 = vsel %vm305, -1e+30, %v1296
      %v1329 = vmax.f32 %v1297, %v1298
      %1330 = vmax.xlane.f32.xlu0 %v1329
      %v1331 = vpop.xlane.xlu0 %1330
      %v1332 = vmax.f32 %v1299, %v1300
      %1333 = vmax.xlane.f32.xlu0 %v1332
      %v1334 = vpop.xlane.xlu0 %1333
      %v1335 = vmax.f32 %v1301, %v1302
      %1336 = vmax.xlane.f32.xlu0 %v1335
      %v1337 = vpop.xlane.xlu0 %1336
      %v1338 = vmax.f32 %v1303, %v1304
      %1339 = vmax.xlane.f32.xlu0 %v1338
      %v1340 = vpop.xlane.xlu0 %1339
      %v1341 = vmax.f32 %v1305, %v1306
      %1342 = vmax.xlane.f32.xlu0 %v1341
      %v1343 = vpop.xlane.xlu0 %1342
      %v1344 = vmax.f32 %v1307, %v1308
      %1345 = vmax.xlane.f32.xlu0 %v1344
      %v1346 = vpop.xlane.xlu0 %1345
      %v1347 = vmax.f32 %v1309, %v1310
      %1348 = vmax.xlane.f32.xlu0 %v1347
      %v1349 = vpop.xlane.xlu0 %1348
      %v1350 = vmax.f32 %v1311, %v1312
      %1351 = vmax.xlane.f32.xlu0 %v1350
      %v1352 = vpop.xlane.xlu0 %1351
      %v1353 = vmax.f32 %v1313, %v1314
      %1354 = vmax.xlane.f32.xlu0 %v1353
      %v1355 = vpop.xlane.xlu0 %1354
      %v1356 = vmax.f32 %v1315, %v1316
      %1357 = vmax.xlane.f32.xlu0 %v1356
      %v1358 = vpop.xlane.xlu0 %1357
      %v1359 = vmax.f32 %v1317, %v1318
      %1360 = vmax.xlane.f32.xlu0 %v1359
      %v1361 = vpop.xlane.xlu0 %1360
      %v1362 = vmax.f32 %v1319, %v1320
      %1363 = vmax.xlane.f32.xlu0 %v1362
      %v1364 = vpop.xlane.xlu0 %1363
      %v1365 = vmax.f32 %v1321, %v1322
      %1366 = vmax.xlane.f32.xlu0 %v1365
      %v1367 = vpop.xlane.xlu0 %1366
      %v1368 = vmax.f32 %v1323, %v1324
      %1369 = vmax.xlane.f32.xlu0 %v1368
      %v1370 = vpop.xlane.xlu0 %1369
      %v1371 = vmax.f32 %v1325, %v1326
      %1372 = vmax.xlane.f32.xlu0 %v1371
      %v1373 = vpop.xlane.xlu0 %1372
      %v1374 = vmax.f32 %v1327, %v1328
      %1375 = vmax.xlane.f32.xlu0 %v1374
      %v1376 = vpop.xlane.xlu0 %1375
      %v1377 = vsub.f32 %v1297, %v1331
      %v1378 = vsub.f32 %v1298, %v1331
      %v1379 = vsub.f32 %v1299, %v1334
      %v1380 = vsub.f32 %v1300, %v1334
      %v1381 = vsub.f32 %v1301, %v1337
      %v1382 = vsub.f32 %v1302, %v1337
      %v1383 = vsub.f32 %v1303, %v1340
      %v1384 = vsub.f32 %v1304, %v1340
      %v1385 = vsub.f32 %v1305, %v1343
      %v1386 = vsub.f32 %v1306, %v1343
      %v1387 = vsub.f32 %v1307, %v1346
      %v1388 = vsub.f32 %v1308, %v1346
      %v1389 = vsub.f32 %v1309, %v1349
      %v1390 = vsub.f32 %v1310, %v1349
      %v1391 = vsub.f32 %v1311, %v1352
      %v1392 = vsub.f32 %v1312, %v1352
      %v1393 = vsub.f32 %v1313, %v1355
      %v1394 = vsub.f32 %v1314, %v1355
      %v1395 = vsub.f32 %v1315, %v1358
      %v1396 = vsub.f32 %v1316, %v1358
      %v1397 = vsub.f32 %v1317, %v1361
      %v1398 = vsub.f32 %v1318, %v1361
      %v1399 = vsub.f32 %v1319, %v1364
      %v1400 = vsub.f32 %v1320, %v1364
      %v1401 = vsub.f32 %v1321, %v1367
      %v1402 = vsub.f32 %v1322, %v1367
      %v1403 = vsub.f32 %v1323, %v1370
      %v1404 = vsub.f32 %v1324, %v1370
      %v1405 = vsub.f32 %v1325, %v1373
      %v1406 = vsub.f32 %v1326, %v1373
      %v1407 = vsub.f32 %v1327, %v1376
      %v1408 = vsub.f32 %v1328, %v1376
      %v1409 = vmul.f32 %v1377, 1.442695
      %v1410 = vpow.pop %v1409
      %v1411 = vmul.f32 %v1378, 1.442695
      %v1412 = vpow.pop %v1411
      %v1413 = vmul.f32 %v1379, 1.442695
      %v1414 = vpow.pop %v1413
      %v1415 = vmul.f32 %v1380, 1.442695
      %v1416 = vpow.pop %v1415
      %v1417 = vmul.f32 %v1381, 1.442695
      %v1418 = vpow.pop %v1417
      %v1419 = vmul.f32 %v1382, 1.442695
      %v1420 = vpow.pop %v1419
      %v1421 = vmul.f32 %v1383, 1.442695
      %v1422 = vpow.pop %v1421
      %v1423 = vmul.f32 %v1384, 1.442695
      %v1424 = vpow.pop %v1423
      %v1425 = vmul.f32 %v1385, 1.442695
      %v1426 = vpow.pop %v1425
      %v1427 = vmul.f32 %v1386, 1.442695
      %v1428 = vpow.pop %v1427
      %v1429 = vmul.f32 %v1387, 1.442695
      %v1430 = vpow.pop %v1429
      %v1431 = vmul.f32 %v1388, 1.442695
      %v1432 = vpow.pop %v1431
      %v1433 = vmul.f32 %v1389, 1.442695
      %v1434 = vpow.pop %v1433
      %v1435 = vmul.f32 %v1390, 1.442695
      %v1436 = vpow.pop %v1435
      %v1437 = vmul.f32 %v1391, 1.442695
      %v1438 = vpow.pop %v1437
      %v1439 = vmul.f32 %v1392, 1.442695
      %v1440 = vpow.pop %v1439
      %v1441 = vmul.f32 %v1393, 1.442695
      %v1442 = vpow.pop %v1441
      %v1443 = vmul.f32 %v1394, 1.442695
      %v1444 = vpow.pop %v1443
      %v1445 = vmul.f32 %v1395, 1.442695
      %v1446 = vpow.pop %v1445
      %v1447 = vmul.f32 %v1396, 1.442695
      %v1448 = vpow.pop %v1447
      %v1449 = vmul.f32 %v1397, 1.442695
      %v1450 = vpow.pop %v1449
      %v1451 = vmul.f32 %v1398, 1.442695
      %v1452 = vpow.pop %v1451
      %v1453 = vmul.f32 %v1399, 1.442695
      %v1454 = vpow.pop %v1453
      %v1455 = vmul.f32 %v1400, 1.442695
      %v1456 = vpow.pop %v1455
      %v1457 = vmul.f32 %v1401, 1.442695
      %v1458 = vpow.pop %v1457
      %v1459 = vmul.f32 %v1402, 1.442695
      %v1460 = vpow.pop %v1459
      %v1461 = vmul.f32 %v1403, 1.442695
      %v1462 = vpow.pop %v1461
      %v1463 = vmul.f32 %v1404, 1.442695
      %v1464 = vpow.pop %v1463
      %v1465 = vmul.f32 %v1405, 1.442695
      %v1466 = vpow.pop %v1465
      %v1467 = vmul.f32 %v1406, 1.442695
      %v1468 = vpow.pop %v1467
      %v1469 = vmul.f32 %v1407, 1.442695
      %v1470 = vpow.pop %v1469
      %v1471 = vmul.f32 %v1408, 1.442695
      %v1472 = vpow.pop %v1471
      %v1473 = vsel %vm274, 0.0, %v1410
      %v1474 = vsel %vm275, 0.0, %v1412
      %v1475 = vsel %vm276, 0.0, %v1414
      %v1476 = vsel %vm277, 0.0, %v1416
      %v1477 = vsel %vm278, 0.0, %v1418
      %v1478 = vsel %vm279, 0.0, %v1420
      %v1479 = vsel %vm280, 0.0, %v1422
      %v1480 = vsel %vm281, 0.0, %v1424
      %v1481 = vsel %vm282, 0.0, %v1426
      %v1482 = vsel %vm283, 0.0, %v1428
      %v1483 = vsel %vm284, 0.0, %v1430
      %v1484 = vsel %vm285, 0.0, %v1432
      %v1485 = vsel %vm286, 0.0, %v1434
      %v1486 = vsel %vm287, 0.0, %v1436
      %v1487 = vsel %vm288, 0.0, %v1438
      %v1488 = vsel %vm289, 0.0, %v1440
      %v1489 = vsel %vm290, 0.0, %v1442
      %v1490 = vsel %vm291, 0.0, %v1444
      %v1491 = vsel %vm292, 0.0, %v1446
      %v1492 = vsel %vm293, 0.0, %v1448
      %v1493 = vsel %vm294, 0.0, %v1450
      %v1494 = vsel %vm295, 0.0, %v1452
      %v1495 = vsel %vm296, 0.0, %v1454
      %v1496 = vsel %vm297, 0.0, %v1456
      %v1497 = vsel %vm298, 0.0, %v1458
      %v1498 = vsel %vm299, 0.0, %v1460
      %v1499 = vsel %vm300, 0.0, %v1462
      %v1500 = vsel %vm301, 0.0, %v1464
      %v1501 = vsel %vm302, 0.0, %v1466
      %v1502 = vsel %vm303, 0.0, %v1468
      %v1503 = vsel %vm304, 0.0, %v1470
      %v1504 = vsel %vm305, 0.0, %v1472
      %v1505 = vadd.f32 %v1473, %v1474
      %1506 = vadd.xlane.f32.xlu0 %v1505
      %v1507 = vpop.xlane.xlu0 %1506
      %v1508 = vadd.f32 %v1475, %v1476
      %1509 = vadd.xlane.f32.xlu0 %v1508
      %v1510 = vpop.xlane.xlu0 %1509
      %v1511 = vadd.f32 %v1477, %v1478
      %1512 = vadd.xlane.f32.xlu0 %v1511
      %v1513 = vpop.xlane.xlu0 %1512
      %v1514 = vadd.f32 %v1479, %v1480
      %1515 = vadd.xlane.f32.xlu0 %v1514
      %v1516 = vpop.xlane.xlu0 %1515
      %v1517 = vadd.f32 %v1481, %v1482
      %1518 = vadd.xlane.f32.xlu0 %v1517
      %v1519 = vpop.xlane.xlu0 %1518
      %v1520 = vadd.f32 %v1483, %v1484
      %1521 = vadd.xlane.f32.xlu0 %v1520
      %v1522 = vpop.xlane.xlu0 %1521
      %v1523 = vadd.f32 %v1485, %v1486
      %1524 = vadd.xlane.f32.xlu0 %v1523
      %v1525 = vpop.xlane.xlu0 %1524
      %v1526 = vadd.f32 %v1487, %v1488
      %1527 = vadd.xlane.f32.xlu0 %v1526
      %v1528 = vpop.xlane.xlu0 %1527
      %v1529 = vadd.f32 %v1489, %v1490
      %1530 = vadd.xlane.f32.xlu0 %v1529
      %v1531 = vpop.xlane.xlu0 %1530
      %v1532 = vadd.f32 %v1491, %v1492
      %1533 = vadd.xlane.f32.xlu0 %v1532
      %v1534 = vpop.xlane.xlu0 %1533
      %v1535 = vadd.f32 %v1493, %v1494
      %1536 = vadd.xlane.f32.xlu0 %v1535
      %v1537 = vpop.xlane.xlu0 %1536
      %v1538 = vadd.f32 %v1495, %v1496
      %1539 = vadd.xlane.f32.xlu0 %v1538
      %v1540 = vpop.xlane.xlu0 %1539
      %v1541 = vadd.f32 %v1497, %v1498
      %1542 = vadd.xlane.f32.xlu0 %v1541
      %v1543 = vpop.xlane.xlu0 %1542
      %v1544 = vadd.f32 %v1499, %v1500
      %1545 = vadd.xlane.f32.xlu0 %v1544
      %v1546 = vpop.xlane.xlu0 %1545
      %v1547 = vadd.f32 %v1501, %v1502
      %1548 = vadd.xlane.f32.xlu0 %v1547
      %v1549 = vpop.xlane.xlu0 %1548
      %v1550 = vadd.f32 %v1503, %v1504
      %1551 = vadd.xlane.f32.xlu0 %v1550
      %v1552 = vpop.xlane.xlu0 %1551
      %vm1553 = vcmp.gt.f32.partialorder %v1507, 0.0
      %vm1554 = vcmp.gt.f32.partialorder %v1510, 0.0
      %vm1555 = vcmp.gt.f32.partialorder %v1513, 0.0
      %vm1556 = vcmp.gt.f32.partialorder %v1516, 0.0
      %vm1557 = vcmp.gt.f32.partialorder %v1519, 0.0
      %vm1558 = vcmp.gt.f32.partialorder %v1522, 0.0
      %vm1559 = vcmp.gt.f32.partialorder %v1525, 0.0
      %vm1560 = vcmp.gt.f32.partialorder %v1528, 0.0
      %vm1561 = vcmp.gt.f32.partialorder %v1531, 0.0
      %vm1562 = vcmp.gt.f32.partialorder %v1534, 0.0
      %vm1563 = vcmp.gt.f32.partialorder %v1537, 0.0
      %vm1564 = vcmp.gt.f32.partialorder %v1540, 0.0
      %vm1565 = vcmp.gt.f32.partialorder %v1543, 0.0
      %vm1566 = vcmp.gt.f32.partialorder %v1546, 0.0
      %vm1567 = vcmp.gt.f32.partialorder %v1549, 0.0
      %vm1568 = vcmp.gt.f32.partialorder %v1552, 0.0
      %v1569 = vrcp.pop %v1507
      %v1570 = vrcp.pop %v1510
      %v1571 = vrcp.pop %v1513
      %v1572 = vrcp.pop %v1516
      %v1573 = vrcp.pop %v1519
      %v1574 = vrcp.pop %v1522
      %v1575 = vrcp.pop %v1525
      %v1576 = vrcp.pop %v1528
      %v1577 = vrcp.pop %v1531
      %v1578 = vrcp.pop %v1534
      %v1579 = vrcp.pop %v1537
      %v1580 = vrcp.pop %v1540
      %v1581 = vrcp.pop %v1543
      %v1582 = vrcp.pop %v1546
      %v1583 = vrcp.pop %v1549
      %v1584 = vrcp.pop %v1552
      %v1585 = vsel %vm1553, %v1569, 0.0
      %v1586 = vsel %vm1554, %v1570, 0.0
      %v1587 = vsel %vm1555, %v1571, 0.0
      %v1588 = vsel %vm1556, %v1572, 0.0
      %v1589 = vsel %vm1557, %v1573, 0.0
      %v1590 = vsel %vm1558, %v1574, 0.0
      %v1591 = vsel %vm1559, %v1575, 0.0
      %v1592 = vsel %vm1560, %v1576, 0.0
      %v1593 = vsel %vm1561, %v1577, 0.0
      %v1594 = vsel %vm1562, %v1578, 0.0
      %v1595 = vsel %vm1563, %v1579, 0.0
      %v1596 = vsel %vm1564, %v1580, 0.0
      %v1597 = vsel %vm1565, %v1581, 0.0
      %v1598 = vsel %vm1566, %v1582, 0.0
      %v1599 = vsel %vm1567, %v1583, 0.0
      %v1600 = vsel %vm1568, %v1584, 0.0
      %v1601 = vpack.c.bf16 %v1475, %v1473
      %v1602 = vpack.c.bf16 %v1476, %v1474
      %v1603 = vpack.c.bf16 %v1479, %v1477
      %v1604 = vpack.c.bf16 %v1480, %v1478
      %v1605 = vpack.c.bf16 %v1483, %v1481
      %v1606 = vpack.c.bf16 %v1484, %v1482
      %v1607 = vpack.c.bf16 %v1487, %v1485
      %v1608 = vpack.c.bf16 %v1488, %v1486
      %v1609 = vpack.c.bf16 %v1491, %v1489
      %v1610 = vpack.c.bf16 %v1492, %v1490
      %v1611 = vpack.c.bf16 %v1495, %v1493
      %v1612 = vpack.c.bf16 %v1496, %v1494
      %v1613 = vpack.c.bf16 %v1499, %v1497
      %v1614 = vpack.c.bf16 %v1500, %v1498
      %v1615 = vpack.c.bf16 %v1503, %v1501
      %v1616 = vpack.c.bf16 %v1504, %v1502
      %1617 = vrot.lane.b32.xlu0 %v952, 120
      %v1618 = vpop.permute.xlu0 %1617
      %1619 = vrot.lane.b32.xlu0 %v953, 120
      %v1620 = vpop.permute.xlu0 %1619
      %1621 = vrot.lane.b32.xlu0 %v954, 120
      %v1622 = vpop.permute.xlu0 %1621
      %1623 = vrot.lane.b32.xlu0 %v955, 120
      %v1624 = vpop.permute.xlu0 %1623
      %1625 = vrot.lane.b32.xlu0 %v956, 120
      %v1626 = vpop.permute.xlu0 %1625
      %1627 = vrot.lane.b32.xlu0 %v957, 120
      %v1628 = vpop.permute.xlu0 %1627
      %1629 = vrot.lane.b32.xlu0 %v958, 120
      %v1630 = vpop.permute.xlu0 %1629
      %1631 = vrot.lane.b32.xlu0 %v959, 120
      %v1632 = vpop.permute.xlu0 %1631
      %1633 = vrot.lane.b32.xlu0 %v960, 120
      %v1634 = vpop.permute.xlu0 %1633
      %1635 = vrot.lane.b32.xlu0 %v961, 120
      %v1636 = vpop.permute.xlu0 %1635
      %1637 = vrot.lane.b32.xlu0 %v962, 120
      %v1638 = vpop.permute.xlu0 %1637
      %1639 = vrot.lane.b32.xlu0 %v963, 120
      %v1640 = vpop.permute.xlu0 %1639
      %1641 = vrot.lane.b32.xlu0 %v964, 120
      %v1642 = vpop.permute.xlu0 %1641
      %1643 = vrot.lane.b32.xlu0 %v965, 120
      %v1644 = vpop.permute.xlu0 %1643
      %1645 = vrot.lane.b32.xlu0 %v966, 120
      %v1646 = vpop.permute.xlu0 %1645
      %1647 = vrot.lane.b32.xlu0 %v967, 120
      %v1648 = vpop.permute.xlu0 %1647
      %1665 = vmatpush.bf16.msra.mxu0 %v1632
      %1666 = vmatpush.bf16.msra.mxu0 %v1630
      %1667 = vmatpush.bf16.msra.mxu0 %v1628
      %1668 = vmatpush.bf16.msra.mxu0 %v1626
      %1669 = vmatpush.bf16.msra.mxu0 %v1624
      %1670 = vmatpush.bf16.msra.mxu0 %v1622
      %1671 = vmatpush.bf16.msra.mxu0 %v1620
      %1672 = vmatpush.bf16.msra.mxu0 %v1618
      %1673 = vmatmul.bf16.gmra.mxu0 %v1601
      %v1674 = vpop.f32.mrf.mxu0
      %v1675 = vadd.f32 0.0, %v1674
      %v1676 = vpop.f32.mrf.mxu0
      %v1677 = vadd.f32 0.0, %v1676
      %1678 = vmatmul.bf16.gmra.mxu0 %v1603
      %v1679 = vpop.f32.mrf.mxu0
      %v1680 = vadd.f32 0.0, %v1679
      %v1681 = vpop.f32.mrf.mxu0
      %v1682 = vadd.f32 0.0, %v1681
      %1683 = vmatmul.bf16.gmra.mxu0 %v1605
      %v1684 = vpop.f32.mrf.mxu0
      %v1685 = vadd.f32 0.0, %v1684
      %v1686 = vpop.f32.mrf.mxu0
      %v1687 = vadd.f32 0.0, %v1686
      %1688 = vmatmul.bf16.gmra.mxu0 %v1607
      %v1689 = vpop.f32.mrf.mxu0
      %v1690 = vadd.f32 0.0, %v1689
      %v1691 = vpop.f32.mrf.mxu0
      %v1692 = vadd.f32 0.0, %v1691
      %1693 = vmatmul.bf16.gmra.mxu0 %v1609
      %v1694 = vpop.f32.mrf.mxu0
      %v1695 = vadd.f32 0.0, %v1694
      %v1696 = vpop.f32.mrf.mxu0
      %v1697 = vadd.f32 0.0, %v1696
      %1698 = vmatmul.bf16.gmra.mxu0 %v1611
      %v1699 = vpop.f32.mrf.mxu0
      %v1700 = vadd.f32 0.0, %v1699
      %v1701 = vpop.f32.mrf.mxu0
      %v1702 = vadd.f32 0.0, %v1701
      %1703 = vmatmul.bf16.gmra.mxu0 %v1613
      %v1704 = vpop.f32.mrf.mxu0
      %v1705 = vadd.f32 0.0, %v1704
      %v1706 = vpop.f32.mrf.mxu0
      %v1707 = vadd.f32 0.0, %v1706
      %1708 = vmatmul.bf16.gmra.mxu0 %v1615
      %v1709 = vpop.f32.mrf.mxu0
      %v1710 = vadd.f32 0.0, %v1709
      %v1711 = vpop.f32.mrf.mxu0
      %v1712 = vadd.f32 0.0, %v1711
      %1713 = vdwg.mxu0
      %1714 = vmatpush.bf16.msra.mxu0 %v1648
      %1715 = vmatpush.bf16.msra.mxu0 %v1646
      %1716 = vmatpush.bf16.msra.mxu0 %v1644
      %1717 = vmatpush.bf16.msra.mxu0 %v1642
      %1718 = vmatpush.bf16.msra.mxu0 %v1640
      %1719 = vmatpush.bf16.msra.mxu0 %v1638
      %1720 = vmatpush.bf16.msra.mxu0 %v1636
      %1721 = vmatpush.bf16.msra.mxu0 %v1634
      %1722 = vmatmul.bf16.gmra.mxu0 %v1602
      %v1723 = vpop.f32.mrf.mxu0
      %v1724 = vadd.f32 %v1675, %v1723
      %v1725 = vpop.f32.mrf.mxu0
      %v1726 = vadd.f32 %v1677, %v1725
      %1727 = vmatmul.bf16.gmra.mxu0 %v1604
      %v1728 = vpop.f32.mrf.mxu0
      %v1729 = vadd.f32 %v1680, %v1728
      %v1730 = vpop.f32.mrf.mxu0
      %v1731 = vadd.f32 %v1682, %v1730
      %1732 = vmatmul.bf16.gmra.mxu0 %v1606
      %v1733 = vpop.f32.mrf.mxu0
      %v1734 = vadd.f32 %v1685, %v1733
      %v1735 = vpop.f32.mrf.mxu0
      %v1736 = vadd.f32 %v1687, %v1735
      %1737 = vmatmul.bf16.gmra.mxu0 %v1608
      %v1738 = vpop.f32.mrf.mxu0
      %v1739 = vadd.f32 %v1690, %v1738
      %v1740 = vpop.f32.mrf.mxu0
      %v1741 = vadd.f32 %v1692, %v1740
      %1742 = vmatmul.bf16.gmra.mxu0 %v1610
      %v1743 = vpop.f32.mrf.mxu0
      %v1744 = vadd.f32 %v1695, %v1743
      %v1745 = vpop.f32.mrf.mxu0
      %v1746 = vadd.f32 %v1697, %v1745
      %1747 = vmatmul.bf16.gmra.mxu0 %v1612
      %v1748 = vpop.f32.mrf.mxu0
      %v1749 = vadd.f32 %v1700, %v1748
      %v1750 = vpop.f32.mrf.mxu0
      %v1751 = vadd.f32 %v1702, %v1750
      %1752 = vmatmul.bf16.gmra.mxu0 %v1614
      %v1753 = vpop.f32.mrf.mxu0
      %v1754 = vadd.f32 %v1705, %v1753
      %v1755 = vpop.f32.mrf.mxu0
      %v1756 = vadd.f32 %v1707, %v1755
      %1757 = vmatmul.bf16.gmra.mxu0 %v1616
      %v1758 = vpop.f32.mrf.mxu0
      %v1759 = vadd.f32 %v1710, %v1758
      %v1760 = vpop.f32.mrf.mxu0
      %v1761 = vadd.f32 %v1712, %v1760
      %1762 = vdwg.mxu0
      %v1763 = vmul.f32 %v1724, %v1585
      %v1764 = vmul.f32 %v1726, %v1586
      %v1765 = vmul.f32 %v1729, %v1587
      %v1766 = vmul.f32 %v1731, %v1588
      %v1767 = vmul.f32 %v1734, %v1589
      %v1768 = vmul.f32 %v1736, %v1590
      %v1769 = vmul.f32 %v1739, %v1591
      %v1770 = vmul.f32 %v1741, %v1592
      %v1771 = vmul.f32 %v1744, %v1593
      %v1772 = vmul.f32 %v1746, %v1594
      %v1773 = vmul.f32 %v1749, %v1595
      %v1774 = vmul.f32 %v1751, %v1596
      %v1775 = vmul.f32 %v1754, %v1597
      %v1776 = vmul.f32 %v1756, %v1598
      %v1777 = vmul.f32 %v1759, %v1599
      %v1778 = vmul.f32 %v1761, %v1600
      %1795 = vrot.lane.b32.xlu0 %v1763, 8
      %v1796 = vpop.permute.xlu0 %1795
      %1797 = vrot.lane.b32.xlu0 %v1764, 8
      %v1798 = vpop.permute.xlu0 %1797
      %1799 = vrot.lane.b32.xlu0 %v1765, 8
      %v1800 = vpop.permute.xlu0 %1799
      %1801 = vrot.lane.b32.xlu0 %v1766, 8
      %v1802 = vpop.permute.xlu0 %1801
      %1803 = vrot.lane.b32.xlu0 %v1767, 8
      %v1804 = vpop.permute.xlu0 %1803
      %1805 = vrot.lane.b32.xlu0 %v1768, 8
      %v1806 = vpop.permute.xlu0 %1805
      %1807 = vrot.lane.b32.xlu0 %v1769, 8
      %v1808 = vpop.permute.xlu0 %1807
      %1809 = vrot.lane.b32.xlu0 %v1770, 8
      %v1810 = vpop.permute.xlu0 %1809
      %1811 = vrot.lane.b32.xlu0 %v1771, 8
      %v1812 = vpop.permute.xlu0 %1811
      %1813 = vrot.lane.b32.xlu0 %v1772, 8
      %v1814 = vpop.permute.xlu0 %1813
      %1815 = vrot.lane.b32.xlu0 %v1773, 8
      %v1816 = vpop.permute.xlu0 %1815
      %1817 = vrot.lane.b32.xlu0 %v1774, 8
      %v1818 = vpop.permute.xlu0 %1817
      %1819 = vrot.lane.b32.xlu0 %v1775, 8
      %v1820 = vpop.permute.xlu0 %1819
      %1821 = vrot.lane.b32.xlu0 %v1776, 8
      %v1822 = vpop.permute.xlu0 %1821
      %1823 = vrot.lane.b32.xlu0 %v1777, 8
      %v1824 = vpop.permute.xlu0 %1823
      %1825 = vrot.lane.b32.xlu0 %v1778, 8
      %v1826 = vpop.permute.xlu0 %1825
      %vm1843 = vcmask 64512
      %v1844 = vsel %vm1843, %v1082, %v1796
      %v1845 = vsel %vm1843, %v1083, %v1798
      %v1846 = vsel %vm1843, %v1084, %v1800
      %v1847 = vsel %vm1843, %v1085, %v1802
      %v1848 = vsel %vm1843, %v1086, %v1804
      %v1849 = vsel %vm1843, %v1087, %v1806
      %v1850 = vsel %vm1843, %v1088, %v1808
      %v1851 = vsel %vm1843, %v1089, %v1810
      %v1852 = vsel %vm1843, %v1090, %v1812
      %v1853 = vsel %vm1843, %v1091, %v1814
      %v1854 = vsel %vm1843, %v1092, %v1816
      %v1855 = vsel %vm1843, %v1093, %v1818
      %v1856 = vsel %vm1843, %v1094, %v1820
      %v1857 = vsel %vm1843, %v1095, %v1822
      %v1858 = vsel %vm1843, %v1096, %v1824
      %v1859 = vsel %vm1843, %v1097, %v1826
      %vm1860 = vcmp.gt.f32.partialorder %v1844, 0.0
      %vm1861 = vcmp.gt.f32.partialorder %v1845, 0.0
      %vm1862 = vcmp.gt.f32.partialorder %v1846, 0.0
      %vm1863 = vcmp.gt.f32.partialorder %v1847, 0.0
      %vm1864 = vcmp.gt.f32.partialorder %v1848, 0.0
      %vm1865 = vcmp.gt.f32.partialorder %v1849, 0.0
      %vm1866 = vcmp.gt.f32.partialorder %v1850, 0.0
      %vm1867 = vcmp.gt.f32.partialorder %v1851, 0.0
      %vm1868 = vcmp.gt.f32.partialorder %v1852, 0.0
      %vm1869 = vcmp.gt.f32.partialorder %v1853, 0.0
      %vm1870 = vcmp.gt.f32.partialorder %v1854, 0.0
      %vm1871 = vcmp.gt.f32.partialorder %v1855, 0.0
      %vm1872 = vcmp.gt.f32.partialorder %v1856, 0.0
      %vm1873 = vcmp.gt.f32.partialorder %v1857, 0.0
      %vm1874 = vcmp.gt.f32.partialorder %v1858, 0.0
      %vm1875 = vcmp.gt.f32.partialorder %v1859, 0.0
      %v1876 = vmin.f32 %v1844, 0.0
      %v1877 = vmin.f32 %v1845, 0.0
      %v1878 = vmin.f32 %v1846, 0.0
      %v1879 = vmin.f32 %v1847, 0.0
      %v1880 = vmin.f32 %v1848, 0.0
      %v1881 = vmin.f32 %v1849, 0.0
      %v1882 = vmin.f32 %v1850, 0.0
      %v1883 = vmin.f32 %v1851, 0.0
      %v1884 = vmin.f32 %v1852, 0.0
      %v1885 = vmin.f32 %v1853, 0.0
      %v1886 = vmin.f32 %v1854, 0.0
      %v1887 = vmin.f32 %v1855, 0.0
      %v1888 = vmin.f32 %v1856, 0.0
      %v1889 = vmin.f32 %v1857, 0.0
      %v1890 = vmin.f32 %v1858, 0.0
      %v1891 = vmin.f32 %v1859, 0.0
      %v1892 = vmul.f32 %v1876, 1.442695
      %v1893 = vpow.pop %v1892
      %v1894 = vmul.f32 %v1877, 1.442695
      %v1895 = vpow.pop %v1894
      %v1896 = vmul.f32 %v1878, 1.442695
      %v1897 = vpow.pop %v1896
      %v1898 = vmul.f32 %v1879, 1.442695
      %v1899 = vpow.pop %v1898
      %v1900 = vmul.f32 %v1880, 1.442695
      %v1901 = vpow.pop %v1900
      %v1902 = vmul.f32 %v1881, 1.442695
      %v1903 = vpow.pop %v1902
      %v1904 = vmul.f32 %v1882, 1.442695
      %v1905 = vpow.pop %v1904
      %v1906 = vmul.f32 %v1883, 1.442695
      %v1907 = vpow.pop %v1906
      %v1908 = vmul.f32 %v1884, 1.442695
      %v1909 = vpow.pop %v1908
      %v1910 = vmul.f32 %v1885, 1.442695
      %v1911 = vpow.pop %v1910
      %v1912 = vmul.f32 %v1886, 1.442695
      %v1913 = vpow.pop %v1912
      %v1914 = vmul.f32 %v1887, 1.442695
      %v1915 = vpow.pop %v1914
      %v1916 = vmul.f32 %v1888, 1.442695
      %v1917 = vpow.pop %v1916
      %v1918 = vmul.f32 %v1889, 1.442695
      %v1919 = vpow.pop %v1918
      %v1920 = vmul.f32 %v1890, 1.442695
      %v1921 = vpow.pop %v1920
      %v1922 = vmul.f32 %v1891, 1.442695
      %v1923 = vpow.pop %v1922
      %v1924 = vsub.f32 %v1893, 1.0
      %v1925 = vsub.f32 %v1895, 1.0
      %v1926 = vsub.f32 %v1897, 1.0
      %v1927 = vsub.f32 %v1899, 1.0
      %v1928 = vsub.f32 %v1901, 1.0
      %v1929 = vsub.f32 %v1903, 1.0
      %v1930 = vsub.f32 %v1905, 1.0
      %v1931 = vsub.f32 %v1907, 1.0
      %v1932 = vsub.f32 %v1909, 1.0
      %v1933 = vsub.f32 %v1911, 1.0
      %v1934 = vsub.f32 %v1913, 1.0
      %v1935 = vsub.f32 %v1915, 1.0
      %v1936 = vsub.f32 %v1917, 1.0
      %v1937 = vsub.f32 %v1919, 1.0
      %v1938 = vsub.f32 %v1921, 1.0
      %v1939 = vsub.f32 %v1923, 1.0
      %v1940 = vsel %vm1860, %v1844, %v1924
      %v1941 = vsel %vm1861, %v1845, %v1925
      %v1942 = vsel %vm1862, %v1846, %v1926
      %v1943 = vsel %vm1863, %v1847, %v1927
      %v1944 = vsel %vm1864, %v1848, %v1928
      %v1945 = vsel %vm1865, %v1849, %v1929
      %v1946 = vsel %vm1866, %v1850, %v1930
      %v1947 = vsel %vm1867, %v1851, %v1931
      %v1948 = vsel %vm1868, %v1852, %v1932
      %v1949 = vsel %vm1869, %v1853, %v1933
      %v1950 = vsel %vm1870, %v1854, %v1934
      %v1951 = vsel %vm1871, %v1855, %v1935
      %v1952 = vsel %vm1872, %v1856, %v1936
      %v1953 = vsel %vm1873, %v1857, %v1937
      %v1954 = vsel %vm1874, %v1858, %v1938
      %v1955 = vsel %vm1875, %v1859, %v1939
      %vm1956 = vcmask 130048
      %1957 = vst.msk [vmem:[%s224] sm:$0xff] %vm1956, %v1940
      %1958 = vst.msk [vmem:[%s224 + $0x8] sm:$0xff] %vm1956, %v1941
      %1959 = vst.msk [vmem:[%s224 + $0x10] sm:$0xff] %vm1956, %v1942
      %1960 = vst.msk [vmem:[%s224 + $0x18] sm:$0xff] %vm1956, %v1943
      %1961 = vst.msk [vmem:[%s224 + $0x20] sm:$0xff] %vm1956, %v1944
      %1962 = vst.msk [vmem:[%s224 + $0x28] sm:$0xff] %vm1956, %v1945
      %1963 = vst.msk [vmem:[%s224 + $0x30] sm:$0xff] %vm1956, %v1946
      %1964 = vst.msk [vmem:[%s224 + $0x38] sm:$0xff] %vm1956, %v1947
      %1965 = vst.msk [vmem:[%s224 + $0x40] sm:$0xff] %vm1956, %v1948
      %1966 = vst.msk [vmem:[%s224 + $0x48] sm:$0xff] %vm1956, %v1949
      %1967 = vst.msk [vmem:[%s224 + $0x50] sm:$0xff] %vm1956, %v1950
      %1968 = vst.msk [vmem:[%s224 + $0x58] sm:$0xff] %vm1956, %v1951
      %1969 = vst.msk [vmem:[%s224 + $0x60] sm:$0xff] %vm1956, %v1952
      %1970 = vst.msk [vmem:[%s224 + $0x68] sm:$0xff] %vm1956, %v1953
      %1971 = vst.msk [vmem:[%s224 + $0x70] sm:$0xff] %vm1956, %v1954
      %1972 = vst.msk [vmem:[%s224 + $0x78] sm:$0xff] %vm1956, %v1955
      %s1973 = smul.u32 16, %s15
      %p1974 = scmp.lt.s32.totalorder %s1973, 31
      %s1975 = scalar_select %p1974, %s1973, 31
      %s1976 = smul.addr %s1975, 8
      %s1977 = scalar_lea.vmem %s4, %s1976
      // Predicated region
      $region37: #{gat_forward.2} parent=35 // pred_check
        %p1978 = pneg %p127
      $region38: #{gat_forward.2} parent=35 // pred_check_branch
        %1980 = sbr.rel (%p1978) target = $region40
      $region39: #{gat_forward.2} parent=35 // pred_region
        %s1981 = smul.u32 16, %s15
      $region40: #{gat_forward.2} parent=35 // pred_fallthru
        _
    $region36: #{gat_forward.2} parent=5 // pred_fallthru
      _
    %p1982 = scmp.le.s32.totalorder 2, %s10
    // Predicated region
    $region41: #{gat_forward.2} parent=5 // pred_check
      %p1983 = pneg %p1982
    $region42: #{gat_forward.2} parent=5 // pred_check_branch
      %1985 = sbr.rel (%p1983) target = $region44
    $region43: #{gat_forward.2} parent=5 // pred_region
      %s1986 = ssub.s32 %s10, 2
      // Predicated region
      $region45: #{gat_forward.2} parent=43 // pred_check
        %p1987 = pneg %p133
      $region46: #{gat_forward.2} parent=43 // pred_check_branch
        %1989 = sbr.rel (%p1987) target = $region48
      $region47: #{gat_forward.2} parent=43 // pred_region
        %s1990 = smul.u32 16, %s16
        %p1991 = scmp.lt.s32.totalorder %s1990, 31
        %s1992 = scalar_select %p1991, %s1990, 31
        %s1993 = smul.addr %s1992, 8
        %s1994 = scalar_lea.vmem %s4, %s1993
      $region48: #{gat_forward.2} parent=43 // pred_fallthru
        _
    $region44: #{gat_forward.2} parent=5 // pred_fallthru
      _
  $region6: #{gat_forward.2} parent=0 // loop_footer
    %s14 = sadd.s32 1, %s10
  $region7: #{gat_forward.2} parent=0 // loop_footer_branch
    %9 = sbr.rel target = $region3
  $region8: #{gat_forward.2} parent=0 // loop_exit
    _

</llo_original>
